<compile_context>
chip_gen: v7x
topology: tpu7x:2x2x1
jax: 0.10.0
libtpu: 0.0.40
codegen_flags: <defaults>
</compile_context>

<pallas_src>
import jax
import jax.numpy as jnp
from jax.experimental import pallas as pl
from jax.experimental.pallas import tpu as pltpu

# ---- hyper-parameters (small, consistent with the module __init__) ----------
NUM_FEATURES = 8        # input_size
HIDDEN       = 32       # hidden_units
NUM_LAYERS   = 2        # num_layers (fixed, unrolled in the kernel)
OUTPUT_SIZE  = 4
DROPOUT_RATE = 0.2      # training-only (between layers); identity at inference
SEQ_LEN      = 16
BATCH        = 8        # fills the 8-sublane dimension of the per-step tile

PARAM_ORDER = ["wih0", "whh0", "bih0", "bhh0",
               "wih1", "whh1", "bih1", "bhh1",
               "w_lin", "b_lin"]


# ------------------------------ Pallas kernel --------------------------------
def gru_kernel(x_ref,
               wih0_ref, whh0_ref, bih0_ref, bhh0_ref,
               wih1_ref, whh1_ref, bih1_ref, bhh1_ref,
               wl_ref, bl_ref,
               out_ref,
               proj_ref, seq_ref):
    # x_ref   : (L*B, F)   time-major, rows [t*B : (t+1)*B] == timestep t
    # proj_ref: (L*B, 3H)  VMEM scratch, fused input projection of current layer
    # seq_ref : (L*B, H)   VMEM scratch, layer-0 output sequence (layer-1 input)
    # out_ref : (B, OUT)
    B, L, H = BATCH, SEQ_LEN, HIDDEN

    def run_layer(whh_ref, bhh_ref, write_seq):
        # hoist recurrent weights / bias out of the time loop (stay in vregs)
        whh = whh_ref[...]                       # (H, 3H)
        bhh = bhh_ref[...]                       # (1, 3H)

        def step(t, h):
            row = pl.multiple_of(t * B, B)       # sublane-aligned row offset
            xp = proj_ref[pl.ds(row, B), :]      # (B, 3H) precomputed x-proj
            # fused recurrent projection for all 3 gates: one MXU push
            hp = jnp.dot(h, whh, preferred_element_type=jnp.float32) + bhh
            # PyTorch gate order: r (reset), z (update), n (new)
            r = jax.nn.sigmoid(xp[:, 0:H] + hp[:, 0:H])
            z = jax.nn.sigmoid(xp[:, H:2 * H] + hp[:, H:2 * H])
            n = jnp.tanh(xp[:, 2 * H:3 * H] + r * hp[:, 2 * H:3 * H])
            h_new = (1.0 - z) * n + z * h
            if write_seq:
                seq_ref[pl.ds(row, B), :] = h_new
            return h_new

        h0 = jnp.zeros((B, H), jnp.float32)      # PyTorch default h_0 = 0
        return jax.lax.fori_loop(0, L, step, h0, unroll=True)

    # ---- layer 0: one big fused input projection over all L*B timesteps -----
    proj_ref[...] = (jnp.dot(x_ref[...], wih0_ref[...],
                             preferred_element_type=jnp.float32)
                     + bih0_ref[...])
    run_layer(whh0_ref, bhh0_ref, write_seq=True)
    # inter-layer dropout: identity at inference (eval mode) -> no-op.

    # ---- layer 1: input projection of layer-0 outputs, again one matmul -----
    proj_ref[...] = (jnp.dot(seq_ref[...], wih1_ref[...],
                             preferred_element_type=jnp.float32)
                     + bih1_ref[...])
    h_last = run_layer(whh1_ref, bhh1_ref, write_seq=False)   # == out[:, -1, :]

    # ---- Linear head on the last timestep: one batched matmul + one store ---
    out_ref[...] = (jnp.dot(h_last, wl_ref[...],
                            preferred_element_type=jnp.float32)
                    + bl_ref[...])


# ------------------------------- wrapper --------------------------------------
@jax.jit
def gru_forward(x, params):
    # x: (B, L, F) batch_first, like the PyTorch module
    B, L, F = x.shape
    # time-major + flattened slab: rows of timestep t are contiguous at t*B,
    # so the per-layer input projection is a single (L*B, C) @ (C, 3H) matmul.
    xt = jnp.transpose(x, (1, 0, 2)).reshape(L * B, F)
    flat = [params[k] for k in PARAM_ORDER]

    out = pl.pallas_call(
        gru_kernel,
        out_shape=jax.ShapeDtypeStruct((B, OUTPUT_SIZE), jnp.float32),
        scratch_shapes=[
            pltpu.VMEM((L * B, 3 * HIDDEN), jnp.float32),   # proj_ref
            pltpu.VMEM((L * B, HIDDEN), jnp.float32),       # seq_ref
        ],
    )(xt, *flat)
    return out                                              # (B, OUTPUT_SIZE)


# ---------------------------- params & reference ------------------------------
def init_params(key):
    ks = jax.random.split(key, 10)
    rn = lambda k, s: (0.1 * jax.random.normal(k, s)).astype(jnp.float32)
    H3 = 3 * HIDDEN
    return {
        # weights stored pre-transposed (in_dim, 3H) / (H, 3H); gate order r,z,n
        "wih0": rn(ks[0], (NUM_FEATURES, H3)),
        "whh0": rn(ks[1], (HIDDEN, H3)),
        "bih0": rn(ks[2], (1, H3)),
        "bhh0": rn(ks[3], (1, H3)),
        "wih1": rn(ks[4], (HIDDEN, H3)),
        "whh1": rn(ks[5], (HIDDEN, H3)),
        "bih1": rn(ks[6], (1, H3)),
        "bhh1": rn(ks[7], (1, H3)),
        "w_lin": rn(ks[8], (HIDDEN, OUTPUT_SIZE)),
        "b_lin": rn(ks[9], (1, OUTPUT_SIZE)),
    }


def ref_forward(x, p):
    # plain-JAX reference (mirrors torch.nn.GRU, batch_first, h_0 = 0, eval mode)
    B, L, _ = x.shape
    H = HIDDEN
    h_in = x
    for l in range(NUM_LAYERS):
        wih, whh = p[f"wih{l}"], p[f"whh{l}"]
        bih, bhh = p[f"bih{l}"], p[f"bhh{l}"]
        h = jnp.zeros((B, H), jnp.float32)
        outs = []
        for t in range(L):
            xp = h_in[:, t, :] @ wih + bih
            hp = h @ whh + bhh
            r = jax.nn.sigmoid(xp[:, :H] + hp[:, :H])
            z = jax.nn.sigmoid(xp[:, H:2 * H] + hp[:, H:2 * H])
            n = jnp.tanh(xp[:, 2 * H:] + r * hp[:, 2 * H:])
            h = (1.0 - z) * n + z * h
            outs.append(h)
        h_in = jnp.stack(outs, axis=1)
    return h_in[:, -1, :] @ p["w_lin"] + p["b_lin"]


# ----------------------------------- main --------------------------------------
if __name__ == "__main__":
    key = jax.random.PRNGKey(0)
    kx, kp = jax.random.split(key)
    x = jax.random.normal(kx, (BATCH, SEQ_LEN, NUM_FEATURES), jnp.float32)
    params = init_params(kp)

    out = jax.block_until_ready(gru_forward(x, params))
    ref = ref_forward(x, params)

    assert out.shape == (BATCH, OUTPUT_SIZE), out.shape
    # tolerance covers MXU default-precision rounding differences vs the XLA ref
    assert jnp.allclose(out, ref, atol=5e-3, rtol=5e-3), (out, ref)
    print("KERNEL_OK")
</pallas_src>

<mosaic_0001>
module attributes {stable_mosaic.version = 11 : i64} {
  func.func @gru_kernel(%arg0: memref<128x8xf32, #tpu.memory_space<vmem>>, %arg1: memref<8x96xf32, #tpu.memory_space<vmem>>, %arg2: memref<32x96xf32, #tpu.memory_space<vmem>>, %arg3: memref<1x96xf32, #tpu.memory_space<vmem>>, %arg4: memref<1x96xf32, #tpu.memory_space<vmem>>, %arg5: memref<32x96xf32, #tpu.memory_space<vmem>>, %arg6: memref<32x96xf32, #tpu.memory_space<vmem>>, %arg7: memref<1x96xf32, #tpu.memory_space<vmem>>, %arg8: memref<1x96xf32, #tpu.memory_space<vmem>>, %arg9: memref<32x4xf32, #tpu.memory_space<vmem>>, %arg10: memref<1x4xf32, #tpu.memory_space<vmem>>, %arg11: memref<8x4xf32, #tpu.memory_space<vmem>>, %arg12: memref<128x96xf32, #tpu.memory_space<vmem>>, %arg13: memref<128x32xf32, #tpu.memory_space<vmem>>) attributes {dimension_semantics = [], scalar_prefetch = 0 : i64, scratch_operands = 2 : i64, tpu.core_type = #tpu.core_type<tc>} {
    %c0 = arith.constant 0 : index
    %c0_0 = arith.constant 0 : index
    %0 = vector.load %arg0[%c0, %c0_0] : memref<128x8xf32, #tpu.memory_space<vmem>>, vector<128x8xf32>
    %c0_1 = arith.constant 0 : index
    %c0_2 = arith.constant 0 : index
    %1 = vector.load %arg1[%c0_1, %c0_2] : memref<8x96xf32, #tpu.memory_space<vmem>>, vector<8x96xf32>
    %cst = arith.constant dense<0.000000e+00> : vector<128x96xf32>
    %2 = tpu.matmul %0, %1, %cst {dimension_numbers = #tpu.dot_dimension_numbers<[1], [0], [0], [1], [0, 0, 1, 1], [], []>} : vector<128x8xf32>, vector<8x96xf32>, vector<128x96xf32> -> vector<128x96xf32>
    %c0_3 = arith.constant 0 : index
    %c0_4 = arith.constant 0 : index
    %3 = vector.load %arg3[%c0_3, %c0_4] : memref<1x96xf32, #tpu.memory_space<vmem>>, vector<1x96xf32>
    %4 = vector.broadcast %3 : vector<1x96xf32> to vector<128x96xf32>
    %5 = arith.addf %2, %4 : vector<128x96xf32>
    %c0_5 = arith.constant 0 : index
    %c0_6 = arith.constant 0 : index
    %6 = vector.load %arg12[%c0_5, %c0_6] : memref<128x96xf32, #tpu.memory_space<vmem>>, vector<128x96xf32>
    tpu.vector_store %arg12[%c0_5, %c0_6], %5 {strides = array<i32>} : memref<128x96xf32, #tpu.memory_space<vmem>>, vector<128x96xf32>,
    %c0_7 = arith.constant 0 : index
    %c0_8 = arith.constant 0 : index
    %7 = vector.load %arg2[%c0_7, %c0_8] : memref<32x96xf32, #tpu.memory_space<vmem>>, vector<32x96xf32>
    %c0_9 = arith.constant 0 : index
    %c0_10 = arith.constant 0 : index
    %8 = vector.load %arg4[%c0_9, %c0_10] : memref<1x96xf32, #tpu.memory_space<vmem>>, vector<1x96xf32>
    %cst_11 = arith.constant 0.000000e+00 : f32
    %9 = vector.broadcast %cst_11 : f32 to vector<8x32xf32>
    %c0_i32 = arith.constant 0 : i32
    %c8_i32 = arith.constant 8 : i32
    %10 = arith.muli %c0_i32, %c8_i32 : i32
    %11 = tpu.assume_multiple %10, 8 : i32
    %12 = arith.index_cast %11 : i32 to index
    %c0_12 = arith.constant 0 : index
    %13 = vector.load %arg12[%12, %c0_12] : memref<128x96xf32, #tpu.memory_space<vmem>>, vector<8x96xf32>
    %cst_13 = arith.constant dense<0.000000e+00> : vector<8x96xf32>
    %14 = tpu.matmul %9, %7, %cst_13 {dimension_numbers = #tpu.dot_dimension_numbers<[1], [0], [0], [1], [0, 0, 1, 1], [], []>} : vector<8x32xf32>, vector<32x96xf32>, vector<8x96xf32> -> vector<8x96xf32>
    %15 = vector.broadcast %8 : vector<1x96xf32> to vector<8x96xf32>
    %16 = arith.addf %14, %15 : vector<8x96xf32>
    %17 = vector.extract_strided_slice %13 {offsets = [0, 0], sizes = [8, 32], strides = [1, 1]} : vector<8x96xf32> to vector<8x32xf32>
    %18 = vector.extract_strided_slice %16 {offsets = [0, 0], sizes = [8, 32], strides = [1, 1]} : vector<8x96xf32> to vector<8x32xf32>
    %19 = arith.addf %17, %18 : vector<8x32xf32>
    %20 = arith.negf %19 : vector<8x32xf32>
    %21 = math.exp %20 : vector<8x32xf32>
    %cst_14 = arith.constant 1.000000e+00 : f32
    %22 = vector.broadcast %cst_14 : f32 to vector<8x32xf32>
    %23 = arith.addf %22, %21 : vector<8x32xf32>
    %24 = arith.divf %22, %23 : vector<8x32xf32>
    %25 = vector.extract_strided_slice %13 {offsets = [0, 32], sizes = [8, 32], strides = [1, 1]} : vector<8x96xf32> to vector<8x32xf32>
    %26 = vector.extract_strided_slice %16 {offsets = [0, 32], sizes = [8, 32], strides = [1, 1]} : vector<8x96xf32> to vector<8x32xf32>
    %27 = arith.addf %25, %26 : vector<8x32xf32>
    %28 = arith.negf %27 : vector<8x32xf32>
    %29 = math.exp %28 : vector<8x32xf32>
    %cst_15 = arith.constant 1.000000e+00 : f32
    %30 = vector.broadcast %cst_15 : f32 to vector<8x32xf32>
    %31 = arith.addf %30, %29 : vector<8x32xf32>
    %32 = arith.divf %30, %31 : vector<8x32xf32>
    %33 = vector.extract_strided_slice %13 {offsets = [0, 64], sizes = [8, 32], strides = [1, 1]} : vector<8x96xf32> to vector<8x32xf32>
    %34 = vector.extract_strided_slice %16 {offsets = [0, 64], sizes = [8, 32], strides = [1, 1]} : vector<8x96xf32> to vector<8x32xf32>
    %35 = arith.mulf %24, %34 : vector<8x32xf32>
    %36 = arith.addf %33, %35 : vector<8x32xf32>
    %37 = math.tanh %36 : vector<8x32xf32>
    %cst_16 = arith.constant 1.000000e+00 : f32
    %38 = vector.broadcast %cst_16 : f32 to vector<8x32xf32>
    %39 = arith.subf %38, %32 : vector<8x32xf32>
    %40 = arith.mulf %39, %37 : vector<8x32xf32>
    %41 = arith.mulf %32, %9 : vector<8x32xf32>
    %42 = arith.addf %40, %41 : vector<8x32xf32>
    %43 = arith.index_cast %11 : i32 to index
    %c0_17 = arith.constant 0 : index
    %44 = vector.load %arg13[%43, %c0_17] : memref<128x32xf32, #tpu.memory_space<vmem>>, vector<8x32xf32>
    tpu.vector_store %arg13[%43, %c0_17], %42 {strides = array<i32>} : memref<128x32xf32, #tpu.memory_space<vmem>>, vector<8x32xf32>,
    %c1_i32 = arith.constant 1 : i32
    %c8_i32_18 = arith.constant 8 : i32
    %45 = arith.muli %c1_i32, %c8_i32_18 : i32
    %46 = tpu.assume_multiple %45, 8 : i32
    %47 = arith.index_cast %46 : i32 to index
    %c0_19 = arith.constant 0 : index
    %48 = vector.load %arg12[%47, %c0_19] : memref<128x96xf32, #tpu.memory_space<vmem>>, vector<8x96xf32>
    %cst_20 = arith.constant dense<0.000000e+00> : vector<8x96xf32>
    %49 = tpu.matmul %42, %7, %cst_20 {dimension_numbers = #tpu.dot_dimension_numbers<[1], [0], [0], [1], [0, 0, 1, 1], [], []>} : vector<8x32xf32>, vector<32x96xf32>, vector<8x96xf32> -> vector<8x96xf32>
    %50 = vector.broadcast %8 : vector<1x96xf32> to vector<8x96xf32>
    %51 = arith.addf %49, %50 : vector<8x96xf32>
    %52 = vector.extract_strided_slice %48 {offsets = [0, 0], sizes = [8, 32], strides = [1, 1]} : vector<8x96xf32> to vector<8x32xf32>
    %53 = vector.extract_strided_slice %51 {offsets = [0, 0], sizes = [8, 32], strides = [1, 1]} : vector<8x96xf32> to vector<8x32xf32>
    %54 = arith.addf %52, %53 : vector<8x32xf32>
    %55 = arith.negf %54 : vector<8x32xf32>
    %56 = math.exp %55 : vector<8x32xf32>
    %cst_21 = arith.constant 1.000000e+00 : f32
    %57 = vector.broadcast %cst_21 : f32 to vector<8x32xf32>
    %58 = arith.addf %57, %56 : vector<8x32xf32>
    %59 = arith.divf %57, %58 : vector<8x32xf32>
    %60 = vector.extract_strided_slice %48 {offsets = [0, 32], sizes = [8, 32], strides = [1, 1]} : vector<8x96xf32> to vector<8x32xf32>
    %61 = vector.extract_strided_slice %51 {offsets = [0, 32], sizes = [8, 32], strides = [1, 1]} : vector<8x96xf32> to vector<8x32xf32>
    %62 = arith.addf %60, %61 : vector<8x32xf32>
    %63 = arith.negf %62 : vector<8x32xf32>
    %64 = math.exp %63 : vector<8x32xf32>
    %cst_22 = arith.constant 1.000000e+00 : f32
    %65 = vector.broadcast %cst_22 : f32 to vector<8x32xf32>
    %66 = arith.addf %65, %64 : vector<8x32xf32>
    %67 = arith.divf %65, %66 : vector<8x32xf32>
    %68 = vector.extract_strided_slice %48 {offsets = [0, 64], sizes = [8, 32], strides = [1, 1]} : vector<8x96xf32> to vector<8x32xf32>
    %69 = vector.extract_strided_slice %51 {offsets = [0, 64], sizes = [8, 32], strides = [1, 1]} : vector<8x96xf32> to vector<8x32xf32>
    %70 = arith.mulf %59, %69 : vector<8x32xf32>
    %71 = arith.addf %68, %70 : vector<8x32xf32>
    %72 = math.tanh %71 : vector<8x32xf32>
    %cst_23 = arith.constant 1.000000e+00 : f32
    %73 = vector.broadcast %cst_23 : f32 to vector<8x32xf32>
    %74 = arith.subf %73, %67 : vector<8x32xf32>
    %75 = arith.mulf %74, %72 : vector<8x32xf32>
    %76 = arith.mulf %67, %42 : vector<8x32xf32>
    %77 = arith.addf %75, %76 : vector<8x32xf32>
    %78 = arith.index_cast %46 : i32 to index
    %c0_24 = arith.constant 0 : index
    %79 = vector.load %arg13[%78, %c0_24] : memref<128x32xf32, #tpu.memory_space<vmem>>, vector<8x32xf32>
    tpu.vector_store %arg13[%78, %c0_24], %77 {strides = array<i32>} : memref<128x32xf32, #tpu.memory_space<vmem>>, vector<8x32xf32>,
    %c2_i32 = arith.constant 2 : i32
    %c8_i32_25 = arith.constant 8 : i32
    %80 = arith.muli %c2_i32, %c8_i32_25 : i32
    %81 = tpu.assume_multiple %80, 8 : i32
    %82 = arith.index_cast %81 : i32 to index
    %c0_26 = arith.constant 0 : index
    %83 = vector.load %arg12[%82, %c0_26] : memref<128x96xf32, #tpu.memory_space<vmem>>, vector<8x96xf32>
    %cst_27 = arith.constant dense<0.000000e+00> : vector<8x96xf32>
    %84 = tpu.matmul %77, %7, %cst_27 {dimension_numbers = #tpu.dot_dimension_numbers<[1], [0], [0], [1], [0, 0, 1, 1], [], []>} : vector<8x32xf32>, vector<32x96xf32>, vector<8x96xf32> -> vector<8x96xf32>
    %85 = vector.broadcast %8 : vector<1x96xf32> to vector<8x96xf32>
    %86 = arith.addf %84, %85 : vector<8x96xf32>
    %87 = vector.extract_strided_slice %83 {offsets = [0, 0], sizes = [8, 32], strides = [1, 1]} : vector<8x96xf32> to vector<8x32xf32>
    %88 = vector.extract_strided_slice %86 {offsets = [0, 0], sizes = [8, 32], strides = [1, 1]} : vector<8x96xf32> to vector<8x32xf32>
    %89 = arith.addf %87, %88 : vector<8x32xf32>
    %90 = arith.negf %89 : vector<8x32xf32>
    %91 = math.exp %90 : vector<8x32xf32>
    %cst_28 = arith.constant 1.000000e+00 : f32
    %92 = vector.broadcast %cst_28 : f32 to vector<8x32xf32>
    %93 = arith.addf %92, %91 : vector<8x32xf32>
    %94 = arith.divf %92, %93 : vector<8x32xf32>
    %95 = vector.extract_strided_slice %83 {offsets = [0, 32], sizes = [8, 32], strides = [1, 1]} : vector<8x96xf32> to vector<8x32xf32>
    %96 = vector.extract_strided_slice %86 {offsets = [0, 32], sizes = [8, 32], strides = [1, 1]} : vector<8x96xf32> to vector<8x32xf32>
    %97 = arith.addf %95, %96 : vector<8x32xf32>
    %98 = arith.negf %97 : vector<8x32xf32>
    %99 = math.exp %98 : vector<8x32xf32>
    %cst_29 = arith.constant 1.000000e+00 : f32
    %100 = vector.broadcast %cst_29 : f32 to vector<8x32xf32>
    %101 = arith.addf %100, %99 : vector<8x32xf32>
    %102 = arith.divf %100, %101 : vector<8x32xf32>
    %103 = vector.extract_strided_slice %83 {offsets = [0, 64], sizes = [8, 32], strides = [1, 1]} : vector<8x96xf32> to vector<8x32xf32>
    %104 = vector.extract_strided_slice %86 {offsets = [0, 64], sizes = [8, 32], strides = [1, 1]} : vector<8x96xf32> to vector<8x32xf32>
    %105 = arith.mulf %94, %104 : vector<8x32xf32>
    %106 = arith.addf %103, %105 : vector<8x32xf32>
    %107 = math.tanh %106 : vector<8x32xf32>
    %cst_30 = arith.constant 1.000000e+00 : f32
    %108 = vector.broadcast %cst_30 : f32 to vector<8x32xf32>
    %109 = arith.subf %108, %102 : vector<8x32xf32>
    %110 = arith.mulf %109, %107 : vector<8x32xf32>
    %111 = arith.mulf %102, %77 : vector<8x32xf32>
    %112 = arith.addf %110, %111 : vector<8x32xf32>
    %113 = arith.index_cast %81 : i32 to index
    %c0_31 = arith.constant 0 : index
    %114 = vector.load %arg13[%113, %c0_31] : memref<128x32xf32, #tpu.memory_space<vmem>>, vector<8x32xf32>
    tpu.vector_store %arg13[%113, %c0_31], %112 {strides = array<i32>} : memref<128x32xf32, #tpu.memory_space<vmem>>, vector<8x32xf32>,
    %c3_i32 = arith.constant 3 : i32
    %c8_i32_32 = arith.constant 8 : i32
    %115 = arith.muli %c3_i32, %c8_i32_32 : i32
    %116 = tpu.assume_multiple %115, 8 : i32
    %117 = arith.index_cast %116 : i32 to index
    %c0_33 = arith.constant 0 : index
    %118 = vector.load %arg12[%117, %c0_33] : memref<128x96xf32, #tpu.memory_space<vmem>>, vector<8x96xf32>
    %cst_34 = arith.constant dense<0.000000e+00> : vector<8x96xf32>
    %119 = tpu.matmul %112, %7, %cst_34 {dimension_numbers = #tpu.dot_dimension_numbers<[1], [0], [0], [1], [0, 0, 1, 1], [], []>} : vector<8x32xf32>, vector<32x96xf32>, vector<8x96xf32> -> vector<8x96xf32>
    %120 = vector.broadcast %8 : vector<1x96xf32> to vector<8x96xf32>
    %121 = arith.addf %119, %120 : vector<8x96xf32>
    %122 = vector.extract_strided_slice %118 {offsets = [0, 0], sizes = [8, 32], strides = [1, 1]} : vector<8x96xf32> to vector<8x32xf32>
    %123 = vector.extract_strided_slice %121 {offsets = [0, 0], sizes = [8, 32], strides = [1, 1]} : vector<8x96xf32> to vector<8x32xf32>
    %124 = arith.addf %122, %123 : vector<8x32xf32>
    %125 = arith.negf %124 : vector<8x32xf32>
    %126 = math.exp %125 : vector<8x32xf32>
    %cst_35 = arith.constant 1.000000e+00 : f32
    %127 = vector.broadcast %cst_35 : f32 to vector<8x32xf32>
    %128 = arith.addf %127, %126 : vector<8x32xf32>
    %129 = arith.divf %127, %128 : vector<8x32xf32>
    %130 = vector.extract_strided_slice %118 {offsets = [0, 32], sizes = [8, 32], strides = [1, 1]} : vector<8x96xf32> to vector<8x32xf32>
    %131 = vector.extract_strided_slice %121 {offsets = [0, 32], sizes = [8, 32], strides = [1, 1]} : vector<8x96xf32> to vector<8x32xf32>
    %132 = arith.addf %130, %131 : vector<8x32xf32>
    %133 = arith.negf %132 : vector<8x32xf32>
    %134 = math.exp %133 : vector<8x32xf32>
    %cst_36 = arith.constant 1.000000e+00 : f32
    %135 = vector.broadcast %cst_36 : f32 to vector<8x32xf32>
    %136 = arith.addf %135, %134 : vector<8x32xf32>
    %137 = arith.divf %135, %136 : vector<8x32xf32>
    %138 = vector.extract_strided_slice %118 {offsets = [0, 64], sizes = [8, 32], strides = [1, 1]} : vector<8x96xf32> to vector<8x32xf32>
    %139 = vector.extract_strided_slice %121 {offsets = [0, 64], sizes = [8, 32], strides = [1, 1]} : vector<8x96xf32> to vector<8x32xf32>
    %140 = arith.mulf %129, %139 : vector<8x32xf32>
    %141 = arith.addf %138, %140 : vector<8x32xf32>
    %142 = math.tanh %141 : vector<8x32xf32>
    %cst_37 = arith.constant 1.000000e+00 : f32
    %143 = vector.broadcast %cst_37 : f32 to vector<8x32xf32>
    %144 = arith.subf %143, %137 : vector<8x32xf32>
    %145 = arith.mulf %144, %142 : vector<8x32xf32>
    %146 = arith.mulf %137, %112 : vector<8x32xf32>
    %147 = arith.addf %145, %146 : vector<8x32xf32>
    %148 = arith.index_cast %116 : i32 to index
    %c0_38 = arith.constant 0 : index
    %149 = vector.load %arg13[%148, %c0_38] : memref<128x32xf32, #tpu.memory_space<vmem>>, vector<8x32xf32>
    tpu.vector_store %arg13[%148, %c0_38], %147 {strides = array<i32>} : memref<128x32xf32, #tpu.memory_space<vmem>>, vector<8x32xf32>,
    %c4_i32 = arith.constant 4 : i32
    %c8_i32_39 = arith.constant 8 : i32
    %150 = arith.muli %c4_i32, %c8_i32_39 : i32
    %151 = tpu.assume_multiple %150, 8 : i32
    %152 = arith.index_cast %151 : i32 to index
    %c0_40 = arith.constant 0 : index
    %153 = vector.load %arg12[%152, %c0_40] : memref<128x96xf32, #tpu.memory_space<vmem>>, vector<8x96xf32>
    %cst_41 = arith.constant dense<0.000000e+00> : vector<8x96xf32>
    %154 = tpu.matmul %147, %7, %cst_41 {dimension_numbers = #tpu.dot_dimension_numbers<[1], [0], [0], [1], [0, 0, 1, 1], [], []>} : vector<8x32xf32>, vector<32x96xf32>, vector<8x96xf32> -> vector<8x96xf32>
    %155 = vector.broadcast %8 : vector<1x96xf32> to vector<8x96xf32>
    %156 = arith.addf %154, %155 : vector<8x96xf32>
    %157 = vector.extract_strided_slice %153 {offsets = [0, 0], sizes = [8, 32], strides = [1, 1]} : vector<8x96xf32> to vector<8x32xf32>
    %158 = vector.extract_strided_slice %156 {offsets = [0, 0], sizes = [8, 32], strides = [1, 1]} : vector<8x96xf32> to vector<8x32xf32>
    %159 = arith.addf %157, %158 : vector<8x32xf32>
    %160 = arith.negf %159 : vector<8x32xf32>
    %161 = math.exp %160 : vector<8x32xf32>
    %cst_42 = arith.constant 1.000000e+00 : f32
    %162 = vector.broadcast %cst_42 : f32 to vector<8x32xf32>
    %163 = arith.addf %162, %161 : vector<8x32xf32>
    %164 = arith.divf %162, %163 : vector<8x32xf32>
    %165 = vector.extract_strided_slice %153 {offsets = [0, 32], sizes = [8, 32], strides = [1, 1]} : vector<8x96xf32> to vector<8x32xf32>
    %166 = vector.extract_strided_slice %156 {offsets = [0, 32], sizes = [8, 32], strides = [1, 1]} : vector<8x96xf32> to vector<8x32xf32>
    %167 = arith.addf %165, %166 : vector<8x32xf32>
    %168 = arith.negf %167 : vector<8x32xf32>
    %169 = math.exp %168 : vector<8x32xf32>
    %cst_43 = arith.constant 1.000000e+00 : f32
    %170 = vector.broadcast %cst_43 : f32 to vector<8x32xf32>
    %171 = arith.addf %170, %169 : vector<8x32xf32>
    %172 = arith.divf %170, %171 : vector<8x32xf32>
    %173 = vector.extract_strided_slice %153 {offsets = [0, 64], sizes = [8, 32], strides = [1, 1]} : vector<8x96xf32> to vector<8x32xf32>
    %174 = vector.extract_strided_slice %156 {offsets = [0, 64], sizes = [8, 32], strides = [1, 1]} : vector<8x96xf32> to vector<8x32xf32>
    %175 = arith.mulf %164, %174 : vector<8x32xf32>
    %176 = arith.addf %173, %175 : vector<8x32xf32>
    %177 = math.tanh %176 : vector<8x32xf32>
    %cst_44 = arith.constant 1.000000e+00 : f32
    %178 = vector.broadcast %cst_44 : f32 to vector<8x32xf32>
    %179 = arith.subf %178, %172 : vector<8x32xf32>
    %180 = arith.mulf %179, %177 : vector<8x32xf32>
    %181 = arith.mulf %172, %147 : vector<8x32xf32>
    %182 = arith.addf %180, %181 : vector<8x32xf32>
    %183 = arith.index_cast %151 : i32 to index
    %c0_45 = arith.constant 0 : index
    %184 = vector.load %arg13[%183, %c0_45] : memref<128x32xf32, #tpu.memory_space<vmem>>, vector<8x32xf32>
    tpu.vector_store %arg13[%183, %c0_45], %182 {strides = array<i32>} : memref<128x32xf32, #tpu.memory_space<vmem>>, vector<8x32xf32>,
    %c5_i32 = arith.constant 5 : i32
    %c8_i32_46 = arith.constant 8 : i32
    %185 = arith.muli %c5_i32, %c8_i32_46 : i32
    %186 = tpu.assume_multiple %185, 8 : i32
    %187 = arith.index_cast %186 : i32 to index
    %c0_47 = arith.constant 0 : index
    %188 = vector.load %arg12[%187, %c0_47] : memref<128x96xf32, #tpu.memory_space<vmem>>, vector<8x96xf32>
    %cst_48 = arith.constant dense<0.000000e+00> : vector<8x96xf32>
    %189 = tpu.matmul %182, %7, %cst_48 {dimension_numbers = #tpu.dot_dimension_numbers<[1], [0], [0], [1], [0, 0, 1, 1], [], []>} : vector<8x32xf32>, vector<32x96xf32>, vector<8x96xf32> -> vector<8x96xf32>
    %190 = vector.broadcast %8 : vector<1x96xf32> to vector<8x96xf32>
    %191 = arith.addf %189, %190 : vector<8x96xf32>
    %192 = vector.extract_strided_slice %188 {offsets = [0, 0], sizes = [8, 32], strides = [1, 1]} : vector<8x96xf32> to vector<8x32xf32>
    %193 = vector.extract_strided_slice %191 {offsets = [0, 0], sizes = [8, 32], strides = [1, 1]} : vector<8x96xf32> to vector<8x32xf32>
    %194 = arith.addf %192, %193 : vector<8x32xf32>
    %195 = arith.negf %194 : vector<8x32xf32>
    %196 = math.exp %195 : vector<8x32xf32>
    %cst_49 = arith.constant 1.000000e+00 : f32
    %197 = vector.broadcast %cst_49 : f32 to vector<8x32xf32>
    %198 = arith.addf %197, %196 : vector<8x32xf32>
    %199 = arith.divf %197, %198 : vector<8x32xf32>
    %200 = vector.extract_strided_slice %188 {offsets = [0, 32], sizes = [8, 32], strides = [1, 1]} : vector<8x96xf32> to vector<8x32xf32>
    %201 = vector.extract_strided_slice %191 {offsets = [0, 32], sizes = [8, 32], strides = [1, 1]} : vector<8x96xf32> to vector<8x32xf32>
    %202 = arith.addf %200, %201 : vector<8x32xf32>
    %203 = arith.negf %202 : vector<8x32xf32>
    %204 = math.exp %203 : vector<8x32xf32>
    %cst_50 = arith.constant 1.000000e+00 : f32
    %205 = vector.broadcast %cst_50 : f32 to vector<8x32xf32>
    %206 = arith.addf %205, %204 : vector<8x32xf32>
    %207 = arith.divf %205, %206 : vector<8x32xf32>
    %208 = vector.extract_strided_slice %188 {offsets = [0, 64], sizes = [8, 32], strides = [1, 1]} : vector<8x96xf32> to vector<8x32xf32>
    %209 = vector.extract_strided_slice %191 {offsets = [0, 64], sizes = [8, 32], strides = [1, 1]} : vector<8x96xf32> to vector<8x32xf32>
    %210 = arith.mulf %199, %209 : vector<8x32xf32>
    %211 = arith.addf %208, %210 : vector<8x32xf32>
    %212 = math.tanh %211 : vector<8x32xf32>
    %cst_51 = arith.constant 1.000000e+00 : f32
    %213 = vector.broadcast %cst_51 : f32 to vector<8x32xf32>
    %214 = arith.subf %213, %207 : vector<8x32xf32>
    %215 = arith.mulf %214, %212 : vector<8x32xf32>
    %216 = arith.mulf %207, %182 : vector<8x32xf32>
    %217 = arith.addf %215, %216 : vector<8x32xf32>
    %218 = arith.index_cast %186 : i32 to index
    %c0_52 = arith.constant 0 : index
    %219 = vector.load %arg13[%218, %c0_52] : memref<128x32xf32, #tpu.memory_space<vmem>>, vector<8x32xf32>
    tpu.vector_store %arg13[%218, %c0_52], %217 {strides = array<i32>} : memref<128x32xf32, #tpu.memory_space<vmem>>, vector<8x32xf32>,
    %c6_i32 = arith.constant 6 : i32
    %c8_i32_53 = arith.constant 8 : i32
    %220 = arith.muli %c6_i32, %c8_i32_53 : i32
    %221 = tpu.assume_multiple %220, 8 : i32
    %222 = arith.index_cast %221 : i32 to index
    %c0_54 = arith.constant 0 : index
    %223 = vector.load %arg12[%222, %c0_54] : memref<128x96xf32, #tpu.memory_space<vmem>>, vector<8x96xf32>
    %cst_55 = arith.constant dense<0.000000e+00> : vector<8x96xf32>
    %224 = tpu.matmul %217, %7, %cst_55 {dimension_numbers = #tpu.dot_dimension_numbers<[1], [0], [0], [1], [0, 0, 1, 1], [], []>} : vector<8x32xf32>, vector<32x96xf32>, vector<8x96xf32> -> vector<8x96xf32>
    %225 = vector.broadcast %8 : vector<1x96xf32> to vector<8x96xf32>
    %226 = arith.addf %224, %225 : vector<8x96xf32>
    %227 = vector.extract_strided_slice %223 {offsets = [0, 0], sizes = [8, 32], strides = [1, 1]} : vector<8x96xf32> to vector<8x32xf32>
    %228 = vector.extract_strided_slice %226 {offsets = [0, 0], sizes = [8, 32], strides = [1, 1]} : vector<8x96xf32> to vector<8x32xf32>
    %229 = arith.addf %227, %228 : vector<8x32xf32>
    %230 = arith.negf %229 : vector<8x32xf32>
    %231 = math.exp %230 : vector<8x32xf32>
    %cst_56 = arith.constant 1.000000e+00 : f32
    %232 = vector.broadcast %cst_56 : f32 to vector<8x32xf32>
    %233 = arith.addf %232, %231 : vector<8x32xf32>
    %234 = arith.divf %232, %233 : vector<8x32xf32>
    %235 = vector.extract_strided_slice %223 {offsets = [0, 32], sizes = [8, 32], strides = [1, 1]} : vector<8x96xf32> to vector<8x32xf32>
    %236 = vector.extract_strided_slice %226 {offsets = [0, 32], sizes = [8, 32], strides = [1, 1]} : vector<8x96xf32> to vector<8x32xf32>
    %237 = arith.addf %235, %236 : vector<8x32xf32>
    %238 = arith.negf %237 : vector<8x32xf32>
    %239 = math.exp %238 : vector<8x32xf32>
    %cst_57 = arith.constant 1.000000e+00 : f32
    %240 = vector.broadcast %cst_57 : f32 to vector<8x32xf32>
    %241 = arith.addf %240, %239 : vector<8x32xf32>
    %242 = arith.divf %240, %241 : vector<8x32xf32>
    %243 = vector.extract_strided_slice %223 {offsets = [0, 64], sizes = [8, 32], strides = [1, 1]} : vector<8x96xf32> to vector<8x32xf32>
    %244 = vector.extract_strided_slice %226 {offsets = [0, 64], sizes = [8, 32], strides = [1, 1]} : vector<8x96xf32> to vector<8x32xf32>
    %245 = arith.mulf %234, %244 : vector<8x32xf32>
    %246 = arith.addf %243, %245 : vector<8x32xf32>
    %247 = math.tanh %246 : vector<8x32xf32>
    %cst_58 = arith.constant 1.000000e+00 : f32
    %248 = vector.broadcast %cst_58 : f32 to vector<8x32xf32>
    %249 = arith.subf %248, %242 : vector<8x32xf32>
    %250 = arith.mulf %249, %247 : vector<8x32xf32>
    %251 = arith.mulf %242, %217 : vector<8x32xf32>
    %252 = arith.addf %250, %251 : vector<8x32xf32>
    %253 = arith.index_cast %221 : i32 to index
    %c0_59 = arith.constant 0 : index
    %254 = vector.load %arg13[%253, %c0_59] : memref<128x32xf32, #tpu.memory_space<vmem>>, vector<8x32xf32>
    tpu.vector_store %arg13[%253, %c0_59], %252 {strides = array<i32>} : memref<128x32xf32, #tpu.memory_space<vmem>>, vector<8x32xf32>,
    %c7_i32 = arith.constant 7 : i32
    %c8_i32_60 = arith.constant 8 : i32
    %255 = arith.muli %c7_i32, %c8_i32_60 : i32
    %256 = tpu.assume_multiple %255, 8 : i32
    %257 = arith.index_cast %256 : i32 to index
    %c0_61 = arith.constant 0 : index
    %258 = vector.load %arg12[%257, %c0_61] : memref<128x96xf32, #tpu.memory_space<vmem>>, vector<8x96xf32>
    %cst_62 = arith.constant dense<0.000000e+00> : vector<8x96xf32>
    %259 = tpu.matmul %252, %7, %cst_62 {dimension_numbers = #tpu.dot_dimension_numbers<[1], [0], [0], [1], [0, 0, 1, 1], [], []>} : vector<8x32xf32>, vector<32x96xf32>, vector<8x96xf32> -> vector<8x96xf32>
    %260 = vector.broadcast %8 : vector<1x96xf32> to vector<8x96xf32>
    %261 = arith.addf %259, %260 : vector<8x96xf32>
    %262 = vector.extract_strided_slice %258 {offsets = [0, 0], sizes = [8, 32], strides = [1, 1]} : vector<8x96xf32> to vector<8x32xf32>
    %263 = vector.extract_strided_slice %261 {offsets = [0, 0], sizes = [8, 32], strides = [1, 1]} : vector<8x96xf32> to vector<8x32xf32>
    %264 = arith.addf %262, %263 : vector<8x32xf32>
    %265 = arith.negf %264 : vector<8x32xf32>
    %266 = math.exp %265 : vector<8x32xf32>
    %cst_63 = arith.constant 1.000000e+00 : f32
    %267 = vector.broadcast %cst_63 : f32 to vector<8x32xf32>
    %268 = arith.addf %267, %266 : vector<8x32xf32>
    %269 = arith.divf %267, %268 : vector<8x32xf32>
    %270 = vector.extract_strided_slice %258 {offsets = [0, 32], sizes = [8, 32], strides = [1, 1]} : vector<8x96xf32> to vector<8x32xf32>
    %271 = vector.extract_strided_slice %261 {offsets = [0, 32], sizes = [8, 32], strides = [1, 1]} : vector<8x96xf32> to vector<8x32xf32>
    %272 = arith.addf %270, %271 : vector<8x32xf32>
    %273 = arith.negf %272 : vector<8x32xf32>
    %274 = math.exp %273 : vector<8x32xf32>
    %cst_64 = arith.constant 1.000000e+00 : f32
    %275 = vector.broadcast %cst_64 : f32 to vector<8x32xf32>
    %276 = arith.addf %275, %274 : vector<8x32xf32>
    %277 = arith.divf %275, %276 : vector<8x32xf32>
    %278 = vector.extract_strided_slice %258 {offsets = [0, 64], sizes = [8, 32], strides = [1, 1]} : vector<8x96xf32> to vector<8x32xf32>
    %279 = vector.extract_strided_slice %261 {offsets = [0, 64], sizes = [8, 32], strides = [1, 1]} : vector<8x96xf32> to vector<8x32xf32>
    %280 = arith.mulf %269, %279 : vector<8x32xf32>
    %281 = arith.addf %278, %280 : vector<8x32xf32>
    %282 = math.tanh %281 : vector<8x32xf32>
    %cst_65 = arith.constant 1.000000e+00 : f32
    %283 = vector.broadcast %cst_65 : f32 to vector<8x32xf32>
    %284 = arith.subf %283, %277 : vector<8x32xf32>
    %285 = arith.mulf %284, %282 : vector<8x32xf32>
    %286 = arith.mulf %277, %252 : vector<8x32xf32>
    %287 = arith.addf %285, %286 : vector<8x32xf32>
    %288 = arith.index_cast %256 : i32 to index
    %c0_66 = arith.constant 0 : index
    %289 = vector.load %arg13[%288, %c0_66] : memref<128x32xf32, #tpu.memory_space<vmem>>, vector<8x32xf32>
    tpu.vector_store %arg13[%288, %c0_66], %287 {strides = array<i32>} : memref<128x32xf32, #tpu.memory_space<vmem>>, vector<8x32xf32>,
    %c8_i32_67 = arith.constant 8 : i32
    %c8_i32_68 = arith.constant 8 : i32
    %290 = arith.muli %c8_i32_67, %c8_i32_68 : i32
    %291 = tpu.assume_multiple %290, 8 : i32
    %292 = arith.index_cast %291 : i32 to index
    %c0_69 = arith.constant 0 : index
    %293 = vector.load %arg12[%292, %c0_69] : memref<128x96xf32, #tpu.memory_space<vmem>>, vector<8x96xf32>
    %cst_70 = arith.constant dense<0.000000e+00> : vector<8x96xf32>
    %294 = tpu.matmul %287, %7, %cst_70 {dimension_numbers = #tpu.dot_dimension_numbers<[1], [0], [0], [1], [0, 0, 1, 1], [], []>} : vector<8x32xf32>, vector<32x96xf32>, vector<8x96xf32> -> vector<8x96xf32>
    %295 = vector.broadcast %8 : vector<1x96xf32> to vector<8x96xf32>
    %296 = arith.addf %294, %295 : vector<8x96xf32>
    %297 = vector.extract_strided_slice %293 {offsets = [0, 0], sizes = [8, 32], strides = [1, 1]} : vector<8x96xf32> to vector<8x32xf32>
    %298 = vector.extract_strided_slice %296 {offsets = [0, 0], sizes = [8, 32], strides = [1, 1]} : vector<8x96xf32> to vector<8x32xf32>
    %299 = arith.addf %297, %298 : vector<8x32xf32>
    %300 = arith.negf %299 : vector<8x32xf32>
    %301 = math.exp %300 : vector<8x32xf32>
    %cst_71 = arith.constant 1.000000e+00 : f32
    %302 = vector.broadcast %cst_71 : f32 to vector<8x32xf32>
    %303 = arith.addf %302, %301 : vector<8x32xf32>
    %304 = arith.divf %302, %303 : vector<8x32xf32>
    %305 = vector.extract_strided_slice %293 {offsets = [0, 32], sizes = [8, 32], strides = [1, 1]} : vector<8x96xf32> to vector<8x32xf32>
    %306 = vector.extract_strided_slice %296 {offsets = [0, 32], sizes = [8, 32], strides = [1, 1]} : vector<8x96xf32> to vector<8x32xf32>
    %307 = arith.addf %305, %306 : vector<8x32xf32>
    %308 = arith.negf %307 : vector<8x32xf32>
    %309 = math.exp %308 : vector<8x32xf32>
    %cst_72 = arith.constant 1.000000e+00 : f32
    %310 = vector.broadcast %cst_72 : f32 to vector<8x32xf32>
    %311 = arith.addf %310, %309 : vector<8x32xf32>
    %312 = arith.divf %310, %311 : vector<8x32xf32>
    %313 = vector.extract_strided_slice %293 {offsets = [0, 64], sizes = [8, 32], strides = [1, 1]} : vector<8x96xf32> to vector<8x32xf32>
    %314 = vector.extract_strided_slice %296 {offsets = [0, 64], sizes = [8, 32], strides = [1, 1]} : vector<8x96xf32> to vector<8x32xf32>
    %315 = arith.mulf %304, %314 : vector<8x32xf32>
    %316 = arith.addf %313, %315 : vector<8x32xf32>
    %317 = math.tanh %316 : vector<8x32xf32>
    %cst_73 = arith.constant 1.000000e+00 : f32
    %318 = vector.broadcast %cst_73 : f32 to vector<8x32xf32>
    %319 = arith.subf %318, %312 : vector<8x32xf32>
    %320 = arith.mulf %319, %317 : vector<8x32xf32>
    %321 = arith.mulf %312, %287 : vector<8x32xf32>
    %322 = arith.addf %320, %321 : vector<8x32xf32>
    %323 = arith.index_cast %291 : i32 to index
    %c0_74 = arith.constant 0 : index
    %324 = vector.load %arg13[%323, %c0_74] : memref<128x32xf32, #tpu.memory_space<vmem>>, vector<8x32xf32>
    tpu.vector_store %arg13[%323, %c0_74], %322 {strides = array<i32>} : memref<128x32xf32, #tpu.memory_space<vmem>>, vector<8x32xf32>,
    %c9_i32 = arith.constant 9 : i32
    %c8_i32_75 = arith.constant 8 : i32
    %325 = arith.muli %c9_i32, %c8_i32_75 : i32
    %326 = tpu.assume_multiple %325, 8 : i32
    %327 = arith.index_cast %326 : i32 to index
    %c0_76 = arith.constant 0 : index
    %328 = vector.load %arg12[%327, %c0_76] : memref<128x96xf32, #tpu.memory_space<vmem>>, vector<8x96xf32>
    %cst_77 = arith.constant dense<0.000000e+00> : vector<8x96xf32>
    %329 = tpu.matmul %322, %7, %cst_77 {dimension_numbers = #tpu.dot_dimension_numbers<[1], [0], [0], [1], [0, 0, 1, 1], [], []>} : vector<8x32xf32>, vector<32x96xf32>, vector<8x96xf32> -> vector<8x96xf32>
    %330 = vector.broadcast %8 : vector<1x96xf32> to vector<8x96xf32>
    %331 = arith.addf %329, %330 : vector<8x96xf32>
    %332 = vector.extract_strided_slice %328 {offsets = [0, 0], sizes = [8, 32], strides = [1, 1]} : vector<8x96xf32> to vector<8x32xf32>
    %333 = vector.extract_strided_slice %331 {offsets = [0, 0], sizes = [8, 32], strides = [1, 1]} : vector<8x96xf32> to vector<8x32xf32>
    %334 = arith.addf %332, %333 : vector<8x32xf32>
    %335 = arith.negf %334 : vector<8x32xf32>
    %336 = math.exp %335 : vector<8x32xf32>
    %cst_78 = arith.constant 1.000000e+00 : f32
    %337 = vector.broadcast %cst_78 : f32 to vector<8x32xf32>
    %338 = arith.addf %337, %336 : vector<8x32xf32>
    %339 = arith.divf %337, %338 : vector<8x32xf32>
    %340 = vector.extract_strided_slice %328 {offsets = [0, 32], sizes = [8, 32], strides = [1, 1]} : vector<8x96xf32> to vector<8x32xf32>
    %341 = vector.extract_strided_slice %331 {offsets = [0, 32], sizes = [8, 32], strides = [1, 1]} : vector<8x96xf32> to vector<8x32xf32>
    %342 = arith.addf %340, %341 : vector<8x32xf32>
    %343 = arith.negf %342 : vector<8x32xf32>
    %344 = math.exp %343 : vector<8x32xf32>
    %cst_79 = arith.constant 1.000000e+00 : f32
    %345 = vector.broadcast %cst_79 : f32 to vector<8x32xf32>
    %346 = arith.addf %345, %344 : vector<8x32xf32>
    %347 = arith.divf %345, %346 : vector<8x32xf32>
    %348 = vector.extract_strided_slice %328 {offsets = [0, 64], sizes = [8, 32], strides = [1, 1]} : vector<8x96xf32> to vector<8x32xf32>
    %349 = vector.extract_strided_slice %331 {offsets = [0, 64], sizes = [8, 32], strides = [1, 1]} : vector<8x96xf32> to vector<8x32xf32>
    %350 = arith.mulf %339, %349 : vector<8x32xf32>
    %351 = arith.addf %348, %350 : vector<8x32xf32>
    %352 = math.tanh %351 : vector<8x32xf32>
    %cst_80 = arith.constant 1.000000e+00 : f32
    %353 = vector.broadcast %cst_80 : f32 to vector<8x32xf32>
    %354 = arith.subf %353, %347 : vector<8x32xf32>
    %355 = arith.mulf %354, %352 : vector<8x32xf32>
    %356 = arith.mulf %347, %322 : vector<8x32xf32>
    %357 = arith.addf %355, %356 : vector<8x32xf32>
    %358 = arith.index_cast %326 : i32 to index
    %c0_81 = arith.constant 0 : index
    %359 = vector.load %arg13[%358, %c0_81] : memref<128x32xf32, #tpu.memory_space<vmem>>, vector<8x32xf32>
    tpu.vector_store %arg13[%358, %c0_81], %357 {strides = array<i32>} : memref<128x32xf32, #tpu.memory_space<vmem>>, vector<8x32xf32>,
    %c10_i32 = arith.constant 10 : i32
    %c8_i32_82 = arith.constant 8 : i32
    %360 = arith.muli %c10_i32, %c8_i32_82 : i32
    %361 = tpu.assume_multiple %360, 8 : i32
    %362 = arith.index_cast %361 : i32 to index
    %c0_83 = arith.constant 0 : index
    %363 = vector.load %arg12[%362, %c0_83] : memref<128x96xf32, #tpu.memory_space<vmem>>, vector<8x96xf32>
    %cst_84 = arith.constant dense<0.000000e+00> : vector<8x96xf32>
    %364 = tpu.matmul %357, %7, %cst_84 {dimension_numbers = #tpu.dot_dimension_numbers<[1], [0], [0], [1], [0, 0, 1, 1], [], []>} : vector<8x32xf32>, vector<32x96xf32>, vector<8x96xf32> -> vector<8x96xf32>
    %365 = vector.broadcast %8 : vector<1x96xf32> to vector<8x96xf32>
    %366 = arith.addf %364, %365 : vector<8x96xf32>
    %367 = vector.extract_strided_slice %363 {offsets = [0, 0], sizes = [8, 32], strides = [1, 1]} : vector<8x96xf32> to vector<8x32xf32>
    %368 = vector.extract_strided_slice %366 {offsets = [0, 0], sizes = [8, 32], strides = [1, 1]} : vector<8x96xf32> to vector<8x32xf32>
    %369 = arith.addf %367, %368 : vector<8x32xf32>
    %370 = arith.negf %369 : vector<8x32xf32>
    %371 = math.exp %370 : vector<8x32xf32>
    %cst_85 = arith.constant 1.000000e+00 : f32
    %372 = vector.broadcast %cst_85 : f32 to vector<8x32xf32>
    %373 = arith.addf %372, %371 : vector<8x32xf32>
    %374 = arith.divf %372, %373 : vector<8x32xf32>
    %375 = vector.extract_strided_slice %363 {offsets = [0, 32], sizes = [8, 32], strides = [1, 1]} : vector<8x96xf32> to vector<8x32xf32>
    %376 = vector.extract_strided_slice %366 {offsets = [0, 32], sizes = [8, 32], strides = [1, 1]} : vector<8x96xf32> to vector<8x32xf32>
    %377 = arith.addf %375, %376 : vector<8x32xf32>
    %378 = arith.negf %377 : vector<8x32xf32>
    %379 = math.exp %378 : vector<8x32xf32>
    %cst_86 = arith.constant 1.000000e+00 : f32
    %380 = vector.broadcast %cst_86 : f32 to vector<8x32xf32>
    %381 = arith.addf %380, %379 : vector<8x32xf32>
    %382 = arith.divf %380, %381 : vector<8x32xf32>
    %383 = vector.extract_strided_slice %363 {offsets = [0, 64], sizes = [8, 32], strides = [1, 1]} : vector<8x96xf32> to vector<8x32xf32>
    %384 = vector.extract_strided_slice %366 {offsets = [0, 64], sizes = [8, 32], strides = [1, 1]} : vector<8x96xf32> to vector<8x32xf32>
    %385 = arith.mulf %374, %384 : vector<8x32xf32>
    %386 = arith.addf %383, %385 : vector<8x32xf32>
    %387 = math.tanh %386 : vector<8x32xf32>
    %cst_87 = arith.constant 1.000000e+00 : f32
    %388 = vector.broadcast %cst_87 : f32 to vector<8x32xf32>
    %389 = arith.subf %388, %382 : vector<8x32xf32>
    %390 = arith.mulf %389, %387 : vector<8x32xf32>
    %391 = arith.mulf %382, %357 : vector<8x32xf32>
    %392 = arith.addf %390, %391 : vector<8x32xf32>
    %393 = arith.index_cast %361 : i32 to index
    %c0_88 = arith.constant 0 : index
    %394 = vector.load %arg13[%393, %c0_88] : memref<128x32xf32, #tpu.memory_space<vmem>>, vector<8x32xf32>
    tpu.vector_store %arg13[%393, %c0_88], %392 {strides = array<i32>} : memref<128x32xf32, #tpu.memory_space<vmem>>, vector<8x32xf32>,
    %c11_i32 = arith.constant 11 : i32
    %c8_i32_89 = arith.constant 8 : i32
    %395 = arith.muli %c11_i32, %c8_i32_89 : i32
    %396 = tpu.assume_multiple %395, 8 : i32
    %397 = arith.index_cast %396 : i32 to index
    %c0_90 = arith.constant 0 : index
    %398 = vector.load %arg12[%397, %c0_90] : memref<128x96xf32, #tpu.memory_space<vmem>>, vector<8x96xf32>
    %cst_91 = arith.constant dense<0.000000e+00> : vector<8x96xf32>
    %399 = tpu.matmul %392, %7, %cst_91 {dimension_numbers = #tpu.dot_dimension_numbers<[1], [0], [0], [1], [0, 0, 1, 1], [], []>} : vector<8x32xf32>, vector<32x96xf32>, vector<8x96xf32> -> vector<8x96xf32>
    %400 = vector.broadcast %8 : vector<1x96xf32> to vector<8x96xf32>
    %401 = arith.addf %399, %400 : vector<8x96xf32>
    %402 = vector.extract_strided_slice %398 {offsets = [0, 0], sizes = [8, 32], strides = [1, 1]} : vector<8x96xf32> to vector<8x32xf32>
    %403 = vector.extract_strided_slice %401 {offsets = [0, 0], sizes = [8, 32], strides = [1, 1]} : vector<8x96xf32> to vector<8x32xf32>
    %404 = arith.addf %402, %403 : vector<8x32xf32>
    %405 = arith.negf %404 : vector<8x32xf32>
    %406 = math.exp %405 : vector<8x32xf32>
    %cst_92 = arith.constant 1.000000e+00 : f32
    %407 = vector.broadcast %cst_92 : f32 to vector<8x32xf32>
    %408 = arith.addf %407, %406 : vector<8x32xf32>
    %409 = arith.divf %407, %408 : vector<8x32xf32>
    %410 = vector.extract_strided_slice %398 {offsets = [0, 32], sizes = [8, 32], strides = [1, 1]} : vector<8x96xf32> to vector<8x32xf32>
    %411 = vector.extract_strided_slice %401 {offsets = [0, 32], sizes = [8, 32], strides = [1, 1]} : vector<8x96xf32> to vector<8x32xf32>
    %412 = arith.addf %410, %411 : vector<8x32xf32>
    %413 = arith.negf %412 : vector<8x32xf32>
    %414 = math.exp %413 : vector<8x32xf32>
    %cst_93 = arith.constant 1.000000e+00 : f32
    %415 = vector.broadcast %cst_93 : f32 to vector<8x32xf32>
    %416 = arith.addf %415, %414 : vector<8x32xf32>
    %417 = arith.divf %415, %416 : vector<8x32xf32>
    %418 = vector.extract_strided_slice %398 {offsets = [0, 64], sizes = [8, 32], strides = [1, 1]} : vector<8x96xf32> to vector<8x32xf32>
    %419 = vector.extract_strided_slice %401 {offsets = [0, 64], sizes = [8, 32], strides = [1, 1]} : vector<8x96xf32> to vector<8x32xf32>
    %420 = arith.mulf %409, %419 : vector<8x32xf32>
    %421 = arith.addf %418, %420 : vector<8x32xf32>
    %422 = math.tanh %421 : vector<8x32xf32>
    %cst_94 = arith.constant 1.000000e+00 : f32
    %423 = vector.broadcast %cst_94 : f32 to vector<8x32xf32>
    %424 = arith.subf %423, %417 : vector<8x32xf32>
    %425 = arith.mulf %424, %422 : vector<8x32xf32>
    %426 = arith.mulf %417, %392 : vector<8x32xf32>
    %427 = arith.addf %425, %426 : vector<8x32xf32>
    %428 = arith.index_cast %396 : i32 to index
    %c0_95 = arith.constant 0 : index
    %429 = vector.load %arg13[%428, %c0_95] : memref<128x32xf32, #tpu.memory_space<vmem>>, vector<8x32xf32>
    tpu.vector_store %arg13[%428, %c0_95], %427 {strides = array<i32>} : memref<128x32xf32, #tpu.memory_space<vmem>>, vector<8x32xf32>,
    %c12_i32 = arith.constant 12 : i32
    %c8_i32_96 = arith.constant 8 : i32
    %430 = arith.muli %c12_i32, %c8_i32_96 : i32
    %431 = tpu.assume_multiple %430, 8 : i32
    %432 = arith.index_cast %431 : i32 to index
    %c0_97 = arith.constant 0 : index
    %433 = vector.load %arg12[%432, %c0_97] : memref<128x96xf32, #tpu.memory_space<vmem>>, vector<8x96xf32>
    %cst_98 = arith.constant dense<0.000000e+00> : vector<8x96xf32>
    %434 = tpu.matmul %427, %7, %cst_98 {dimension_numbers = #tpu.dot_dimension_numbers<[1], [0], [0], [1], [0, 0, 1, 1], [], []>} : vector<8x32xf32>, vector<32x96xf32>, vector<8x96xf32> -> vector<8x96xf32>
    %435 = vector.broadcast %8 : vector<1x96xf32> to vector<8x96xf32>
    %436 = arith.addf %434, %435 : vector<8x96xf32>
    %437 = vector.extract_strided_slice %433 {offsets = [0, 0], sizes = [8, 32], strides = [1, 1]} : vector<8x96xf32> to vector<8x32xf32>
    %438 = vector.extract_strided_slice %436 {offsets = [0, 0], sizes = [8, 32], strides = [1, 1]} : vector<8x96xf32> to vector<8x32xf32>
    %439 = arith.addf %437, %438 : vector<8x32xf32>
    %440 = arith.negf %439 : vector<8x32xf32>
    %441 = math.exp %440 : vector<8x32xf32>
    %cst_99 = arith.constant 1.000000e+00 : f32
    %442 = vector.broadcast %cst_99 : f32 to vector<8x32xf32>
    %443 = arith.addf %442, %441 : vector<8x32xf32>
    %444 = arith.divf %442, %443 : vector<8x32xf32>
    %445 = vector.extract_strided_slice %433 {offsets = [0, 32], sizes = [8, 32], strides = [1, 1]} : vector<8x96xf32> to vector<8x32xf32>
    %446 = vector.extract_strided_slice %436 {offsets = [0, 32], sizes = [8, 32], strides = [1, 1]} : vector<8x96xf32> to vector<8x32xf32>
    %447 = arith.addf %445, %446 : vector<8x32xf32>
    %448 = arith.negf %447 : vector<8x32xf32>
    %449 = math.exp %448 : vector<8x32xf32>
    %cst_100 = arith.constant 1.000000e+00 : f32
    %450 = vector.broadcast %cst_100 : f32 to vector<8x32xf32>
    %451 = arith.addf %450, %449 : vector<8x32xf32>
    %452 = arith.divf %450, %451 : vector<8x32xf32>
    %453 = vector.extract_strided_slice %433 {offsets = [0, 64], sizes = [8, 32], strides = [1, 1]} : vector<8x96xf32> to vector<8x32xf32>
    %454 = vector.extract_strided_slice %436 {offsets = [0, 64], sizes = [8, 32], strides = [1, 1]} : vector<8x96xf32> to vector<8x32xf32>
    %455 = arith.mulf %444, %454 : vector<8x32xf32>
    %456 = arith.addf %453, %455 : vector<8x32xf32>
    %457 = math.tanh %456 : vector<8x32xf32>
    %cst_101 = arith.constant 1.000000e+00 : f32
    %458 = vector.broadcast %cst_101 : f32 to vector<8x32xf32>
    %459 = arith.subf %458, %452 : vector<8x32xf32>
    %460 = arith.mulf %459, %457 : vector<8x32xf32>
    %461 = arith.mulf %452, %427 : vector<8x32xf32>
    %462 = arith.addf %460, %461 : vector<8x32xf32>
    %463 = arith.index_cast %431 : i32 to index
    %c0_102 = arith.constant 0 : index
    %464 = vector.load %arg13[%463, %c0_102] : memref<128x32xf32, #tpu.memory_space<vmem>>, vector<8x32xf32>
    tpu.vector_store %arg13[%463, %c0_102], %462 {strides = array<i32>} : memref<128x32xf32, #tpu.memory_space<vmem>>, vector<8x32xf32>,
    %c13_i32 = arith.constant 13 : i32
    %c8_i32_103 = arith.constant 8 : i32
    %465 = arith.muli %c13_i32, %c8_i32_103 : i32
    %466 = tpu.assume_multiple %465, 8 : i32
    %467 = arith.index_cast %466 : i32 to index
    %c0_104 = arith.constant 0 : index
    %468 = vector.load %arg12[%467, %c0_104] : memref<128x96xf32, #tpu.memory_space<vmem>>, vector<8x96xf32>
    %cst_105 = arith.constant dense<0.000000e+00> : vector<8x96xf32>
    %469 = tpu.matmul %462, %7, %cst_105 {dimension_numbers = #tpu.dot_dimension_numbers<[1], [0], [0], [1], [0, 0, 1, 1], [], []>} : vector<8x32xf32>, vector<32x96xf32>, vector<8x96xf32> -> vector<8x96xf32>
    %470 = vector.broadcast %8 : vector<1x96xf32> to vector<8x96xf32>
    %471 = arith.addf %469, %470 : vector<8x96xf32>
    %472 = vector.extract_strided_slice %468 {offsets = [0, 0], sizes = [8, 32], strides = [1, 1]} : vector<8x96xf32> to vector<8x32xf32>
    %473 = vector.extract_strided_slice %471 {offsets = [0, 0], sizes = [8, 32], strides = [1, 1]} : vector<8x96xf32> to vector<8x32xf32>
    %474 = arith.addf %472, %473 : vector<8x32xf32>
    %475 = arith.negf %474 : vector<8x32xf32>
    %476 = math.exp %475 : vector<8x32xf32>
    %cst_106 = arith.constant 1.000000e+00 : f32
    %477 = vector.broadcast %cst_106 : f32 to vector<8x32xf32>
    %478 = arith.addf %477, %476 : vector<8x32xf32>
    %479 = arith.divf %477, %478 : vector<8x32xf32>
    %480 = vector.extract_strided_slice %468 {offsets = [0, 32], sizes = [8, 32], strides = [1, 1]} : vector<8x96xf32> to vector<8x32xf32>
    %481 = vector.extract_strided_slice %471 {offsets = [0, 32], sizes = [8, 32], strides = [1, 1]} : vector<8x96xf32> to vector<8x32xf32>
    %482 = arith.addf %480, %481 : vector<8x32xf32>
    %483 = arith.negf %482 : vector<8x32xf32>
    %484 = math.exp %483 : vector<8x32xf32>
    %cst_107 = arith.constant 1.000000e+00 : f32
    %485 = vector.broadcast %cst_107 : f32 to vector<8x32xf32>
    %486 = arith.addf %485, %484 : vector<8x32xf32>
    %487 = arith.divf %485, %486 : vector<8x32xf32>
    %488 = vector.extract_strided_slice %468 {offsets = [0, 64], sizes = [8, 32], strides = [1, 1]} : vector<8x96xf32> to vector<8x32xf32>
    %489 = vector.extract_strided_slice %471 {offsets = [0, 64], sizes = [8, 32], strides = [1, 1]} : vector<8x96xf32> to vector<8x32xf32>
    %490 = arith.mulf %479, %489 : vector<8x32xf32>
    %491 = arith.addf %488, %490 : vector<8x32xf32>
    %492 = math.tanh %491 : vector<8x32xf32>
    %cst_108 = arith.constant 1.000000e+00 : f32
    %493 = vector.broadcast %cst_108 : f32 to vector<8x32xf32>
    %494 = arith.subf %493, %487 : vector<8x32xf32>
    %495 = arith.mulf %494, %492 : vector<8x32xf32>
    %496 = arith.mulf %487, %462 : vector<8x32xf32>
    %497 = arith.addf %495, %496 : vector<8x32xf32>
    %498 = arith.index_cast %466 : i32 to index
    %c0_109 = arith.constant 0 : index
    %499 = vector.load %arg13[%498, %c0_109] : memref<128x32xf32, #tpu.memory_space<vmem>>, vector<8x32xf32>
    tpu.vector_store %arg13[%498, %c0_109], %497 {strides = array<i32>} : memref<128x32xf32, #tpu.memory_space<vmem>>, vector<8x32xf32>,
    %c14_i32 = arith.constant 14 : i32
    %c8_i32_110 = arith.constant 8 : i32
    %500 = arith.muli %c14_i32, %c8_i32_110 : i32
    %501 = tpu.assume_multiple %500, 8 : i32
    %502 = arith.index_cast %501 : i32 to index
    %c0_111 = arith.constant 0 : index
    %503 = vector.load %arg12[%502, %c0_111] : memref<128x96xf32, #tpu.memory_space<vmem>>, vector<8x96xf32>
    %cst_112 = arith.constant dense<0.000000e+00> : vector<8x96xf32>
    %504 = tpu.matmul %497, %7, %cst_112 {dimension_numbers = #tpu.dot_dimension_numbers<[1], [0], [0], [1], [0, 0, 1, 1], [], []>} : vector<8x32xf32>, vector<32x96xf32>, vector<8x96xf32> -> vector<8x96xf32>
    %505 = vector.broadcast %8 : vector<1x96xf32> to vector<8x96xf32>
    %506 = arith.addf %504, %505 : vector<8x96xf32>
    %507 = vector.extract_strided_slice %503 {offsets = [0, 0], sizes = [8, 32], strides = [1, 1]} : vector<8x96xf32> to vector<8x32xf32>
    %508 = vector.extract_strided_slice %506 {offsets = [0, 0], sizes = [8, 32], strides = [1, 1]} : vector<8x96xf32> to vector<8x32xf32>
    %509 = arith.addf %507, %508 : vector<8x32xf32>
    %510 = arith.negf %509 : vector<8x32xf32>
    %511 = math.exp %510 : vector<8x32xf32>
    %cst_113 = arith.constant 1.000000e+00 : f32
    %512 = vector.broadcast %cst_113 : f32 to vector<8x32xf32>
    %513 = arith.addf %512, %511 : vector<8x32xf32>
    %514 = arith.divf %512, %513 : vector<8x32xf32>
    %515 = vector.extract_strided_slice %503 {offsets = [0, 32], sizes = [8, 32], strides = [1, 1]} : vector<8x96xf32> to vector<8x32xf32>
    %516 = vector.extract_strided_slice %506 {offsets = [0, 32], sizes = [8, 32], strides = [1, 1]} : vector<8x96xf32> to vector<8x32xf32>
    %517 = arith.addf %515, %516 : vector<8x32xf32>
    %518 = arith.negf %517 : vector<8x32xf32>
    %519 = math.exp %518 : vector<8x32xf32>
    %cst_114 = arith.constant 1.000000e+00 : f32
    %520 = vector.broadcast %cst_114 : f32 to vector<8x32xf32>
    %521 = arith.addf %520, %519 : vector<8x32xf32>
    %522 = arith.divf %520, %521 : vector<8x32xf32>
    %523 = vector.extract_strided_slice %503 {offsets = [0, 64], sizes = [8, 32], strides = [1, 1]} : vector<8x96xf32> to vector<8x32xf32>
    %524 = vector.extract_strided_slice %506 {offsets = [0, 64], sizes = [8, 32], strides = [1, 1]} : vector<8x96xf32> to vector<8x32xf32>
    %525 = arith.mulf %514, %524 : vector<8x32xf32>
    %526 = arith.addf %523, %525 : vector<8x32xf32>
    %527 = math.tanh %526 : vector<8x32xf32>
    %cst_115 = arith.constant 1.000000e+00 : f32
    %528 = vector.broadcast %cst_115 : f32 to vector<8x32xf32>
    %529 = arith.subf %528, %522 : vector<8x32xf32>
    %530 = arith.mulf %529, %527 : vector<8x32xf32>
    %531 = arith.mulf %522, %497 : vector<8x32xf32>
    %532 = arith.addf %530, %531 : vector<8x32xf32>
    %533 = arith.index_cast %501 : i32 to index
    %c0_116 = arith.constant 0 : index
    %534 = vector.load %arg13[%533, %c0_116] : memref<128x32xf32, #tpu.memory_space<vmem>>, vector<8x32xf32>
    tpu.vector_store %arg13[%533, %c0_116], %532 {strides = array<i32>} : memref<128x32xf32, #tpu.memory_space<vmem>>, vector<8x32xf32>,
    %c15_i32 = arith.constant 15 : i32
    %c8_i32_117 = arith.constant 8 : i32
    %535 = arith.muli %c15_i32, %c8_i32_117 : i32
    %536 = tpu.assume_multiple %535, 8 : i32
    %537 = arith.index_cast %536 : i32 to index
    %c0_118 = arith.constant 0 : index
    %538 = vector.load %arg12[%537, %c0_118] : memref<128x96xf32, #tpu.memory_space<vmem>>, vector<8x96xf32>
    %cst_119 = arith.constant dense<0.000000e+00> : vector<8x96xf32>
    %539 = tpu.matmul %532, %7, %cst_119 {dimension_numbers = #tpu.dot_dimension_numbers<[1], [0], [0], [1], [0, 0, 1, 1], [], []>} : vector<8x32xf32>, vector<32x96xf32>, vector<8x96xf32> -> vector<8x96xf32>
    %540 = vector.broadcast %8 : vector<1x96xf32> to vector<8x96xf32>
    %541 = arith.addf %539, %540 : vector<8x96xf32>
    %542 = vector.extract_strided_slice %538 {offsets = [0, 0], sizes = [8, 32], strides = [1, 1]} : vector<8x96xf32> to vector<8x32xf32>
    %543 = vector.extract_strided_slice %541 {offsets = [0, 0], sizes = [8, 32], strides = [1, 1]} : vector<8x96xf32> to vector<8x32xf32>
    %544 = arith.addf %542, %543 : vector<8x32xf32>
    %545 = arith.negf %544 : vector<8x32xf32>
    %546 = math.exp %545 : vector<8x32xf32>
    %cst_120 = arith.constant 1.000000e+00 : f32
    %547 = vector.broadcast %cst_120 : f32 to vector<8x32xf32>
    %548 = arith.addf %547, %546 : vector<8x32xf32>
    %549 = arith.divf %547, %548 : vector<8x32xf32>
    %550 = vector.extract_strided_slice %538 {offsets = [0, 32], sizes = [8, 32], strides = [1, 1]} : vector<8x96xf32> to vector<8x32xf32>
    %551 = vector.extract_strided_slice %541 {offsets = [0, 32], sizes = [8, 32], strides = [1, 1]} : vector<8x96xf32> to vector<8x32xf32>
    %552 = arith.addf %550, %551 : vector<8x32xf32>
    %553 = arith.negf %552 : vector<8x32xf32>
    %554 = math.exp %553 : vector<8x32xf32>
    %cst_121 = arith.constant 1.000000e+00 : f32
    %555 = vector.broadcast %cst_121 : f32 to vector<8x32xf32>
    %556 = arith.addf %555, %554 : vector<8x32xf32>
    %557 = arith.divf %555, %556 : vector<8x32xf32>
    %558 = vector.extract_strided_slice %538 {offsets = [0, 64], sizes = [8, 32], strides = [1, 1]} : vector<8x96xf32> to vector<8x32xf32>
    %559 = vector.extract_strided_slice %541 {offsets = [0, 64], sizes = [8, 32], strides = [1, 1]} : vector<8x96xf32> to vector<8x32xf32>
    %560 = arith.mulf %549, %559 : vector<8x32xf32>
    %561 = arith.addf %558, %560 : vector<8x32xf32>
    %562 = math.tanh %561 : vector<8x32xf32>
    %cst_122 = arith.constant 1.000000e+00 : f32
    %563 = vector.broadcast %cst_122 : f32 to vector<8x32xf32>
    %564 = arith.subf %563, %557 : vector<8x32xf32>
    %565 = arith.mulf %564, %562 : vector<8x32xf32>
    %566 = arith.mulf %557, %532 : vector<8x32xf32>
    %567 = arith.addf %565, %566 : vector<8x32xf32>
    %568 = arith.index_cast %536 : i32 to index
    %c0_123 = arith.constant 0 : index
    %569 = vector.load %arg13[%568, %c0_123] : memref<128x32xf32, #tpu.memory_space<vmem>>, vector<8x32xf32>
    tpu.vector_store %arg13[%568, %c0_123], %567 {strides = array<i32>} : memref<128x32xf32, #tpu.memory_space<vmem>>, vector<8x32xf32>,
    %c16_i32 = arith.constant 16 : i32
    %c0_124 = arith.constant 0 : index
    %c0_125 = arith.constant 0 : index
    %570 = vector.load %arg13[%c0_124, %c0_125] : memref<128x32xf32, #tpu.memory_space<vmem>>, vector<128x32xf32>
    %c0_126 = arith.constant 0 : index
    %c0_127 = arith.constant 0 : index
    %571 = vector.load %arg5[%c0_126, %c0_127] : memref<32x96xf32, #tpu.memory_space<vmem>>, vector<32x96xf32>
    %cst_128 = arith.constant dense<0.000000e+00> : vector<128x96xf32>
    %572 = tpu.matmul %570, %571, %cst_128 {dimension_numbers = #tpu.dot_dimension_numbers<[1], [0], [0], [1], [0, 0, 1, 1], [], []>} : vector<128x32xf32>, vector<32x96xf32>, vector<128x96xf32> -> vector<128x96xf32>
    %c0_129 = arith.constant 0 : index
    %c0_130 = arith.constant 0 : index
    %573 = vector.load %arg7[%c0_129, %c0_130] : memref<1x96xf32, #tpu.memory_space<vmem>>, vector<1x96xf32>
    %574 = vector.broadcast %573 : vector<1x96xf32> to vector<128x96xf32>
    %575 = arith.addf %572, %574 : vector<128x96xf32>
    %c0_131 = arith.constant 0 : index
    %c0_132 = arith.constant 0 : index
    %576 = vector.load %arg12[%c0_131, %c0_132] : memref<128x96xf32, #tpu.memory_space<vmem>>, vector<128x96xf32>
    tpu.vector_store %arg12[%c0_131, %c0_132], %575 {strides = array<i32>} : memref<128x96xf32, #tpu.memory_space<vmem>>, vector<128x96xf32>,
    %c0_133 = arith.constant 0 : index
    %c0_134 = arith.constant 0 : index
    %577 = vector.load %arg6[%c0_133, %c0_134] : memref<32x96xf32, #tpu.memory_space<vmem>>, vector<32x96xf32>
    %c0_135 = arith.constant 0 : index
    %c0_136 = arith.constant 0 : index
    %578 = vector.load %arg8[%c0_135, %c0_136] : memref<1x96xf32, #tpu.memory_space<vmem>>, vector<1x96xf32>
    %cst_137 = arith.constant 0.000000e+00 : f32
    %579 = vector.broadcast %cst_137 : f32 to vector<8x32xf32>
    %c0_i32_138 = arith.constant 0 : i32
    %c8_i32_139 = arith.constant 8 : i32
    %580 = arith.muli %c0_i32_138, %c8_i32_139 : i32
    %581 = tpu.assume_multiple %580, 8 : i32
    %582 = arith.index_cast %581 : i32 to index
    %c0_140 = arith.constant 0 : index
    %583 = vector.load %arg12[%582, %c0_140] : memref<128x96xf32, #tpu.memory_space<vmem>>, vector<8x96xf32>
    %cst_141 = arith.constant dense<0.000000e+00> : vector<8x96xf32>
    %584 = tpu.matmul %579, %577, %cst_141 {dimension_numbers = #tpu.dot_dimension_numbers<[1], [0], [0], [1], [0, 0, 1, 1], [], []>} : vector<8x32xf32>, vector<32x96xf32>, vector<8x96xf32> -> vector<8x96xf32>
    %585 = vector.broadcast %578 : vector<1x96xf32> to vector<8x96xf32>
    %586 = arith.addf %584, %585 : vector<8x96xf32>
    %587 = vector.extract_strided_slice %583 {offsets = [0, 0], sizes = [8, 32], strides = [1, 1]} : vector<8x96xf32> to vector<8x32xf32>
    %588 = vector.extract_strided_slice %586 {offsets = [0, 0], sizes = [8, 32], strides = [1, 1]} : vector<8x96xf32> to vector<8x32xf32>
    %589 = arith.addf %587, %588 : vector<8x32xf32>
    %590 = arith.negf %589 : vector<8x32xf32>
    %591 = math.exp %590 : vector<8x32xf32>
    %cst_142 = arith.constant 1.000000e+00 : f32
    %592 = vector.broadcast %cst_142 : f32 to vector<8x32xf32>
    %593 = arith.addf %592, %591 : vector<8x32xf32>
    %594 = arith.divf %592, %593 : vector<8x32xf32>
    %595 = vector.extract_strided_slice %583 {offsets = [0, 32], sizes = [8, 32], strides = [1, 1]} : vector<8x96xf32> to vector<8x32xf32>
    %596 = vector.extract_strided_slice %586 {offsets = [0, 32], sizes = [8, 32], strides = [1, 1]} : vector<8x96xf32> to vector<8x32xf32>
    %597 = arith.addf %595, %596 : vector<8x32xf32>
    %598 = arith.negf %597 : vector<8x32xf32>
    %599 = math.exp %598 : vector<8x32xf32>
    %cst_143 = arith.constant 1.000000e+00 : f32
    %600 = vector.broadcast %cst_143 : f32 to vector<8x32xf32>
    %601 = arith.addf %600, %599 : vector<8x32xf32>
    %602 = arith.divf %600, %601 : vector<8x32xf32>
    %603 = vector.extract_strided_slice %583 {offsets = [0, 64], sizes = [8, 32], strides = [1, 1]} : vector<8x96xf32> to vector<8x32xf32>
    %604 = vector.extract_strided_slice %586 {offsets = [0, 64], sizes = [8, 32], strides = [1, 1]} : vector<8x96xf32> to vector<8x32xf32>
    %605 = arith.mulf %594, %604 : vector<8x32xf32>
    %606 = arith.addf %603, %605 : vector<8x32xf32>
    %607 = math.tanh %606 : vector<8x32xf32>
    %cst_144 = arith.constant 1.000000e+00 : f32
    %608 = vector.broadcast %cst_144 : f32 to vector<8x32xf32>
    %609 = arith.subf %608, %602 : vector<8x32xf32>
    %610 = arith.mulf %609, %607 : vector<8x32xf32>
    %611 = arith.mulf %602, %579 : vector<8x32xf32>
    %612 = arith.addf %610, %611 : vector<8x32xf32>
    %c1_i32_145 = arith.constant 1 : i32
    %c8_i32_146 = arith.constant 8 : i32
    %613 = arith.muli %c1_i32_145, %c8_i32_146 : i32
    %614 = tpu.assume_multiple %613, 8 : i32
    %615 = arith.index_cast %614 : i32 to index
    %c0_147 = arith.constant 0 : index
    %616 = vector.load %arg12[%615, %c0_147] : memref<128x96xf32, #tpu.memory_space<vmem>>, vector<8x96xf32>
    %cst_148 = arith.constant dense<0.000000e+00> : vector<8x96xf32>
    %617 = tpu.matmul %612, %577, %cst_148 {dimension_numbers = #tpu.dot_dimension_numbers<[1], [0], [0], [1], [0, 0, 1, 1], [], []>} : vector<8x32xf32>, vector<32x96xf32>, vector<8x96xf32> -> vector<8x96xf32>
    %618 = vector.broadcast %578 : vector<1x96xf32> to vector<8x96xf32>
    %619 = arith.addf %617, %618 : vector<8x96xf32>
    %620 = vector.extract_strided_slice %616 {offsets = [0, 0], sizes = [8, 32], strides = [1, 1]} : vector<8x96xf32> to vector<8x32xf32>
    %621 = vector.extract_strided_slice %619 {offsets = [0, 0], sizes = [8, 32], strides = [1, 1]} : vector<8x96xf32> to vector<8x32xf32>
    %622 = arith.addf %620, %621 : vector<8x32xf32>
    %623 = arith.negf %622 : vector<8x32xf32>
    %624 = math.exp %623 : vector<8x32xf32>
    %cst_149 = arith.constant 1.000000e+00 : f32
    %625 = vector.broadcast %cst_149 : f32 to vector<8x32xf32>
    %626 = arith.addf %625, %624 : vector<8x32xf32>
    %627 = arith.divf %625, %626 : vector<8x32xf32>
    %628 = vector.extract_strided_slice %616 {offsets = [0, 32], sizes = [8, 32], strides = [1, 1]} : vector<8x96xf32> to vector<8x32xf32>
    %629 = vector.extract_strided_slice %619 {offsets = [0, 32], sizes = [8, 32], strides = [1, 1]} : vector<8x96xf32> to vector<8x32xf32>
    %630 = arith.addf %628, %629 : vector<8x32xf32>
    %631 = arith.negf %630 : vector<8x32xf32>
    %632 = math.exp %631 : vector<8x32xf32>
    %cst_150 = arith.constant 1.000000e+00 : f32
    %633 = vector.broadcast %cst_150 : f32 to vector<8x32xf32>
    %634 = arith.addf %633, %632 : vector<8x32xf32>
    %635 = arith.divf %633, %634 : vector<8x32xf32>
    %636 = vector.extract_strided_slice %616 {offsets = [0, 64], sizes = [8, 32], strides = [1, 1]} : vector<8x96xf32> to vector<8x32xf32>
    %637 = vector.extract_strided_slice %619 {offsets = [0, 64], sizes = [8, 32], strides = [1, 1]} : vector<8x96xf32> to vector<8x32xf32>
    %638 = arith.mulf %627, %637 : vector<8x32xf32>
    %639 = arith.addf %636, %638 : vector<8x32xf32>
    %640 = math.tanh %639 : vector<8x32xf32>
    %cst_151 = arith.constant 1.000000e+00 : f32
    %641 = vector.broadcast %cst_151 : f32 to vector<8x32xf32>
    %642 = arith.subf %641, %635 : vector<8x32xf32>
    %643 = arith.mulf %642, %640 : vector<8x32xf32>
    %644 = arith.mulf %635, %612 : vector<8x32xf32>
    %645 = arith.addf %643, %644 : vector<8x32xf32>
    %c2_i32_152 = arith.constant 2 : i32
    %c8_i32_153 = arith.constant 8 : i32
    %646 = arith.muli %c2_i32_152, %c8_i32_153 : i32
    %647 = tpu.assume_multiple %646, 8 : i32
    %648 = arith.index_cast %647 : i32 to index
    %c0_154 = arith.constant 0 : index
    %649 = vector.load %arg12[%648, %c0_154] : memref<128x96xf32, #tpu.memory_space<vmem>>, vector<8x96xf32>
    %cst_155 = arith.constant dense<0.000000e+00> : vector<8x96xf32>
    %650 = tpu.matmul %645, %577, %cst_155 {dimension_numbers = #tpu.dot_dimension_numbers<[1], [0], [0], [1], [0, 0, 1, 1], [], []>} : vector<8x32xf32>, vector<32x96xf32>, vector<8x96xf32> -> vector<8x96xf32>
    %651 = vector.broadcast %578 : vector<1x96xf32> to vector<8x96xf32>
    %652 = arith.addf %650, %651 : vector<8x96xf32>
    %653 = vector.extract_strided_slice %649 {offsets = [0, 0], sizes = [8, 32], strides = [1, 1]} : vector<8x96xf32> to vector<8x32xf32>
    %654 = vector.extract_strided_slice %652 {offsets = [0, 0], sizes = [8, 32], strides = [1, 1]} : vector<8x96xf32> to vector<8x32xf32>
    %655 = arith.addf %653, %654 : vector<8x32xf32>
    %656 = arith.negf %655 : vector<8x32xf32>
    %657 = math.exp %656 : vector<8x32xf32>
    %cst_156 = arith.constant 1.000000e+00 : f32
    %658 = vector.broadcast %cst_156 : f32 to vector<8x32xf32>
    %659 = arith.addf %658, %657 : vector<8x32xf32>
    %660 = arith.divf %658, %659 : vector<8x32xf32>
    %661 = vector.extract_strided_slice %649 {offsets = [0, 32], sizes = [8, 32], strides = [1, 1]} : vector<8x96xf32> to vector<8x32xf32>
    %662 = vector.extract_strided_slice %652 {offsets = [0, 32], sizes = [8, 32], strides = [1, 1]} : vector<8x96xf32> to vector<8x32xf32>
    %663 = arith.addf %661, %662 : vector<8x32xf32>
    %664 = arith.negf %663 : vector<8x32xf32>
    %665 = math.exp %664 : vector<8x32xf32>
    %cst_157 = arith.constant 1.000000e+00 : f32
    %666 = vector.broadcast %cst_157 : f32 to vector<8x32xf32>
    %667 = arith.addf %666, %665 : vector<8x32xf32>
    %668 = arith.divf %666, %667 : vector<8x32xf32>
    %669 = vector.extract_strided_slice %649 {offsets = [0, 64], sizes = [8, 32], strides = [1, 1]} : vector<8x96xf32> to vector<8x32xf32>
    %670 = vector.extract_strided_slice %652 {offsets = [0, 64], sizes = [8, 32], strides = [1, 1]} : vector<8x96xf32> to vector<8x32xf32>
    %671 = arith.mulf %660, %670 : vector<8x32xf32>
    %672 = arith.addf %669, %671 : vector<8x32xf32>
    %673 = math.tanh %672 : vector<8x32xf32>
    %cst_158 = arith.constant 1.000000e+00 : f32
    %674 = vector.broadcast %cst_158 : f32 to vector<8x32xf32>
    %675 = arith.subf %674, %668 : vector<8x32xf32>
    %676 = arith.mulf %675, %673 : vector<8x32xf32>
    %677 = arith.mulf %668, %645 : vector<8x32xf32>
    %678 = arith.addf %676, %677 : vector<8x32xf32>
    %c3_i32_159 = arith.constant 3 : i32
    %c8_i32_160 = arith.constant 8 : i32
    %679 = arith.muli %c3_i32_159, %c8_i32_160 : i32
    %680 = tpu.assume_multiple %679, 8 : i32
    %681 = arith.index_cast %680 : i32 to index
    %c0_161 = arith.constant 0 : index
    %682 = vector.load %arg12[%681, %c0_161] : memref<128x96xf32, #tpu.memory_space<vmem>>, vector<8x96xf32>
    %cst_162 = arith.constant dense<0.000000e+00> : vector<8x96xf32>
    %683 = tpu.matmul %678, %577, %cst_162 {dimension_numbers = #tpu.dot_dimension_numbers<[1], [0], [0], [1], [0, 0, 1, 1], [], []>} : vector<8x32xf32>, vector<32x96xf32>, vector<8x96xf32> -> vector<8x96xf32>
    %684 = vector.broadcast %578 : vector<1x96xf32> to vector<8x96xf32>
    %685 = arith.addf %683, %684 : vector<8x96xf32>
    %686 = vector.extract_strided_slice %682 {offsets = [0, 0], sizes = [8, 32], strides = [1, 1]} : vector<8x96xf32> to vector<8x32xf32>
    %687 = vector.extract_strided_slice %685 {offsets = [0, 0], sizes = [8, 32], strides = [1, 1]} : vector<8x96xf32> to vector<8x32xf32>
    %688 = arith.addf %686, %687 : vector<8x32xf32>
    %689 = arith.negf %688 : vector<8x32xf32>
    %690 = math.exp %689 : vector<8x32xf32>
    %cst_163 = arith.constant 1.000000e+00 : f32
    %691 = vector.broadcast %cst_163 : f32 to vector<8x32xf32>
    %692 = arith.addf %691, %690 : vector<8x32xf32>
    %693 = arith.divf %691, %692 : vector<8x32xf32>
    %694 = vector.extract_strided_slice %682 {offsets = [0, 32], sizes = [8, 32], strides = [1, 1]} : vector<8x96xf32> to vector<8x32xf32>
    %695 = vector.extract_strided_slice %685 {offsets = [0, 32], sizes = [8, 32], strides = [1, 1]} : vector<8x96xf32> to vector<8x32xf32>
    %696 = arith.addf %694, %695 : vector<8x32xf32>
    %697 = arith.negf %696 : vector<8x32xf32>
    %698 = math.exp %697 : vector<8x32xf32>
    %cst_164 = arith.constant 1.000000e+00 : f32
    %699 = vector.broadcast %cst_164 : f32 to vector<8x32xf32>
    %700 = arith.addf %699, %698 : vector<8x32xf32>
    %701 = arith.divf %699, %700 : vector<8x32xf32>
    %702 = vector.extract_strided_slice %682 {offsets = [0, 64], sizes = [8, 32], strides = [1, 1]} : vector<8x96xf32> to vector<8x32xf32>
    %703 = vector.extract_strided_slice %685 {offsets = [0, 64], sizes = [8, 32], strides = [1, 1]} : vector<8x96xf32> to vector<8x32xf32>
    %704 = arith.mulf %693, %703 : vector<8x32xf32>
    %705 = arith.addf %702, %704 : vector<8x32xf32>
    %706 = math.tanh %705 : vector<8x32xf32>
    %cst_165 = arith.constant 1.000000e+00 : f32
    %707 = vector.broadcast %cst_165 : f32 to vector<8x32xf32>
    %708 = arith.subf %707, %701 : vector<8x32xf32>
    %709 = arith.mulf %708, %706 : vector<8x32xf32>
    %710 = arith.mulf %701, %678 : vector<8x32xf32>
    %711 = arith.addf %709, %710 : vector<8x32xf32>
    %c4_i32_166 = arith.constant 4 : i32
    %c8_i32_167 = arith.constant 8 : i32
    %712 = arith.muli %c4_i32_166, %c8_i32_167 : i32
    %713 = tpu.assume_multiple %712, 8 : i32
    %714 = arith.index_cast %713 : i32 to index
    %c0_168 = arith.constant 0 : index
    %715 = vector.load %arg12[%714, %c0_168] : memref<128x96xf32, #tpu.memory_space<vmem>>, vector<8x96xf32>
    %cst_169 = arith.constant dense<0.000000e+00> : vector<8x96xf32>
    %716 = tpu.matmul %711, %577, %cst_169 {dimension_numbers = #tpu.dot_dimension_numbers<[1], [0], [0], [1], [0, 0, 1, 1], [], []>} : vector<8x32xf32>, vector<32x96xf32>, vector<8x96xf32> -> vector<8x96xf32>
    %717 = vector.broadcast %578 : vector<1x96xf32> to vector<8x96xf32>
    %718 = arith.addf %716, %717 : vector<8x96xf32>
    %719 = vector.extract_strided_slice %715 {offsets = [0, 0], sizes = [8, 32], strides = [1, 1]} : vector<8x96xf32> to vector<8x32xf32>
    %720 = vector.extract_strided_slice %718 {offsets = [0, 0], sizes = [8, 32], strides = [1, 1]} : vector<8x96xf32> to vector<8x32xf32>
    %721 = arith.addf %719, %720 : vector<8x32xf32>
    %722 = arith.negf %721 : vector<8x32xf32>
    %723 = math.exp %722 : vector<8x32xf32>
    %cst_170 = arith.constant 1.000000e+00 : f32
    %724 = vector.broadcast %cst_170 : f32 to vector<8x32xf32>
    %725 = arith.addf %724, %723 : vector<8x32xf32>
    %726 = arith.divf %724, %725 : vector<8x32xf32>
    %727 = vector.extract_strided_slice %715 {offsets = [0, 32], sizes = [8, 32], strides = [1, 1]} : vector<8x96xf32> to vector<8x32xf32>
    %728 = vector.extract_strided_slice %718 {offsets = [0, 32], sizes = [8, 32], strides = [1, 1]} : vector<8x96xf32> to vector<8x32xf32>
    %729 = arith.addf %727, %728 : vector<8x32xf32>
    %730 = arith.negf %729 : vector<8x32xf32>
    %731 = math.exp %730 : vector<8x32xf32>
    %cst_171 = arith.constant 1.000000e+00 : f32
    %732 = vector.broadcast %cst_171 : f32 to vector<8x32xf32>
    %733 = arith.addf %732, %731 : vector<8x32xf32>
    %734 = arith.divf %732, %733 : vector<8x32xf32>
    %735 = vector.extract_strided_slice %715 {offsets = [0, 64], sizes = [8, 32], strides = [1, 1]} : vector<8x96xf32> to vector<8x32xf32>
    %736 = vector.extract_strided_slice %718 {offsets = [0, 64], sizes = [8, 32], strides = [1, 1]} : vector<8x96xf32> to vector<8x32xf32>
    %737 = arith.mulf %726, %736 : vector<8x32xf32>
    %738 = arith.addf %735, %737 : vector<8x32xf32>
    %739 = math.tanh %738 : vector<8x32xf32>
    %cst_172 = arith.constant 1.000000e+00 : f32
    %740 = vector.broadcast %cst_172 : f32 to vector<8x32xf32>
    %741 = arith.subf %740, %734 : vector<8x32xf32>
    %742 = arith.mulf %741, %739 : vector<8x32xf32>
    %743 = arith.mulf %734, %711 : vector<8x32xf32>
    %744 = arith.addf %742, %743 : vector<8x32xf32>
    %c5_i32_173 = arith.constant 5 : i32
    %c8_i32_174 = arith.constant 8 : i32
    %745 = arith.muli %c5_i32_173, %c8_i32_174 : i32
    %746 = tpu.assume_multiple %745, 8 : i32
    %747 = arith.index_cast %746 : i32 to index
    %c0_175 = arith.constant 0 : index
    %748 = vector.load %arg12[%747, %c0_175] : memref<128x96xf32, #tpu.memory_space<vmem>>, vector<8x96xf32>
    %cst_176 = arith.constant dense<0.000000e+00> : vector<8x96xf32>
    %749 = tpu.matmul %744, %577, %cst_176 {dimension_numbers = #tpu.dot_dimension_numbers<[1], [0], [0], [1], [0, 0, 1, 1], [], []>} : vector<8x32xf32>, vector<32x96xf32>, vector<8x96xf32> -> vector<8x96xf32>
    %750 = vector.broadcast %578 : vector<1x96xf32> to vector<8x96xf32>
    %751 = arith.addf %749, %750 : vector<8x96xf32>
    %752 = vector.extract_strided_slice %748 {offsets = [0, 0], sizes = [8, 32], strides = [1, 1]} : vector<8x96xf32> to vector<8x32xf32>
    %753 = vector.extract_strided_slice %751 {offsets = [0, 0], sizes = [8, 32], strides = [1, 1]} : vector<8x96xf32> to vector<8x32xf32>
    %754 = arith.addf %752, %753 : vector<8x32xf32>
    %755 = arith.negf %754 : vector<8x32xf32>
    %756 = math.exp %755 : vector<8x32xf32>
    %cst_177 = arith.constant 1.000000e+00 : f32
    %757 = vector.broadcast %cst_177 : f32 to vector<8x32xf32>
    %758 = arith.addf %757, %756 : vector<8x32xf32>
    %759 = arith.divf %757, %758 : vector<8x32xf32>
    %760 = vector.extract_strided_slice %748 {offsets = [0, 32], sizes = [8, 32], strides = [1, 1]} : vector<8x96xf32> to vector<8x32xf32>
    %761 = vector.extract_strided_slice %751 {offsets = [0, 32], sizes = [8, 32], strides = [1, 1]} : vector<8x96xf32> to vector<8x32xf32>
    %762 = arith.addf %760, %761 : vector<8x32xf32>
    %763 = arith.negf %762 : vector<8x32xf32>
    %764 = math.exp %763 : vector<8x32xf32>
    %cst_178 = arith.constant 1.000000e+00 : f32
    %765 = vector.broadcast %cst_178 : f32 to vector<8x32xf32>
    %766 = arith.addf %765, %764 : vector<8x32xf32>
    %767 = arith.divf %765, %766 : vector<8x32xf32>
    %768 = vector.extract_strided_slice %748 {offsets = [0, 64], sizes = [8, 32], strides = [1, 1]} : vector<8x96xf32> to vector<8x32xf32>
    %769 = vector.extract_strided_slice %751 {offsets = [0, 64], sizes = [8, 32], strides = [1, 1]} : vector<8x96xf32> to vector<8x32xf32>
    %770 = arith.mulf %759, %769 : vector<8x32xf32>
    %771 = arith.addf %768, %770 : vector<8x32xf32>
    %772 = math.tanh %771 : vector<8x32xf32>
    %cst_179 = arith.constant 1.000000e+00 : f32
    %773 = vector.broadcast %cst_179 : f32 to vector<8x32xf32>
    %774 = arith.subf %773, %767 : vector<8x32xf32>
    %775 = arith.mulf %774, %772 : vector<8x32xf32>
    %776 = arith.mulf %767, %744 : vector<8x32xf32>
    %777 = arith.addf %775, %776 : vector<8x32xf32>
    %c6_i32_180 = arith.constant 6 : i32
    %c8_i32_181 = arith.constant 8 : i32
    %778 = arith.muli %c6_i32_180, %c8_i32_181 : i32
    %779 = tpu.assume_multiple %778, 8 : i32
    %780 = arith.index_cast %779 : i32 to index
    %c0_182 = arith.constant 0 : index
    %781 = vector.load %arg12[%780, %c0_182] : memref<128x96xf32, #tpu.memory_space<vmem>>, vector<8x96xf32>
    %cst_183 = arith.constant dense<0.000000e+00> : vector<8x96xf32>
    %782 = tpu.matmul %777, %577, %cst_183 {dimension_numbers = #tpu.dot_dimension_numbers<[1], [0], [0], [1], [0, 0, 1, 1], [], []>} : vector<8x32xf32>, vector<32x96xf32>, vector<8x96xf32> -> vector<8x96xf32>
    %783 = vector.broadcast %578 : vector<1x96xf32> to vector<8x96xf32>
    %784 = arith.addf %782, %783 : vector<8x96xf32>
    %785 = vector.extract_strided_slice %781 {offsets = [0, 0], sizes = [8, 32], strides = [1, 1]} : vector<8x96xf32> to vector<8x32xf32>
    %786 = vector.extract_strided_slice %784 {offsets = [0, 0], sizes = [8, 32], strides = [1, 1]} : vector<8x96xf32> to vector<8x32xf32>
    %787 = arith.addf %785, %786 : vector<8x32xf32>
    %788 = arith.negf %787 : vector<8x32xf32>
    %789 = math.exp %788 : vector<8x32xf32>
    %cst_184 = arith.constant 1.000000e+00 : f32
    %790 = vector.broadcast %cst_184 : f32 to vector<8x32xf32>
    %791 = arith.addf %790, %789 : vector<8x32xf32>
    %792 = arith.divf %790, %791 : vector<8x32xf32>
    %793 = vector.extract_strided_slice %781 {offsets = [0, 32], sizes = [8, 32], strides = [1, 1]} : vector<8x96xf32> to vector<8x32xf32>
    %794 = vector.extract_strided_slice %784 {offsets = [0, 32], sizes = [8, 32], strides = [1, 1]} : vector<8x96xf32> to vector<8x32xf32>
    %795 = arith.addf %793, %794 : vector<8x32xf32>
    %796 = arith.negf %795 : vector<8x32xf32>
    %797 = math.exp %796 : vector<8x32xf32>
    %cst_185 = arith.constant 1.000000e+00 : f32
    %798 = vector.broadcast %cst_185 : f32 to vector<8x32xf32>
    %799 = arith.addf %798, %797 : vector<8x32xf32>
    %800 = arith.divf %798, %799 : vector<8x32xf32>
    %801 = vector.extract_strided_slice %781 {offsets = [0, 64], sizes = [8, 32], strides = [1, 1]} : vector<8x96xf32> to vector<8x32xf32>
    %802 = vector.extract_strided_slice %784 {offsets = [0, 64], sizes = [8, 32], strides = [1, 1]} : vector<8x96xf32> to vector<8x32xf32>
    %803 = arith.mulf %792, %802 : vector<8x32xf32>
    %804 = arith.addf %801, %803 : vector<8x32xf32>
    %805 = math.tanh %804 : vector<8x32xf32>
    %cst_186 = arith.constant 1.000000e+00 : f32
    %806 = vector.broadcast %cst_186 : f32 to vector<8x32xf32>
    %807 = arith.subf %806, %800 : vector<8x32xf32>
    %808 = arith.mulf %807, %805 : vector<8x32xf32>
    %809 = arith.mulf %800, %777 : vector<8x32xf32>
    %810 = arith.addf %808, %809 : vector<8x32xf32>
    %c7_i32_187 = arith.constant 7 : i32
    %c8_i32_188 = arith.constant 8 : i32
    %811 = arith.muli %c7_i32_187, %c8_i32_188 : i32
    %812 = tpu.assume_multiple %811, 8 : i32
    %813 = arith.index_cast %812 : i32 to index
    %c0_189 = arith.constant 0 : index
    %814 = vector.load %arg12[%813, %c0_189] : memref<128x96xf32, #tpu.memory_space<vmem>>, vector<8x96xf32>
    %cst_190 = arith.constant dense<0.000000e+00> : vector<8x96xf32>
    %815 = tpu.matmul %810, %577, %cst_190 {dimension_numbers = #tpu.dot_dimension_numbers<[1], [0], [0], [1], [0, 0, 1, 1], [], []>} : vector<8x32xf32>, vector<32x96xf32>, vector<8x96xf32> -> vector<8x96xf32>
    %816 = vector.broadcast %578 : vector<1x96xf32> to vector<8x96xf32>
    %817 = arith.addf %815, %816 : vector<8x96xf32>
    %818 = vector.extract_strided_slice %814 {offsets = [0, 0], sizes = [8, 32], strides = [1, 1]} : vector<8x96xf32> to vector<8x32xf32>
    %819 = vector.extract_strided_slice %817 {offsets = [0, 0], sizes = [8, 32], strides = [1, 1]} : vector<8x96xf32> to vector<8x32xf32>
    %820 = arith.addf %818, %819 : vector<8x32xf32>
    %821 = arith.negf %820 : vector<8x32xf32>
    %822 = math.exp %821 : vector<8x32xf32>
    %cst_191 = arith.constant 1.000000e+00 : f32
    %823 = vector.broadcast %cst_191 : f32 to vector<8x32xf32>
    %824 = arith.addf %823, %822 : vector<8x32xf32>
    %825 = arith.divf %823, %824 : vector<8x32xf32>
    %826 = vector.extract_strided_slice %814 {offsets = [0, 32], sizes = [8, 32], strides = [1, 1]} : vector<8x96xf32> to vector<8x32xf32>
    %827 = vector.extract_strided_slice %817 {offsets = [0, 32], sizes = [8, 32], strides = [1, 1]} : vector<8x96xf32> to vector<8x32xf32>
    %828 = arith.addf %826, %827 : vector<8x32xf32>
    %829 = arith.negf %828 : vector<8x32xf32>
    %830 = math.exp %829 : vector<8x32xf32>
    %cst_192 = arith.constant 1.000000e+00 : f32
    %831 = vector.broadcast %cst_192 : f32 to vector<8x32xf32>
    %832 = arith.addf %831, %830 : vector<8x32xf32>
    %833 = arith.divf %831, %832 : vector<8x32xf32>
    %834 = vector.extract_strided_slice %814 {offsets = [0, 64], sizes = [8, 32], strides = [1, 1]} : vector<8x96xf32> to vector<8x32xf32>
    %835 = vector.extract_strided_slice %817 {offsets = [0, 64], sizes = [8, 32], strides = [1, 1]} : vector<8x96xf32> to vector<8x32xf32>
    %836 = arith.mulf %825, %835 : vector<8x32xf32>
    %837 = arith.addf %834, %836 : vector<8x32xf32>
    %838 = math.tanh %837 : vector<8x32xf32>
    %cst_193 = arith.constant 1.000000e+00 : f32
    %839 = vector.broadcast %cst_193 : f32 to vector<8x32xf32>
    %840 = arith.subf %839, %833 : vector<8x32xf32>
    %841 = arith.mulf %840, %838 : vector<8x32xf32>
    %842 = arith.mulf %833, %810 : vector<8x32xf32>
    %843 = arith.addf %841, %842 : vector<8x32xf32>
    %c8_i32_194 = arith.constant 8 : i32
    %c8_i32_195 = arith.constant 8 : i32
    %844 = arith.muli %c8_i32_194, %c8_i32_195 : i32
    %845 = tpu.assume_multiple %844, 8 : i32
    %846 = arith.index_cast %845 : i32 to index
    %c0_196 = arith.constant 0 : index
    %847 = vector.load %arg12[%846, %c0_196] : memref<128x96xf32, #tpu.memory_space<vmem>>, vector<8x96xf32>
    %cst_197 = arith.constant dense<0.000000e+00> : vector<8x96xf32>
    %848 = tpu.matmul %843, %577, %cst_197 {dimension_numbers = #tpu.dot_dimension_numbers<[1], [0], [0], [1], [0, 0, 1, 1], [], []>} : vector<8x32xf32>, vector<32x96xf32>, vector<8x96xf32> -> vector<8x96xf32>
    %849 = vector.broadcast %578 : vector<1x96xf32> to vector<8x96xf32>
    %850 = arith.addf %848, %849 : vector<8x96xf32>
    %851 = vector.extract_strided_slice %847 {offsets = [0, 0], sizes = [8, 32], strides = [1, 1]} : vector<8x96xf32> to vector<8x32xf32>
    %852 = vector.extract_strided_slice %850 {offsets = [0, 0], sizes = [8, 32], strides = [1, 1]} : vector<8x96xf32> to vector<8x32xf32>
    %853 = arith.addf %851, %852 : vector<8x32xf32>
    %854 = arith.negf %853 : vector<8x32xf32>
    %855 = math.exp %854 : vector<8x32xf32>
    %cst_198 = arith.constant 1.000000e+00 : f32
    %856 = vector.broadcast %cst_198 : f32 to vector<8x32xf32>
    %857 = arith.addf %856, %855 : vector<8x32xf32>
    %858 = arith.divf %856, %857 : vector<8x32xf32>
    %859 = vector.extract_strided_slice %847 {offsets = [0, 32], sizes = [8, 32], strides = [1, 1]} : vector<8x96xf32> to vector<8x32xf32>
    %860 = vector.extract_strided_slice %850 {offsets = [0, 32], sizes = [8, 32], strides = [1, 1]} : vector<8x96xf32> to vector<8x32xf32>
    %861 = arith.addf %859, %860 : vector<8x32xf32>
    %862 = arith.negf %861 : vector<8x32xf32>
    %863 = math.exp %862 : vector<8x32xf32>
    %cst_199 = arith.constant 1.000000e+00 : f32
    %864 = vector.broadcast %cst_199 : f32 to vector<8x32xf32>
    %865 = arith.addf %864, %863 : vector<8x32xf32>
    %866 = arith.divf %864, %865 : vector<8x32xf32>
    %867 = vector.extract_strided_slice %847 {offsets = [0, 64], sizes = [8, 32], strides = [1, 1]} : vector<8x96xf32> to vector<8x32xf32>
    %868 = vector.extract_strided_slice %850 {offsets = [0, 64], sizes = [8, 32], strides = [1, 1]} : vector<8x96xf32> to vector<8x32xf32>
    %869 = arith.mulf %858, %868 : vector<8x32xf32>
    %870 = arith.addf %867, %869 : vector<8x32xf32>
    %871 = math.tanh %870 : vector<8x32xf32>
    %cst_200 = arith.constant 1.000000e+00 : f32
    %872 = vector.broadcast %cst_200 : f32 to vector<8x32xf32>
    %873 = arith.subf %872, %866 : vector<8x32xf32>
    %874 = arith.mulf %873, %871 : vector<8x32xf32>
    %875 = arith.mulf %866, %843 : vector<8x32xf32>
    %876 = arith.addf %874, %875 : vector<8x32xf32>
    %c9_i32_201 = arith.constant 9 : i32
    %c8_i32_202 = arith.constant 8 : i32
    %877 = arith.muli %c9_i32_201, %c8_i32_202 : i32
    %878 = tpu.assume_multiple %877, 8 : i32
    %879 = arith.index_cast %878 : i32 to index
    %c0_203 = arith.constant 0 : index
    %880 = vector.load %arg12[%879, %c0_203] : memref<128x96xf32, #tpu.memory_space<vmem>>, vector<8x96xf32>
    %cst_204 = arith.constant dense<0.000000e+00> : vector<8x96xf32>
    %881 = tpu.matmul %876, %577, %cst_204 {dimension_numbers = #tpu.dot_dimension_numbers<[1], [0], [0], [1], [0, 0, 1, 1], [], []>} : vector<8x32xf32>, vector<32x96xf32>, vector<8x96xf32> -> vector<8x96xf32>
    %882 = vector.broadcast %578 : vector<1x96xf32> to vector<8x96xf32>
    %883 = arith.addf %881, %882 : vector<8x96xf32>
    %884 = vector.extract_strided_slice %880 {offsets = [0, 0], sizes = [8, 32], strides = [1, 1]} : vector<8x96xf32> to vector<8x32xf32>
    %885 = vector.extract_strided_slice %883 {offsets = [0, 0], sizes = [8, 32], strides = [1, 1]} : vector<8x96xf32> to vector<8x32xf32>
    %886 = arith.addf %884, %885 : vector<8x32xf32>
    %887 = arith.negf %886 : vector<8x32xf32>
    %888 = math.exp %887 : vector<8x32xf32>
    %cst_205 = arith.constant 1.000000e+00 : f32
    %889 = vector.broadcast %cst_205 : f32 to vector<8x32xf32>
    %890 = arith.addf %889, %888 : vector<8x32xf32>
    %891 = arith.divf %889, %890 : vector<8x32xf32>
    %892 = vector.extract_strided_slice %880 {offsets = [0, 32], sizes = [8, 32], strides = [1, 1]} : vector<8x96xf32> to vector<8x32xf32>
    %893 = vector.extract_strided_slice %883 {offsets = [0, 32], sizes = [8, 32], strides = [1, 1]} : vector<8x96xf32> to vector<8x32xf32>
    %894 = arith.addf %892, %893 : vector<8x32xf32>
    %895 = arith.negf %894 : vector<8x32xf32>
    %896 = math.exp %895 : vector<8x32xf32>
    %cst_206 = arith.constant 1.000000e+00 : f32
    %897 = vector.broadcast %cst_206 : f32 to vector<8x32xf32>
    %898 = arith.addf %897, %896 : vector<8x32xf32>
    %899 = arith.divf %897, %898 : vector<8x32xf32>
    %900 = vector.extract_strided_slice %880 {offsets = [0, 64], sizes = [8, 32], strides = [1, 1]} : vector<8x96xf32> to vector<8x32xf32>
    %901 = vector.extract_strided_slice %883 {offsets = [0, 64], sizes = [8, 32], strides = [1, 1]} : vector<8x96xf32> to vector<8x32xf32>
    %902 = arith.mulf %891, %901 : vector<8x32xf32>
    %903 = arith.addf %900, %902 : vector<8x32xf32>
    %904 = math.tanh %903 : vector<8x32xf32>
    %cst_207 = arith.constant 1.000000e+00 : f32
    %905 = vector.broadcast %cst_207 : f32 to vector<8x32xf32>
    %906 = arith.subf %905, %899 : vector<8x32xf32>
    %907 = arith.mulf %906, %904 : vector<8x32xf32>
    %908 = arith.mulf %899, %876 : vector<8x32xf32>
    %909 = arith.addf %907, %908 : vector<8x32xf32>
    %c10_i32_208 = arith.constant 10 : i32
    %c8_i32_209 = arith.constant 8 : i32
    %910 = arith.muli %c10_i32_208, %c8_i32_209 : i32
    %911 = tpu.assume_multiple %910, 8 : i32
    %912 = arith.index_cast %911 : i32 to index
    %c0_210 = arith.constant 0 : index
    %913 = vector.load %arg12[%912, %c0_210] : memref<128x96xf32, #tpu.memory_space<vmem>>, vector<8x96xf32>
    %cst_211 = arith.constant dense<0.000000e+00> : vector<8x96xf32>
    %914 = tpu.matmul %909, %577, %cst_211 {dimension_numbers = #tpu.dot_dimension_numbers<[1], [0], [0], [1], [0, 0, 1, 1], [], []>} : vector<8x32xf32>, vector<32x96xf32>, vector<8x96xf32> -> vector<8x96xf32>
    %915 = vector.broadcast %578 : vector<1x96xf32> to vector<8x96xf32>
    %916 = arith.addf %914, %915 : vector<8x96xf32>
    %917 = vector.extract_strided_slice %913 {offsets = [0, 0], sizes = [8, 32], strides = [1, 1]} : vector<8x96xf32> to vector<8x32xf32>
    %918 = vector.extract_strided_slice %916 {offsets = [0, 0], sizes = [8, 32], strides = [1, 1]} : vector<8x96xf32> to vector<8x32xf32>
    %919 = arith.addf %917, %918 : vector<8x32xf32>
    %920 = arith.negf %919 : vector<8x32xf32>
    %921 = math.exp %920 : vector<8x32xf32>
    %cst_212 = arith.constant 1.000000e+00 : f32
    %922 = vector.broadcast %cst_212 : f32 to vector<8x32xf32>
    %923 = arith.addf %922, %921 : vector<8x32xf32>
    %924 = arith.divf %922, %923 : vector<8x32xf32>
    %925 = vector.extract_strided_slice %913 {offsets = [0, 32], sizes = [8, 32], strides = [1, 1]} : vector<8x96xf32> to vector<8x32xf32>
    %926 = vector.extract_strided_slice %916 {offsets = [0, 32], sizes = [8, 32], strides = [1, 1]} : vector<8x96xf32> to vector<8x32xf32>
    %927 = arith.addf %925, %926 : vector<8x32xf32>
    %928 = arith.negf %927 : vector<8x32xf32>
    %929 = math.exp %928 : vector<8x32xf32>
    %cst_213 = arith.constant 1.000000e+00 : f32
    %930 = vector.broadcast %cst_213 : f32 to vector<8x32xf32>
    %931 = arith.addf %930, %929 : vector<8x32xf32>
    %932 = arith.divf %930, %931 : vector<8x32xf32>
    %933 = vector.extract_strided_slice %913 {offsets = [0, 64], sizes = [8, 32], strides = [1, 1]} : vector<8x96xf32> to vector<8x32xf32>
    %934 = vector.extract_strided_slice %916 {offsets = [0, 64], sizes = [8, 32], strides = [1, 1]} : vector<8x96xf32> to vector<8x32xf32>
    %935 = arith.mulf %924, %934 : vector<8x32xf32>
    %936 = arith.addf %933, %935 : vector<8x32xf32>
    %937 = math.tanh %936 : vector<8x32xf32>
    %cst_214 = arith.constant 1.000000e+00 : f32
    %938 = vector.broadcast %cst_214 : f32 to vector<8x32xf32>
    %939 = arith.subf %938, %932 : vector<8x32xf32>
    %940 = arith.mulf %939, %937 : vector<8x32xf32>
    %941 = arith.mulf %932, %909 : vector<8x32xf32>
    %942 = arith.addf %940, %941 : vector<8x32xf32>
    %c11_i32_215 = arith.constant 11 : i32
    %c8_i32_216 = arith.constant 8 : i32
    %943 = arith.muli %c11_i32_215, %c8_i32_216 : i32
    %944 = tpu.assume_multiple %943, 8 : i32
    %945 = arith.index_cast %944 : i32 to index
    %c0_217 = arith.constant 0 : index
    %946 = vector.load %arg12[%945, %c0_217] : memref<128x96xf32, #tpu.memory_space<vmem>>, vector<8x96xf32>
    %cst_218 = arith.constant dense<0.000000e+00> : vector<8x96xf32>
    %947 = tpu.matmul %942, %577, %cst_218 {dimension_numbers = #tpu.dot_dimension_numbers<[1], [0], [0], [1], [0, 0, 1, 1], [], []>} : vector<8x32xf32>, vector<32x96xf32>, vector<8x96xf32> -> vector<8x96xf32>
    %948 = vector.broadcast %578 : vector<1x96xf32> to vector<8x96xf32>
    %949 = arith.addf %947, %948 : vector<8x96xf32>
    %950 = vector.extract_strided_slice %946 {offsets = [0, 0], sizes = [8, 32], strides = [1, 1]} : vector<8x96xf32> to vector<8x32xf32>
    %951 = vector.extract_strided_slice %949 {offsets = [0, 0], sizes = [8, 32], strides = [1, 1]} : vector<8x96xf32> to vector<8x32xf32>
    %952 = arith.addf %950, %951 : vector<8x32xf32>
    %953 = arith.negf %952 : vector<8x32xf32>
    %954 = math.exp %953 : vector<8x32xf32>
    %cst_219 = arith.constant 1.000000e+00 : f32
    %955 = vector.broadcast %cst_219 : f32 to vector<8x32xf32>
    %956 = arith.addf %955, %954 : vector<8x32xf32>
    %957 = arith.divf %955, %956 : vector<8x32xf32>
    %958 = vector.extract_strided_slice %946 {offsets = [0, 32], sizes = [8, 32], strides = [1, 1]} : vector<8x96xf32> to vector<8x32xf32>
    %959 = vector.extract_strided_slice %949 {offsets = [0, 32], sizes = [8, 32], strides = [1, 1]} : vector<8x96xf32> to vector<8x32xf32>
    %960 = arith.addf %958, %959 : vector<8x32xf32>
    %961 = arith.negf %960 : vector<8x32xf32>
    %962 = math.exp %961 : vector<8x32xf32>
    %cst_220 = arith.constant 1.000000e+00 : f32
    %963 = vector.broadcast %cst_220 : f32 to vector<8x32xf32>
    %964 = arith.addf %963, %962 : vector<8x32xf32>
    %965 = arith.divf %963, %964 : vector<8x32xf32>
    %966 = vector.extract_strided_slice %946 {offsets = [0, 64], sizes = [8, 32], strides = [1, 1]} : vector<8x96xf32> to vector<8x32xf32>
    %967 = vector.extract_strided_slice %949 {offsets = [0, 64], sizes = [8, 32], strides = [1, 1]} : vector<8x96xf32> to vector<8x32xf32>
    %968 = arith.mulf %957, %967 : vector<8x32xf32>
    %969 = arith.addf %966, %968 : vector<8x32xf32>
    %970 = math.tanh %969 : vector<8x32xf32>
    %cst_221 = arith.constant 1.000000e+00 : f32
    %971 = vector.broadcast %cst_221 : f32 to vector<8x32xf32>
    %972 = arith.subf %971, %965 : vector<8x32xf32>
    %973 = arith.mulf %972, %970 : vector<8x32xf32>
    %974 = arith.mulf %965, %942 : vector<8x32xf32>
    %975 = arith.addf %973, %974 : vector<8x32xf32>
    %c12_i32_222 = arith.constant 12 : i32
    %c8_i32_223 = arith.constant 8 : i32
    %976 = arith.muli %c12_i32_222, %c8_i32_223 : i32
    %977 = tpu.assume_multiple %976, 8 : i32
    %978 = arith.index_cast %977 : i32 to index
    %c0_224 = arith.constant 0 : index
    %979 = vector.load %arg12[%978, %c0_224] : memref<128x96xf32, #tpu.memory_space<vmem>>, vector<8x96xf32>
    %cst_225 = arith.constant dense<0.000000e+00> : vector<8x96xf32>
    %980 = tpu.matmul %975, %577, %cst_225 {dimension_numbers = #tpu.dot_dimension_numbers<[1], [0], [0], [1], [0, 0, 1, 1], [], []>} : vector<8x32xf32>, vector<32x96xf32>, vector<8x96xf32> -> vector<8x96xf32>
    %981 = vector.broadcast %578 : vector<1x96xf32> to vector<8x96xf32>
    %982 = arith.addf %980, %981 : vector<8x96xf32>
    %983 = vector.extract_strided_slice %979 {offsets = [0, 0], sizes = [8, 32], strides = [1, 1]} : vector<8x96xf32> to vector<8x32xf32>
    %984 = vector.extract_strided_slice %982 {offsets = [0, 0], sizes = [8, 32], strides = [1, 1]} : vector<8x96xf32> to vector<8x32xf32>
    %985 = arith.addf %983, %984 : vector<8x32xf32>
    %986 = arith.negf %985 : vector<8x32xf32>
    %987 = math.exp %986 : vector<8x32xf32>
    %cst_226 = arith.constant 1.000000e+00 : f32
    %988 = vector.broadcast %cst_226 : f32 to vector<8x32xf32>
    %989 = arith.addf %988, %987 : vector<8x32xf32>
    %990 = arith.divf %988, %989 : vector<8x32xf32>
    %991 = vector.extract_strided_slice %979 {offsets = [0, 32], sizes = [8, 32], strides = [1, 1]} : vector<8x96xf32> to vector<8x32xf32>
    %992 = vector.extract_strided_slice %982 {offsets = [0, 32], sizes = [8, 32], strides = [1, 1]} : vector<8x96xf32> to vector<8x32xf32>
    %993 = arith.addf %991, %992 : vector<8x32xf32>
    %994 = arith.negf %993 : vector<8x32xf32>
    %995 = math.exp %994 : vector<8x32xf32>
    %cst_227 = arith.constant 1.000000e+00 : f32
    %996 = vector.broadcast %cst_227 : f32 to vector<8x32xf32>
    %997 = arith.addf %996, %995 : vector<8x32xf32>
    %998 = arith.divf %996, %997 : vector<8x32xf32>
    %999 = vector.extract_strided_slice %979 {offsets = [0, 64], sizes = [8, 32], strides = [1, 1]} : vector<8x96xf32> to vector<8x32xf32>
    %1000 = vector.extract_strided_slice %982 {offsets = [0, 64], sizes = [8, 32], strides = [1, 1]} : vector<8x96xf32> to vector<8x32xf32>
    %1001 = arith.mulf %990, %1000 : vector<8x32xf32>
    %1002 = arith.addf %999, %1001 : vector<8x32xf32>
    %1003 = math.tanh %1002 : vector<8x32xf32>
    %cst_228 = arith.constant 1.000000e+00 : f32
    %1004 = vector.broadcast %cst_228 : f32 to vector<8x32xf32>
    %1005 = arith.subf %1004, %998 : vector<8x32xf32>
    %1006 = arith.mulf %1005, %1003 : vector<8x32xf32>
    %1007 = arith.mulf %998, %975 : vector<8x32xf32>
    %1008 = arith.addf %1006, %1007 : vector<8x32xf32>
    %c13_i32_229 = arith.constant 13 : i32
    %c8_i32_230 = arith.constant 8 : i32
    %1009 = arith.muli %c13_i32_229, %c8_i32_230 : i32
    %1010 = tpu.assume_multiple %1009, 8 : i32
    %1011 = arith.index_cast %1010 : i32 to index
    %c0_231 = arith.constant 0 : index
    %1012 = vector.load %arg12[%1011, %c0_231] : memref<128x96xf32, #tpu.memory_space<vmem>>, vector<8x96xf32>
    %cst_232 = arith.constant dense<0.000000e+00> : vector<8x96xf32>
    %1013 = tpu.matmul %1008, %577, %cst_232 {dimension_numbers = #tpu.dot_dimension_numbers<[1], [0], [0], [1], [0, 0, 1, 1], [], []>} : vector<8x32xf32>, vector<32x96xf32>, vector<8x96xf32> -> vector<8x96xf32>
    %1014 = vector.broadcast %578 : vector<1x96xf32> to vector<8x96xf32>
    %1015 = arith.addf %1013, %1014 : vector<8x96xf32>
    %1016 = vector.extract_strided_slice %1012 {offsets = [0, 0], sizes = [8, 32], strides = [1, 1]} : vector<8x96xf32> to vector<8x32xf32>
    %1017 = vector.extract_strided_slice %1015 {offsets = [0, 0], sizes = [8, 32], strides = [1, 1]} : vector<8x96xf32> to vector<8x32xf32>
    %1018 = arith.addf %1016, %1017 : vector<8x32xf32>
    %1019 = arith.negf %1018 : vector<8x32xf32>
    %1020 = math.exp %1019 : vector<8x32xf32>
    %cst_233 = arith.constant 1.000000e+00 : f32
    %1021 = vector.broadcast %cst_233 : f32 to vector<8x32xf32>
    %1022 = arith.addf %1021, %1020 : vector<8x32xf32>
    %1023 = arith.divf %1021, %1022 : vector<8x32xf32>
    %1024 = vector.extract_strided_slice %1012 {offsets = [0, 32], sizes = [8, 32], strides = [1, 1]} : vector<8x96xf32> to vector<8x32xf32>
    %1025 = vector.extract_strided_slice %1015 {offsets = [0, 32], sizes = [8, 32], strides = [1, 1]} : vector<8x96xf32> to vector<8x32xf32>
    %1026 = arith.addf %1024, %1025 : vector<8x32xf32>
    %1027 = arith.negf %1026 : vector<8x32xf32>
    %1028 = math.exp %1027 : vector<8x32xf32>
    %cst_234 = arith.constant 1.000000e+00 : f32
    %1029 = vector.broadcast %cst_234 : f32 to vector<8x32xf32>
    %1030 = arith.addf %1029, %1028 : vector<8x32xf32>
    %1031 = arith.divf %1029, %1030 : vector<8x32xf32>
    %1032 = vector.extract_strided_slice %1012 {offsets = [0, 64], sizes = [8, 32], strides = [1, 1]} : vector<8x96xf32> to vector<8x32xf32>
    %1033 = vector.extract_strided_slice %1015 {offsets = [0, 64], sizes = [8, 32], strides = [1, 1]} : vector<8x96xf32> to vector<8x32xf32>
    %1034 = arith.mulf %1023, %1033 : vector<8x32xf32>
    %1035 = arith.addf %1032, %1034 : vector<8x32xf32>
    %1036 = math.tanh %1035 : vector<8x32xf32>
    %cst_235 = arith.constant 1.000000e+00 : f32
    %1037 = vector.broadcast %cst_235 : f32 to vector<8x32xf32>
    %1038 = arith.subf %1037, %1031 : vector<8x32xf32>
    %1039 = arith.mulf %1038, %1036 : vector<8x32xf32>
    %1040 = arith.mulf %1031, %1008 : vector<8x32xf32>
    %1041 = arith.addf %1039, %1040 : vector<8x32xf32>
    %c14_i32_236 = arith.constant 14 : i32
    %c8_i32_237 = arith.constant 8 : i32
    %1042 = arith.muli %c14_i32_236, %c8_i32_237 : i32
    %1043 = tpu.assume_multiple %1042, 8 : i32
    %1044 = arith.index_cast %1043 : i32 to index
    %c0_238 = arith.constant 0 : index
    %1045 = vector.load %arg12[%1044, %c0_238] : memref<128x96xf32, #tpu.memory_space<vmem>>, vector<8x96xf32>
    %cst_239 = arith.constant dense<0.000000e+00> : vector<8x96xf32>
    %1046 = tpu.matmul %1041, %577, %cst_239 {dimension_numbers = #tpu.dot_dimension_numbers<[1], [0], [0], [1], [0, 0, 1, 1], [], []>} : vector<8x32xf32>, vector<32x96xf32>, vector<8x96xf32> -> vector<8x96xf32>
    %1047 = vector.broadcast %578 : vector<1x96xf32> to vector<8x96xf32>
    %1048 = arith.addf %1046, %1047 : vector<8x96xf32>
    %1049 = vector.extract_strided_slice %1045 {offsets = [0, 0], sizes = [8, 32], strides = [1, 1]} : vector<8x96xf32> to vector<8x32xf32>
    %1050 = vector.extract_strided_slice %1048 {offsets = [0, 0], sizes = [8, 32], strides = [1, 1]} : vector<8x96xf32> to vector<8x32xf32>
    %1051 = arith.addf %1049, %1050 : vector<8x32xf32>
    %1052 = arith.negf %1051 : vector<8x32xf32>
    %1053 = math.exp %1052 : vector<8x32xf32>
    %cst_240 = arith.constant 1.000000e+00 : f32
    %1054 = vector.broadcast %cst_240 : f32 to vector<8x32xf32>
    %1055 = arith.addf %1054, %1053 : vector<8x32xf32>
    %1056 = arith.divf %1054, %1055 : vector<8x32xf32>
    %1057 = vector.extract_strided_slice %1045 {offsets = [0, 32], sizes = [8, 32], strides = [1, 1]} : vector<8x96xf32> to vector<8x32xf32>
    %1058 = vector.extract_strided_slice %1048 {offsets = [0, 32], sizes = [8, 32], strides = [1, 1]} : vector<8x96xf32> to vector<8x32xf32>
    %1059 = arith.addf %1057, %1058 : vector<8x32xf32>
    %1060 = arith.negf %1059 : vector<8x32xf32>
    %1061 = math.exp %1060 : vector<8x32xf32>
    %cst_241 = arith.constant 1.000000e+00 : f32
    %1062 = vector.broadcast %cst_241 : f32 to vector<8x32xf32>
    %1063 = arith.addf %1062, %1061 : vector<8x32xf32>
    %1064 = arith.divf %1062, %1063 : vector<8x32xf32>
    %1065 = vector.extract_strided_slice %1045 {offsets = [0, 64], sizes = [8, 32], strides = [1, 1]} : vector<8x96xf32> to vector<8x32xf32>
    %1066 = vector.extract_strided_slice %1048 {offsets = [0, 64], sizes = [8, 32], strides = [1, 1]} : vector<8x96xf32> to vector<8x32xf32>
    %1067 = arith.mulf %1056, %1066 : vector<8x32xf32>
    %1068 = arith.addf %1065, %1067 : vector<8x32xf32>
    %1069 = math.tanh %1068 : vector<8x32xf32>
    %cst_242 = arith.constant 1.000000e+00 : f32
    %1070 = vector.broadcast %cst_242 : f32 to vector<8x32xf32>
    %1071 = arith.subf %1070, %1064 : vector<8x32xf32>
    %1072 = arith.mulf %1071, %1069 : vector<8x32xf32>
    %1073 = arith.mulf %1064, %1041 : vector<8x32xf32>
    %1074 = arith.addf %1072, %1073 : vector<8x32xf32>
    %c15_i32_243 = arith.constant 15 : i32
    %c8_i32_244 = arith.constant 8 : i32
    %1075 = arith.muli %c15_i32_243, %c8_i32_244 : i32
    %1076 = tpu.assume_multiple %1075, 8 : i32
    %1077 = arith.index_cast %1076 : i32 to index
    %c0_245 = arith.constant 0 : index
    %1078 = vector.load %arg12[%1077, %c0_245] : memref<128x96xf32, #tpu.memory_space<vmem>>, vector<8x96xf32>
    %cst_246 = arith.constant dense<0.000000e+00> : vector<8x96xf32>
    %1079 = tpu.matmul %1074, %577, %cst_246 {dimension_numbers = #tpu.dot_dimension_numbers<[1], [0], [0], [1], [0, 0, 1, 1], [], []>} : vector<8x32xf32>, vector<32x96xf32>, vector<8x96xf32> -> vector<8x96xf32>
    %1080 = vector.broadcast %578 : vector<1x96xf32> to vector<8x96xf32>
    %1081 = arith.addf %1079, %1080 : vector<8x96xf32>
    %1082 = vector.extract_strided_slice %1078 {offsets = [0, 0], sizes = [8, 32], strides = [1, 1]} : vector<8x96xf32> to vector<8x32xf32>
    %1083 = vector.extract_strided_slice %1081 {offsets = [0, 0], sizes = [8, 32], strides = [1, 1]} : vector<8x96xf32> to vector<8x32xf32>
    %1084 = arith.addf %1082, %1083 : vector<8x32xf32>
    %1085 = arith.negf %1084 : vector<8x32xf32>
    %1086 = math.exp %1085 : vector<8x32xf32>
    %cst_247 = arith.constant 1.000000e+00 : f32
    %1087 = vector.broadcast %cst_247 : f32 to vector<8x32xf32>
    %1088 = arith.addf %1087, %1086 : vector<8x32xf32>
    %1089 = arith.divf %1087, %1088 : vector<8x32xf32>
    %1090 = vector.extract_strided_slice %1078 {offsets = [0, 32], sizes = [8, 32], strides = [1, 1]} : vector<8x96xf32> to vector<8x32xf32>
    %1091 = vector.extract_strided_slice %1081 {offsets = [0, 32], sizes = [8, 32], strides = [1, 1]} : vector<8x96xf32> to vector<8x32xf32>
    %1092 = arith.addf %1090, %1091 : vector<8x32xf32>
    %1093 = arith.negf %1092 : vector<8x32xf32>
    %1094 = math.exp %1093 : vector<8x32xf32>
    %cst_248 = arith.constant 1.000000e+00 : f32
    %1095 = vector.broadcast %cst_248 : f32 to vector<8x32xf32>
    %1096 = arith.addf %1095, %1094 : vector<8x32xf32>
    %1097 = arith.divf %1095, %1096 : vector<8x32xf32>
    %1098 = vector.extract_strided_slice %1078 {offsets = [0, 64], sizes = [8, 32], strides = [1, 1]} : vector<8x96xf32> to vector<8x32xf32>
    %1099 = vector.extract_strided_slice %1081 {offsets = [0, 64], sizes = [8, 32], strides = [1, 1]} : vector<8x96xf32> to vector<8x32xf32>
    %1100 = arith.mulf %1089, %1099 : vector<8x32xf32>
    %1101 = arith.addf %1098, %1100 : vector<8x32xf32>
    %1102 = math.tanh %1101 : vector<8x32xf32>
    %cst_249 = arith.constant 1.000000e+00 : f32
    %1103 = vector.broadcast %cst_249 : f32 to vector<8x32xf32>
    %1104 = arith.subf %1103, %1097 : vector<8x32xf32>
    %1105 = arith.mulf %1104, %1102 : vector<8x32xf32>
    %1106 = arith.mulf %1097, %1074 : vector<8x32xf32>
    %1107 = arith.addf %1105, %1106 : vector<8x32xf32>
    %c16_i32_250 = arith.constant 16 : i32
    %c0_251 = arith.constant 0 : index
    %c0_252 = arith.constant 0 : index
    %1108 = vector.load %arg9[%c0_251, %c0_252] : memref<32x4xf32, #tpu.memory_space<vmem>>, vector<32x4xf32>
    %cst_253 = arith.constant dense<0.000000e+00> : vector<8x4xf32>
    %1109 = tpu.matmul %1107, %1108, %cst_253 {dimension_numbers = #tpu.dot_dimension_numbers<[1], [0], [0], [1], [0, 0, 1, 1], [], []>} : vector<8x32xf32>, vector<32x4xf32>, vector<8x4xf32> -> vector<8x4xf32>
    %c0_254 = arith.constant 0 : index
    %c0_255 = arith.constant 0 : index
    %1110 = vector.load %arg10[%c0_254, %c0_255] : memref<1x4xf32, #tpu.memory_space<vmem>>, vector<1x4xf32>
    %1111 = vector.broadcast %1110 : vector<1x4xf32> to vector<8x4xf32>
    %1112 = arith.addf %1109, %1111 : vector<8x4xf32>
    %c0_256 = arith.constant 0 : index
    %c0_257 = arith.constant 0 : index
    %1113 = vector.load %arg11[%c0_256, %c0_257] : memref<8x4xf32, #tpu.memory_space<vmem>>, vector<8x4xf32>
    tpu.vector_store %arg11[%c0_256, %c0_257], %1112 {strides = array<i32>} : memref<8x4xf32, #tpu.memory_space<vmem>>, vector<8x4xf32>,
    return
  }
}

</mosaic_0001>

<llo_original>
// kernel: gru_forward.1
$region0: #{gru_forward.1}
  #allocation0 [shape = 'u32[]', space=smem, size = 0x4, offset = 0x4, fixed_abs, tag = 'smem constant byte address 0x4 - core index']
  #allocation1 [shape = 'u32[144,128]{1,0:T(1,128)}', space=vmem, size = 0x12000, scoped, tag = 'internal scratch']
  #allocation2 [shape = 'f32[128,96]{1,0:T(8,128)}', space=vmem, size = 0x10000, scoped, tag = 'scratch operand']
  #allocation3 [shape = 'f32[128,32]{1,0:T(8,128)}', space=vmem, size = 0x10000, scoped, tag = 'scratch operand']
  %s0 = inlined_call_operand.vmem [shape: f32[128,8], index: 0, kind: input, shape index: {}]
  %s1 = inlined_call_operand.vmem [shape: f32[8,96], index: 1, kind: input, shape index: {}]
  %s2 = inlined_call_operand.vmem [shape: f32[32,96], index: 2, kind: input, shape index: {}]
  %s3 = inlined_call_operand.vmem [shape: f32[1,96], index: 3, kind: input, shape index: {}]
  %s4 = inlined_call_operand.vmem [shape: f32[1,96], index: 4, kind: input, shape index: {}]
  %s5 = inlined_call_operand.vmem [shape: f32[32,96], index: 5, kind: input, shape index: {}]
  %s6 = inlined_call_operand.vmem [shape: f32[32,96], index: 6, kind: input, shape index: {}]
  %s7 = inlined_call_operand.vmem [shape: f32[1,96], index: 7, kind: input, shape index: {}]
  %s8 = inlined_call_operand.vmem [shape: f32[1,96], index: 8, kind: input, shape index: {}]
  %s9 = inlined_call_operand.vmem [shape: f32[32,4], index: 9, kind: input, shape index: {}]
  %s10 = inlined_call_operand.vmem [shape: f32[1,4], index: 10, kind: input, shape index: {}]
  %s11 = inlined_call_operand.vmem [shape: f32[8,4], index: 11, kind: output, shape index: {}]
  %s12 = sld [smem:[#allocation0]]
  $region54: #{gru_forward.1} parent=0
    _
  %s14 = ssub.s32 1, %s12
  %s15 = scalar_select 0, %s14, %s12
  // Predicated region
  $region2: #{gru_forward.1} parent=0 // pred_check
    _
  $region3: #{gru_forward.1} parent=0 // pred_check_branch
    %17 = sbr.rel (0) target = $region5
  $region4: #{gru_forward.1} parent=0 // pred_region
    _
  $region5: #{gru_forward.1} parent=0 // pred_fallthru
    _
  // Predicated region
  $region6: #{gru_forward.1} parent=0 // pred_check
    _
  $region7: #{gru_forward.1} parent=0 // pred_check_branch
    %19 = sbr.rel (0) target = $region9
  $region8: #{gru_forward.1} parent=0 // pred_region
    _
  $region9: #{gru_forward.1} parent=0 // pred_fallthru
    _
  // Predicated region
  $region10: #{gru_forward.1} parent=0 // pred_check
    _
  $region11: #{gru_forward.1} parent=0 // pred_check_branch
    %21 = sbr.rel (0) target = $region13
  $region12: #{gru_forward.1} parent=0 // pred_region
    _
  $region13: #{gru_forward.1} parent=0 // pred_fallthru
    _
  // Predicated region
  $region14: #{gru_forward.1} parent=0 // pred_check
    _
  $region15: #{gru_forward.1} parent=0 // pred_check_branch
    %23 = sbr.rel (0) target = $region17
  $region16: #{gru_forward.1} parent=0 // pred_region
    _
  $region17: #{gru_forward.1} parent=0 // pred_fallthru
    _
  // Predicated region
  $region18: #{gru_forward.1} parent=0 // pred_check
    _
  $region19: #{gru_forward.1} parent=0 // pred_check_branch
    %25 = sbr.rel (0) target = $region21
  $region20: #{gru_forward.1} parent=0 // pred_region
    _
  $region21: #{gru_forward.1} parent=0 // pred_fallthru
    _
  // Predicated region
  $region22: #{gru_forward.1} parent=0 // pred_check
    _
  $region23: #{gru_forward.1} parent=0 // pred_check_branch
    %27 = sbr.rel (0) target = $region25
  $region24: #{gru_forward.1} parent=0 // pred_region
    _
  $region25: #{gru_forward.1} parent=0 // pred_fallthru
    _
  // Predicated region
  $region26: #{gru_forward.1} parent=0 // pred_check
    _
  $region27: #{gru_forward.1} parent=0 // pred_check_branch
    %29 = sbr.rel (0) target = $region29
  $region28: #{gru_forward.1} parent=0 // pred_region
    _
  $region29: #{gru_forward.1} parent=0 // pred_fallthru
    _
  // Predicated region
  $region30: #{gru_forward.1} parent=0 // pred_check
    _
  $region31: #{gru_forward.1} parent=0 // pred_check_branch
    %31 = sbr.rel (0) target = $region33
  $region32: #{gru_forward.1} parent=0 // pred_region
    _
  $region33: #{gru_forward.1} parent=0 // pred_fallthru
    _
  // Predicated region
  $region34: #{gru_forward.1} parent=0 // pred_check
    _
  $region35: #{gru_forward.1} parent=0 // pred_check_branch
    %33 = sbr.rel (0) target = $region37
  $region36: #{gru_forward.1} parent=0 // pred_region
    _
  $region37: #{gru_forward.1} parent=0 // pred_fallthru
    _
  // Predicated region
  $region38: #{gru_forward.1} parent=0 // pred_check
    _
  $region39: #{gru_forward.1} parent=0 // pred_check_branch
    %35 = sbr.rel (0) target = $region41
  $region40: #{gru_forward.1} parent=0 // pred_region
    _
  $region41: #{gru_forward.1} parent=0 // pred_fallthru
    _
  // Predicated region
  $region42: #{gru_forward.1} parent=0 // pred_check
    _
  $region43: #{gru_forward.1} parent=0 // pred_check_branch
    %37 = sbr.rel (0) target = $region45
  $region44: #{gru_forward.1} parent=0 // pred_region
    _
  $region45: #{gru_forward.1} parent=0 // pred_fallthru
    _
  %v38 = vld [vmem:[%s0] sm:$0xff]
  %v39 = vld [vmem:[%s0 + $0x8] sm:$0xff]
  %v40 = vld [vmem:[%s0 + $0x10] sm:$0xff]
  %v41 = vld [vmem:[%s0 + $0x18] sm:$0xff]
  %v42 = vld [vmem:[%s0 + $0x20] sm:$0xff]
  %v43 = vld [vmem:[%s0 + $0x28] sm:$0xff]
  %v44 = vld [vmem:[%s0 + $0x30] sm:$0xff]
  %v45 = vld [vmem:[%s0 + $0x38] sm:$0xff]
  %v46 = vld [vmem:[%s0 + $0x40] sm:$0xff]
  %v47 = vld [vmem:[%s0 + $0x48] sm:$0xff]
  %v48 = vld [vmem:[%s0 + $0x50] sm:$0xff]
  %v49 = vld [vmem:[%s0 + $0x58] sm:$0xff]
  %v50 = vld [vmem:[%s0 + $0x60] sm:$0xff]
  %v51 = vld [vmem:[%s0 + $0x68] sm:$0xff]
  %v52 = vld [vmem:[%s0 + $0x70] sm:$0xff]
  %v53 = vld [vmem:[%s0 + $0x78] sm:$0xff]
  %v54 = vld [vmem:[%s1] sm:$0xff]
  %v55 = vld [vmem:[%s3] sm:$0x1]
  %v57 = vlaneseq
  %v58 = vshrl.u32 %v57, 7
  %v59 = vsub.s32 0, %v58
  %v60 = vrot.slane %v55, %v59
  %vm62 = vcmask 64512
  %v64 = vsel %vm62, %v38, 0
  %v67 = vsel %vm62, %v39, 0
  %v70 = vsel %vm62, %v40, 0
  %v73 = vsel %vm62, %v41, 0
  %v76 = vsel %vm62, %v42, 0
  %v79 = vsel %vm62, %v43, 0
  %v82 = vsel %vm62, %v44, 0
  %v85 = vsel %vm62, %v45, 0
  %v88 = vsel %vm62, %v46, 0
  %v91 = vsel %vm62, %v47, 0
  %v94 = vsel %vm62, %v48, 0
  %v97 = vsel %vm62, %v49, 0
  %v100 = vsel %vm62, %v50, 0
  %v103 = vsel %vm62, %v51, 0
  %v106 = vsel %vm62, %v52, 0
  %v109 = vsel %vm62, %v53, 0
  %111 = vmatprep.subr.mxu0 0.0
  %112 = vmatpush1.msra.mxu0 %v54
  %113 = vmatprep.subr.mxu0 0.0
  %114 = vmatpush1.msra.mxu0 0.0
  %115 = vmatprep.subr.mxu0 0.0
  %116 = vmatpush1.msra.mxu0 0.0
  %117 = vmatprep.subr.mxu0 0.0
  %118 = vmatpush1.msra.mxu0 0.0
  %119 = vmatprep.subr.mxu0 0.0
  %120 = vmatpush1.msra.mxu0 0.0
  %121 = vmatprep.subr.mxu0 0.0
  %122 = vmatpush1.msra.mxu0 0.0
  %123 = vmatprep.subr.mxu0 0.0
  %124 = vmatpush1.msra.mxu0 0.0
  %125 = vmatprep.subr.mxu0 0.0
  %126 = vmatpush1.msra.mxu0 0.0
  %127 = vmatprep.subr.mxu0 0.0
  %128 = vmatpush1.msra.mxu0 0.0
  %129 = vmatprep.subr.mxu0 0.0
  %130 = vmatpush1.msra.mxu0 0.0
  %131 = vmatprep.subr.mxu0 0.0
  %132 = vmatpush1.msra.mxu0 0.0
  %133 = vmatprep.subr.mxu0 0.0
  %134 = vmatpush1.msra.mxu0 0.0
  %135 = vmatprep.subr.mxu0 0.0
  %136 = vmatpush1.msra.mxu0 0.0
  %137 = vmatprep.subr.mxu0 0.0
  %138 = vmatpush1.msra.mxu0 0.0
  %139 = vmatprep.subr.mxu0 0.0
  %140 = vmatpush1.msra.mxu0 0.0
  %141 = vmatprep.subr.mxu0 0.0
  %142 = vmatpush1.msra.mxu0 0.0
  %143 = vmatprep.subr.mxu0 0.0
  %144 = vmatpush1.msra.mxu0 0.0
  %145 = vmatprep.subr.mxu0 0.0
  %146 = vmatpush1.msra.mxu0 0.0
  %147 = vmatprep.subr.mxu0 0.0
  %148 = vmatpush1.msra.mxu0 0.0
  %149 = vmatprep.subr.mxu0 0.0
  %150 = vmatpush1.msra.mxu0 0.0
  %151 = vmatprep.subr.mxu0 0.0
  %152 = vmatpush1.msra.mxu0 0.0
  %153 = vmatprep.subr.mxu0 0.0
  %154 = vmatpush1.msra.mxu0 0.0
  %155 = vmatprep.subr.mxu0 0.0
  %156 = vmatpush1.msra.mxu0 0.0
  %157 = vmatprep.subr.mxu0 0.0
  %158 = vmatpush1.msra.mxu0 0.0
  %159 = vmatprep.subr.mxu0 0.0
  %160 = vmatpush1.msra.mxu0 0.0
  %161 = vmatprep.subr.mxu0 0.0
  %162 = vmatpush1.msra.mxu0 0.0
  %163 = vmatprep.subr.mxu0 0.0
  %164 = vmatpush1.msra.mxu0 0.0
  %165 = vmatprep.subr.mxu0 0.0
  %166 = vmatpush1.msra.mxu0 0.0
  %167 = vmatprep.subr.mxu0 0.0
  %168 = vmatpush1.msra.mxu0 0.0
  %169 = vmatprep.subr.mxu0 0.0
  %170 = vmatpush1.msra.mxu0 0.0
  %171 = vmatprep.subr.mxu0 0.0
  %172 = vmatpush1.msra.mxu0 0.0
  %173 = vmatprep.subr.mxu0 0.0
  %174 = vmatpush1.msra.mxu0 0.0
  %175 = vmatprep.mubr.f32.mxu0 0.0
  %176 = vmatmul.mubr.f32.gmra.mrb[0].mxu0 %v64
  %v177 = vpop.f32.mrb[0].mxu0
  %v178 = vadd.f32 %v60, %v177
  %v179 = vpop.f32.mrb[0].mxu0
  %180 = vmatprep.mubr.f32.mxu0 0.0
  %181 = vmatmul.mubr.f32.gmra.mrb[0].mxu0 %v67
  %v182 = vpop.f32.mrb[0].mxu0
  %v183 = vadd.f32 %v60, %v182
  %v184 = vpop.f32.mrb[0].mxu0
  %185 = vmatprep.mubr.f32.mxu0 0.0
  %186 = vmatmul.mubr.f32.gmra.mrb[0].mxu0 %v70
  %v187 = vpop.f32.mrb[0].mxu0
  %v188 = vadd.f32 %v60, %v187
  %v189 = vpop.f32.mrb[0].mxu0
  %190 = vmatprep.mubr.f32.mxu0 0.0
  %191 = vmatmul.mubr.f32.gmra.mrb[0].mxu0 %v73
  %v192 = vpop.f32.mrb[0].mxu0
  %v193 = vadd.f32 %v60, %v192
  %v194 = vpop.f32.mrb[0].mxu0
  %195 = vmatprep.mubr.f32.mxu0 0.0
  %196 = vmatmul.mubr.f32.gmra.mrb[0].mxu0 %v76
  %v197 = vpop.f32.mrb[0].mxu0
  %v198 = vadd.f32 %v60, %v197
  %v199 = vpop.f32.mrb[0].mxu0
  %200 = vmatprep.mubr.f32.mxu0 0.0
  %201 = vmatmul.mubr.f32.gmra.mrb[0].mxu0 %v79
  %v202 = vpop.f32.mrb[0].mxu0
  %v203 = vadd.f32 %v60, %v202
  %v204 = vpop.f32.mrb[0].mxu0
  %205 = vmatprep.mubr.f32.mxu0 0.0
  %206 = vmatmul.mubr.f32.gmra.mrb[0].mxu0 %v82
  %v207 = vpop.f32.mrb[0].mxu0
  %v208 = vadd.f32 %v60, %v207
  %v209 = vpop.f32.mrb[0].mxu0
  %210 = vmatprep.mubr.f32.mxu0 0.0
  %211 = vmatmul.mubr.f32.gmra.mrb[0].mxu0 %v85
  %v212 = vpop.f32.mrb[0].mxu0
  %v213 = vadd.f32 %v60, %v212
  %v214 = vpop.f32.mrb[0].mxu0
  %215 = vmatprep.mubr.f32.mxu0 0.0
  %216 = vmatmul.mubr.f32.gmra.mrb[0].mxu0 %v88
  %v217 = vpop.f32.mrb[0].mxu0
  %v218 = vadd.f32 %v60, %v217
  %v219 = vpop.f32.mrb[0].mxu0
  %220 = vmatprep.mubr.f32.mxu0 0.0
  %221 = vmatmul.mubr.f32.gmra.mrb[0].mxu0 %v91
  %v222 = vpop.f32.mrb[0].mxu0
  %v223 = vadd.f32 %v60, %v222
  %v224 = vpop.f32.mrb[0].mxu0
  %225 = vmatprep.mubr.f32.mxu0 0.0
  %226 = vmatmul.mubr.f32.gmra.mrb[0].mxu0 %v94
  %v227 = vpop.f32.mrb[0].mxu0
  %v228 = vadd.f32 %v60, %v227
  %v229 = vpop.f32.mrb[0].mxu0
  %230 = vmatprep.mubr.f32.mxu0 0.0
  %231 = vmatmul.mubr.f32.gmra.mrb[0].mxu0 %v97
  %v232 = vpop.f32.mrb[0].mxu0
  %v233 = vadd.f32 %v60, %v232
  %v234 = vpop.f32.mrb[0].mxu0
  %235 = vmatprep.mubr.f32.mxu0 0.0
  %236 = vmatmul.mubr.f32.gmra.mrb[0].mxu0 %v100
  %v237 = vpop.f32.mrb[0].mxu0
  %v238 = vadd.f32 %v60, %v237
  %v239 = vpop.f32.mrb[0].mxu0
  %240 = vmatprep.mubr.f32.mxu0 0.0
  %241 = vmatmul.mubr.f32.gmra.mrb[0].mxu0 %v103
  %v242 = vpop.f32.mrb[0].mxu0
  %v243 = vadd.f32 %v60, %v242
  %v244 = vpop.f32.mrb[0].mxu0
  %245 = vmatprep.mubr.f32.mxu0 0.0
  %246 = vmatmul.mubr.f32.gmra.mrb[0].mxu0 %v106
  %v247 = vpop.f32.mrb[0].mxu0
  %v248 = vadd.f32 %v60, %v247
  %v249 = vpop.f32.mrb[0].mxu0
  %250 = vmatprep.mubr.f32.mxu0 0.0
  %251 = vmatmul.mubr.f32.gmra.mrb[0].mxu0 %v109
  %v252 = vpop.f32.mrb[0].mxu0
  %v253 = vadd.f32 %v60, %v252
  %v254 = vpop.f32.mrb[0].mxu0
  %255 = vdwg.mxu0
  %vm256 = vcmask 785408
  %257 = vst.msk [vmem:[#allocation2] sm:$0xff] %vm256, %v178
  %258 = vst.msk [vmem:[#allocation2 + $0x8] sm:$0xff] %vm256, %v183
  %259 = vst.msk [vmem:[#allocation2 + $0x10] sm:$0xff] %vm256, %v188
  %260 = vst.msk [vmem:[#allocation2 + $0x18] sm:$0xff] %vm256, %v193
  %261 = vst.msk [vmem:[#allocation2 + $0x20] sm:$0xff] %vm256, %v198
  %262 = vst.msk [vmem:[#allocation2 + $0x28] sm:$0xff] %vm256, %v203
  %263 = vst.msk [vmem:[#allocation2 + $0x30] sm:$0xff] %vm256, %v208
  %264 = vst.msk [vmem:[#allocation2 + $0x38] sm:$0xff] %vm256, %v213
  %265 = vst.msk [vmem:[#allocation2 + $0x40] sm:$0xff] %vm256, %v218
  %266 = vst.msk [vmem:[#allocation2 + $0x48] sm:$0xff] %vm256, %v223
  %267 = vst.msk [vmem:[#allocation2 + $0x50] sm:$0xff] %vm256, %v228
  %268 = vst.msk [vmem:[#allocation2 + $0x58] sm:$0xff] %vm256, %v233
  %269 = vst.msk [vmem:[#allocation2 + $0x60] sm:$0xff] %vm256, %v238
  %270 = vst.msk [vmem:[#allocation2 + $0x68] sm:$0xff] %vm256, %v243
  %271 = vst.msk [vmem:[#allocation2 + $0x70] sm:$0xff] %vm256, %v248
  %272 = vst.msk [vmem:[#allocation2 + $0x78] sm:$0xff] %vm256, %v253
  %v273 = vld [vmem:[%s2] sm:$0xff]
  %v274 = vld [vmem:[%s2 + $0x8] sm:$0xff]
  %v275 = vld [vmem:[%s2 + $0x10] sm:$0xff]
  %v276 = vld [vmem:[%s2 + $0x18] sm:$0xff]
  %v277 = vld [vmem:[%s4] sm:$0x1]
  %v278 = vld [vmem:[#allocation2] sm:$0xff]
  %v280 = vlaneseq
  %v281 = vshrl.u32 %v280, 7
  %v282 = vsub.s32 0, %v281
  %v283 = vrot.slane %v277, %v282
  %vm285 = vcmask 261120
  %v287 = vsel %vm285, 0.0, 0
  %289 = vmatprep.subr.mxu0 0.0
  %290 = vmatpush1.msra.mxu0 %v273
  %291 = vmatprep.subr.mxu0 0.0
  %292 = vmatpush1.msra.mxu0 %v274
  %293 = vmatprep.subr.mxu0 0.0
  %294 = vmatpush1.msra.mxu0 %v275
  %295 = vmatprep.subr.mxu0 0.0
  %296 = vmatpush1.msra.mxu0 %v276
  %297 = vmatprep.subr.mxu0 0.0
  %298 = vmatpush1.msra.mxu0 0.0
  %299 = vmatprep.subr.mxu0 0.0
  %300 = vmatpush1.msra.mxu0 0.0
  %301 = vmatprep.subr.mxu0 0.0
  %302 = vmatpush1.msra.mxu0 0.0
  %303 = vmatprep.subr.mxu0 0.0
  %304 = vmatpush1.msra.mxu0 0.0
  %305 = vmatprep.subr.mxu0 0.0
  %306 = vmatpush1.msra.mxu0 0.0
  %307 = vmatprep.subr.mxu0 0.0
  %308 = vmatpush1.msra.mxu0 0.0
  %309 = vmatprep.subr.mxu0 0.0
  %310 = vmatpush1.msra.mxu0 0.0
  %311 = vmatprep.subr.mxu0 0.0
  %312 = vmatpush1.msra.mxu0 0.0
  %313 = vmatprep.subr.mxu0 0.0
  %314 = vmatpush1.msra.mxu0 0.0
  %315 = vmatprep.subr.mxu0 0.0
  %316 = vmatpush1.msra.mxu0 0.0
  %317 = vmatprep.subr.mxu0 0.0
  %318 = vmatpush1.msra.mxu0 0.0
  %319 = vmatprep.subr.mxu0 0.0
  %320 = vmatpush1.msra.mxu0 0.0
  %321 = vmatprep.subr.mxu0 0.0
  %322 = vmatpush1.msra.mxu0 0.0
  %323 = vmatprep.subr.mxu0 0.0
  %324 = vmatpush1.msra.mxu0 0.0
  %325 = vmatprep.subr.mxu0 0.0
  %326 = vmatpush1.msra.mxu0 0.0
  %327 = vmatprep.subr.mxu0 0.0
  %328 = vmatpush1.msra.mxu0 0.0
  %329 = vmatprep.subr.mxu0 0.0
  %330 = vmatpush1.msra.mxu0 0.0
  %331 = vmatprep.subr.mxu0 0.0
  %332 = vmatpush1.msra.mxu0 0.0
  %333 = vmatprep.subr.mxu0 0.0
  %334 = vmatpush1.msra.mxu0 0.0
  %335 = vmatprep.subr.mxu0 0.0
  %336 = vmatpush1.msra.mxu0 0.0
  %337 = vmatprep.subr.mxu0 0.0
  %338 = vmatpush1.msra.mxu0 0.0
  %339 = vmatprep.subr.mxu0 0.0
  %340 = vmatpush1.msra.mxu0 0.0
  %341 = vmatprep.subr.mxu0 0.0
  %342 = vmatpush1.msra.mxu0 0.0
  %343 = vmatprep.subr.mxu0 0.0
  %344 = vmatpush1.msra.mxu0 0.0
  %345 = vmatprep.subr.mxu0 0.0
  %346 = vmatpush1.msra.mxu0 0.0
  %347 = vmatprep.subr.mxu0 0.0
  %348 = vmatpush1.msra.mxu0 0.0
  %349 = vmatprep.subr.mxu0 0.0
  %350 = vmatpush1.msra.mxu0 0.0
  %351 = vmatprep.subr.mxu0 0.0
  %352 = vmatpush1.msra.mxu0 0.0
  %353 = vmatprep.mubr.f32.mxu0 0.0
  %354 = vmatmul.mubr.f32.gmra.mrb[0].mxu0 %v287
  %v355 = vpop.f32.mrb[0].mxu0
  %v356 = vadd.f32 %v283, %v355
  %v357 = vpop.f32.mrb[0].mxu0
  %358 = vdwg.mxu0
  %v359 = vadd.f32 %v278, %v356
  %v360 = vxor.u32 %v359, 2147483648
  %v361 = vmul.f32 %v360, 1.442695
  %v362 = vpow.pop %v361
  %v363 = vadd.f32 %v362, 1.0
  %v364 = vrcp.pop %v363
  %v365 = vmul.f32 1.0, %v364
  %367 = vrot.lane.b32.xlu0 %v356, 64
  %v368 = vpop.permute.xlu0 %367
  %v370 = vmul.f32 %v365, %v368
  %372 = vrot.lane.b32.xlu0 %v370, 64
  %v373 = vpop.permute.xlu0 %372
  %v375 = vadd.f32 %v278, %v373
  %v376 = vtanh.pop %v375
  %v377 = vsub.f32 1.0, %v365
  %379 = vrot.lane.b32.xlu0 %v376, 96
  %v380 = vpop.permute.xlu0 %379
  %v382 = vmul.f32 %v377, %v380
  %v383 = vmul.f32 %v365, 0.0
  %v384 = vadd.f32 %v382, %v383
  %386 = vrot.lane.b32.xlu0 %v384, 96
  %v387 = vpop.permute.xlu0 %386
  %389 = vst.msk [vmem:[#allocation3] sm:$0xff] %vm285, %v387
  %s390 = scalar_lea.vmem [#allocation2], 8
  %v391 = vld [vmem:[%s390] sm:$0xff]
  %v392 = vsel %vm285, %v387, 0
  %394 = vmatprep.subr.mxu0 0.0
  %395 = vmatpush1.msra.mxu0 %v273
  %396 = vmatprep.subr.mxu0 0.0
  %397 = vmatpush1.msra.mxu0 %v274
  %398 = vmatprep.subr.mxu0 0.0
  %399 = vmatpush1.msra.mxu0 %v275
  %400 = vmatprep.subr.mxu0 0.0
  %401 = vmatpush1.msra.mxu0 %v276
  %402 = vmatprep.subr.mxu0 0.0
  %403 = vmatpush1.msra.mxu0 0.0
  %404 = vmatprep.subr.mxu0 0.0
  %405 = vmatpush1.msra.mxu0 0.0
  %406 = vmatprep.subr.mxu0 0.0
  %407 = vmatpush1.msra.mxu0 0.0
  %408 = vmatprep.subr.mxu0 0.0
  %409 = vmatpush1.msra.mxu0 0.0
  %410 = vmatprep.subr.mxu0 0.0
  %411 = vmatpush1.msra.mxu0 0.0
  %412 = vmatprep.subr.mxu0 0.0
  %413 = vmatpush1.msra.mxu0 0.0
  %414 = vmatprep.subr.mxu0 0.0
  %415 = vmatpush1.msra.mxu0 0.0
  %416 = vmatprep.subr.mxu0 0.0
  %417 = vmatpush1.msra.mxu0 0.0
  %418 = vmatprep.subr.mxu0 0.0
  %419 = vmatpush1.msra.mxu0 0.0
  %420 = vmatprep.subr.mxu0 0.0
  %421 = vmatpush1.msra.mxu0 0.0
  %422 = vmatprep.subr.mxu0 0.0
  %423 = vmatpush1.msra.mxu0 0.0
  %424 = vmatprep.subr.mxu0 0.0
  %425 = vmatpush1.msra.mxu0 0.0
  %426 = vmatprep.subr.mxu0 0.0
  %427 = vmatpush1.msra.mxu0 0.0
  %428 = vmatprep.subr.mxu0 0.0
  %429 = vmatpush1.msra.mxu0 0.0
  %430 = vmatprep.subr.mxu0 0.0
  %431 = vmatpush1.msra.mxu0 0.0
  %432 = vmatprep.subr.mxu0 0.0
  %433 = vmatpush1.msra.mxu0 0.0
  %434 = vmatprep.subr.mxu0 0.0
  %435 = vmatpush1.msra.mxu0 0.0
  %436 = vmatprep.subr.mxu0 0.0
  %437 = vmatpush1.msra.mxu0 0.0
  %438 = vmatprep.subr.mxu0 0.0
  %439 = vmatpush1.msra.mxu0 0.0
  %440 = vmatprep.subr.mxu0 0.0
  %441 = vmatpush1.msra.mxu0 0.0
  %442 = vmatprep.subr.mxu0 0.0
  %443 = vmatpush1.msra.mxu0 0.0
  %444 = vmatprep.subr.mxu0 0.0
  %445 = vmatpush1.msra.mxu0 0.0
  %446 = vmatprep.subr.mxu0 0.0
  %447 = vmatpush1.msra.mxu0 0.0
  %448 = vmatprep.subr.mxu0 0.0
  %449 = vmatpush1.msra.mxu0 0.0
  %450 = vmatprep.subr.mxu0 0.0
  %451 = vmatpush1.msra.mxu0 0.0
  %452 = vmatprep.subr.mxu0 0.0
  %453 = vmatpush1.msra.mxu0 0.0
  %454 = vmatprep.subr.mxu0 0.0
  %455 = vmatpush1.msra.mxu0 0.0
  %456 = vmatprep.subr.mxu0 0.0
  %457 = vmatpush1.msra.mxu0 0.0
  %458 = vmatprep.mubr.f32.mxu0 0.0
  %459 = vmatmul.mubr.f32.gmra.mrb[0].mxu0 %v392
  %v460 = vpop.f32.mrb[0].mxu0
  %v461 = vadd.f32 %v283, %v460
  %v462 = vpop.f32.mrb[0].mxu0
  %463 = vdwg.mxu0
  %v464 = vadd.f32 %v391, %v461
  %v465 = vxor.u32 %v464, 2147483648
  %v466 = vmul.f32 %v465, 1.442695
  %v467 = vpow.pop %v466
  %v468 = vadd.f32 %v467, 1.0
  %v469 = vrcp.pop %v468
  %v470 = vmul.f32 1.0, %v469
  %472 = vrot.lane.b32.xlu0 %v461, 64
  %v473 = vpop.permute.xlu0 %472
  %v475 = vmul.f32 %v470, %v473
  %477 = vrot.lane.b32.xlu0 %v475, 64
  %v478 = vpop.permute.xlu0 %477
  %v480 = vadd.f32 %v391, %v478
  %v481 = vtanh.pop %v480
  %v482 = vsub.f32 1.0, %v470
  %484 = vrot.lane.b32.xlu0 %v481, 96
  %v485 = vpop.permute.xlu0 %484
  %v487 = vmul.f32 %v482, %v485
  %v488 = vmul.f32 %v470, %v384
  %v489 = vadd.f32 %v487, %v488
  %491 = vrot.lane.b32.xlu0 %v489, 96
  %v492 = vpop.permute.xlu0 %491
  %s494 = scalar_lea.vmem [#allocation3], 8
  %495 = vst.msk [vmem:[%s494] sm:$0xff] %vm285, %v492
  %s496 = scalar_lea.vmem [#allocation2], 16
  %v497 = vld [vmem:[%s496] sm:$0xff]
  %v498 = vsel %vm285, %v492, 0
  %500 = vmatprep.subr.mxu0 0.0
  %501 = vmatpush1.msra.mxu0 %v273
  %502 = vmatprep.subr.mxu0 0.0
  %503 = vmatpush1.msra.mxu0 %v274
  %504 = vmatprep.subr.mxu0 0.0
  %505 = vmatpush1.msra.mxu0 %v275
  %506 = vmatprep.subr.mxu0 0.0
  %507 = vmatpush1.msra.mxu0 %v276
  %508 = vmatprep.subr.mxu0 0.0
  %509 = vmatpush1.msra.mxu0 0.0
  %510 = vmatprep.subr.mxu0 0.0
  %511 = vmatpush1.msra.mxu0 0.0
  %512 = vmatprep.subr.mxu0 0.0
  %513 = vmatpush1.msra.mxu0 0.0
  %514 = vmatprep.subr.mxu0 0.0
  %515 = vmatpush1.msra.mxu0 0.0
  %516 = vmatprep.subr.mxu0 0.0
  %517 = vmatpush1.msra.mxu0 0.0
  %518 = vmatprep.subr.mxu0 0.0
  %519 = vmatpush1.msra.mxu0 0.0
  %520 = vmatprep.subr.mxu0 0.0
  %521 = vmatpush1.msra.mxu0 0.0
  %522 = vmatprep.subr.mxu0 0.0
  %523 = vmatpush1.msra.mxu0 0.0
  %524 = vmatprep.subr.mxu0 0.0
  %525 = vmatpush1.msra.mxu0 0.0
  %526 = vmatprep.subr.mxu0 0.0
  %527 = vmatpush1.msra.mxu0 0.0
  %528 = vmatprep.subr.mxu0 0.0
  %529 = vmatpush1.msra.mxu0 0.0
  %530 = vmatprep.subr.mxu0 0.0
  %531 = vmatpush1.msra.mxu0 0.0
  %532 = vmatprep.subr.mxu0 0.0
  %533 = vmatpush1.msra.mxu0 0.0
  %534 = vmatprep.subr.mxu0 0.0
  %535 = vmatpush1.msra.mxu0 0.0
  %536 = vmatprep.subr.mxu0 0.0
  %537 = vmatpush1.msra.mxu0 0.0
  %538 = vmatprep.subr.mxu0 0.0
  %539 = vmatpush1.msra.mxu0 0.0
  %540 = vmatprep.subr.mxu0 0.0
  %541 = vmatpush1.msra.mxu0 0.0
  %542 = vmatprep.subr.mxu0 0.0
  %543 = vmatpush1.msra.mxu0 0.0
  %544 = vmatprep.subr.mxu0 0.0
  %545 = vmatpush1.msra.mxu0 0.0
  %546 = vmatprep.subr.mxu0 0.0
  %547 = vmatpush1.msra.mxu0 0.0
  %548 = vmatprep.subr.mxu0 0.0
  %549 = vmatpush1.msra.mxu0 0.0
  %550 = vmatprep.subr.mxu0 0.0
  %551 = vmatpush1.msra.mxu0 0.0
  %552 = vmatprep.subr.mxu0 0.0
  %553 = vmatpush1.msra.mxu0 0.0
  %554 = vmatprep.subr.mxu0 0.0
  %555 = vmatpush1.msra.mxu0 0.0
  %556 = vmatprep.subr.mxu0 0.0
  %557 = vmatpush1.msra.mxu0 0.0
  %558 = vmatprep.subr.mxu0 0.0
  %559 = vmatpush1.msra.mxu0 0.0
  %560 = vmatprep.subr.mxu0 0.0
  %561 = vmatpush1.msra.mxu0 0.0
  %562 = vmatprep.subr.mxu0 0.0
  %563 = vmatpush1.msra.mxu0 0.0
  %564 = vmatprep.mubr.f32.mxu0 0.0
  %565 = vmatmul.mubr.f32.gmra.mrb[0].mxu0 %v498
  %v566 = vpop.f32.mrb[0].mxu0
  %v567 = vadd.f32 %v283, %v566
  %v568 = vpop.f32.mrb[0].mxu0
  %569 = vdwg.mxu0
  %v570 = vadd.f32 %v497, %v567
  %v571 = vxor.u32 %v570, 2147483648
  %v572 = vmul.f32 %v571, 1.442695
  %v573 = vpow.pop %v572
  %v574 = vadd.f32 %v573, 1.0
  %v575 = vrcp.pop %v574
  %v576 = vmul.f32 1.0, %v575
  %578 = vrot.lane.b32.xlu0 %v567, 64
  %v579 = vpop.permute.xlu0 %578
  %v581 = vmul.f32 %v576, %v579
  %583 = vrot.lane.b32.xlu0 %v581, 64
  %v584 = vpop.permute.xlu0 %583
  %v586 = vadd.f32 %v497, %v584
  %v587 = vtanh.pop %v586
  %v588 = vsub.f32 1.0, %v576
  %590 = vrot.lane.b32.xlu0 %v587, 96
  %v591 = vpop.permute.xlu0 %590
  %v593 = vmul.f32 %v588, %v591
  %v594 = vmul.f32 %v576, %v489
  %v595 = vadd.f32 %v593, %v594
  %597 = vrot.lane.b32.xlu0 %v595, 96
  %v598 = vpop.permute.xlu0 %597
  %s600 = scalar_lea.vmem [#allocation3], 16
  %601 = vst.msk [vmem:[%s600] sm:$0xff] %vm285, %v598
  %s602 = scalar_lea.vmem [#allocation2], 24
  %v603 = vld [vmem:[%s602] sm:$0xff]
  %v604 = vsel %vm285, %v598, 0
  %606 = vmatprep.subr.mxu0 0.0
  %607 = vmatpush1.msra.mxu0 %v273
  %608 = vmatprep.subr.mxu0 0.0
  %609 = vmatpush1.msra.mxu0 %v274
  %610 = vmatprep.subr.mxu0 0.0
  %611 = vmatpush1.msra.mxu0 %v275
  %612 = vmatprep.subr.mxu0 0.0
  %613 = vmatpush1.msra.mxu0 %v276
  %614 = vmatprep.subr.mxu0 0.0
  %615 = vmatpush1.msra.mxu0 0.0
  %616 = vmatprep.subr.mxu0 0.0
  %617 = vmatpush1.msra.mxu0 0.0
  %618 = vmatprep.subr.mxu0 0.0
  %619 = vmatpush1.msra.mxu0 0.0
  %620 = vmatprep.subr.mxu0 0.0
  %621 = vmatpush1.msra.mxu0 0.0
  %622 = vmatprep.subr.mxu0 0.0
  %623 = vmatpush1.msra.mxu0 0.0
  %624 = vmatprep.subr.mxu0 0.0
  %625 = vmatpush1.msra.mxu0 0.0
  %626 = vmatprep.subr.mxu0 0.0
  %627 = vmatpush1.msra.mxu0 0.0
  %628 = vmatprep.subr.mxu0 0.0
  %629 = vmatpush1.msra.mxu0 0.0
  %630 = vmatprep.subr.mxu0 0.0
  %631 = vmatpush1.msra.mxu0 0.0
  %632 = vmatprep.subr.mxu0 0.0
  %633 = vmatpush1.msra.mxu0 0.0
  %634 = vmatprep.subr.mxu0 0.0
  %635 = vmatpush1.msra.mxu0 0.0
  %636 = vmatprep.subr.mxu0 0.0
  %637 = vmatpush1.msra.mxu0 0.0
  %638 = vmatprep.subr.mxu0 0.0
  %639 = vmatpush1.msra.mxu0 0.0
  %640 = vmatprep.subr.mxu0 0.0
  %641 = vmatpush1.msra.mxu0 0.0
  %642 = vmatprep.subr.mxu0 0.0
  %643 = vmatpush1.msra.mxu0 0.0
  %644 = vmatprep.subr.mxu0 0.0
  %645 = vmatpush1.msra.mxu0 0.0
  %646 = vmatprep.subr.mxu0 0.0
  %647 = vmatpush1.msra.mxu0 0.0
  %648 = vmatprep.subr.mxu0 0.0
  %649 = vmatpush1.msra.mxu0 0.0
  %650 = vmatprep.subr.mxu0 0.0
  %651 = vmatpush1.msra.mxu0 0.0
  %652 = vmatprep.subr.mxu0 0.0
  %653 = vmatpush1.msra.mxu0 0.0
  %654 = vmatprep.subr.mxu0 0.0
  %655 = vmatpush1.msra.mxu0 0.0
  %656 = vmatprep.subr.mxu0 0.0
  %657 = vmatpush1.msra.mxu0 0.0
  %658 = vmatprep.subr.mxu0 0.0
  %659 = vmatpush1.msra.mxu0 0.0
  %660 = vmatprep.subr.mxu0 0.0
  %661 = vmatpush1.msra.mxu0 0.0
  %662 = vmatprep.subr.mxu0 0.0
  %663 = vmatpush1.msra.mxu0 0.0
  %664 = vmatprep.subr.mxu0 0.0
  %665 = vmatpush1.msra.mxu0 0.0
  %666 = vmatprep.subr.mxu0 0.0
  %667 = vmatpush1.msra.mxu0 0.0
  %668 = vmatprep.subr.mxu0 0.0
  %669 = vmatpush1.msra.mxu0 0.0
  %670 = vmatprep.mubr.f32.mxu0 0.0
  %671 = vmatmul.mubr.f32.gmra.mrb[0].mxu0 %v604
  %v672 = vpop.f32.mrb[0].mxu0
  %v673 = vadd.f32 %v283, %v672
  %v674 = vpop.f32.mrb[0].mxu0
  %675 = vdwg.mxu0
  %v676 = vadd.f32 %v603, %v673
  %v677 = vxor.u32 %v676, 2147483648
  %v678 = vmul.f32 %v677, 1.442695
  %v679 = vpow.pop %v678
  %v680 = vadd.f32 %v679, 1.0
  %v681 = vrcp.pop %v680
  %v682 = vmul.f32 1.0, %v681
  %684 = vrot.lane.b32.xlu0 %v673, 64
  %v685 = vpop.permute.xlu0 %684
  %v687 = vmul.f32 %v682, %v685
  %689 = vrot.lane.b32.xlu0 %v687, 64
  %v690 = vpop.permute.xlu0 %689
  %v692 = vadd.f32 %v603, %v690
  %v693 = vtanh.pop %v692
  %v694 = vsub.f32 1.0, %v682
  %696 = vrot.lane.b32.xlu0 %v693, 96
  %v697 = vpop.permute.xlu0 %696
  %v699 = vmul.f32 %v694, %v697
  %v700 = vmul.f32 %v682, %v595
  %v701 = vadd.f32 %v699, %v700
  %703 = vrot.lane.b32.xlu0 %v701, 96
  %v704 = vpop.permute.xlu0 %703
  %s706 = scalar_lea.vmem [#allocation3], 24
  %707 = vst.msk [vmem:[%s706] sm:$0xff] %vm285, %v704
  %s708 = scalar_lea.vmem [#allocation2], 32
  %v709 = vld [vmem:[%s708] sm:$0xff]
  %v710 = vsel %vm285, %v704, 0
  %712 = vmatprep.subr.mxu0 0.0
  %713 = vmatpush1.msra.mxu0 %v273
  %714 = vmatprep.subr.mxu0 0.0
  %715 = vmatpush1.msra.mxu0 %v274
  %716 = vmatprep.subr.mxu0 0.0
  %717 = vmatpush1.msra.mxu0 %v275
  %718 = vmatprep.subr.mxu0 0.0
  %719 = vmatpush1.msra.mxu0 %v276
  %720 = vmatprep.subr.mxu0 0.0
  %721 = vmatpush1.msra.mxu0 0.0
  %722 = vmatprep.subr.mxu0 0.0
  %723 = vmatpush1.msra.mxu0 0.0
  %724 = vmatprep.subr.mxu0 0.0
  %725 = vmatpush1.msra.mxu0 0.0
  %726 = vmatprep.subr.mxu0 0.0
  %727 = vmatpush1.msra.mxu0 0.0
  %728 = vmatprep.subr.mxu0 0.0
  %729 = vmatpush1.msra.mxu0 0.0
  %730 = vmatprep.subr.mxu0 0.0
  %731 = vmatpush1.msra.mxu0 0.0
  %732 = vmatprep.subr.mxu0 0.0
  %733 = vmatpush1.msra.mxu0 0.0
  %734 = vmatprep.subr.mxu0 0.0
  %735 = vmatpush1.msra.mxu0 0.0
  %736 = vmatprep.subr.mxu0 0.0
  %737 = vmatpush1.msra.mxu0 0.0
  %738 = vmatprep.subr.mxu0 0.0
  %739 = vmatpush1.msra.mxu0 0.0
  %740 = vmatprep.subr.mxu0 0.0
  %741 = vmatpush1.msra.mxu0 0.0
  %742 = vmatprep.subr.mxu0 0.0
  %743 = vmatpush1.msra.mxu0 0.0
  %744 = vmatprep.subr.mxu0 0.0
  %745 = vmatpush1.msra.mxu0 0.0
  %746 = vmatprep.subr.mxu0 0.0
  %747 = vmatpush1.msra.mxu0 0.0
  %748 = vmatprep.subr.mxu0 0.0
  %749 = vmatpush1.msra.mxu0 0.0
  %750 = vmatprep.subr.mxu0 0.0
  %751 = vmatpush1.msra.mxu0 0.0
  %752 = vmatprep.subr.mxu0 0.0
  %753 = vmatpush1.msra.mxu0 0.0
  %754 = vmatprep.subr.mxu0 0.0
  %755 = vmatpush1.msra.mxu0 0.0
  %756 = vmatprep.subr.mxu0 0.0
  %757 = vmatpush1.msra.mxu0 0.0
  %758 = vmatprep.subr.mxu0 0.0
  %759 = vmatpush1.msra.mxu0 0.0
  %760 = vmatprep.subr.mxu0 0.0
  %761 = vmatpush1.msra.mxu0 0.0
  %762 = vmatprep.subr.mxu0 0.0
  %763 = vmatpush1.msra.mxu0 0.0
  %764 = vmatprep.subr.mxu0 0.0
  %765 = vmatpush1.msra.mxu0 0.0
  %766 = vmatprep.subr.mxu0 0.0
  %767 = vmatpush1.msra.mxu0 0.0
  %768 = vmatprep.subr.mxu0 0.0
  %769 = vmatpush1.msra.mxu0 0.0
  %770 = vmatprep.subr.mxu0 0.0
  %771 = vmatpush1.msra.mxu0 0.0
  %772 = vmatprep.subr.mxu0 0.0
  %773 = vmatpush1.msra.mxu0 0.0
  %774 = vmatprep.subr.mxu0 0.0
  %775 = vmatpush1.msra.mxu0 0.0
  %776 = vmatprep.mubr.f32.mxu0 0.0
  %777 = vmatmul.mubr.f32.gmra.mrb[0].mxu0 %v710
  %v778 = vpop.f32.mrb[0].mxu0
  %v779 = vadd.f32 %v283, %v778
  %v780 = vpop.f32.mrb[0].mxu0
  %781 = vdwg.mxu0
  %v782 = vadd.f32 %v709, %v779
  %v783 = vxor.u32 %v782, 2147483648
  %v784 = vmul.f32 %v783, 1.442695
  %v785 = vpow.pop %v784
  %v786 = vadd.f32 %v785, 1.0
  %v787 = vrcp.pop %v786
  %v788 = vmul.f32 1.0, %v787
  %790 = vrot.lane.b32.xlu0 %v779, 64
  %v791 = vpop.permute.xlu0 %790
  %v793 = vmul.f32 %v788, %v791
  %795 = vrot.lane.b32.xlu0 %v793, 64
  %v796 = vpop.permute.xlu0 %795
  %v798 = vadd.f32 %v709, %v796
  %v799 = vtanh.pop %v798
  %v800 = vsub.f32 1.0, %v788
  %802 = vrot.lane.b32.xlu0 %v799, 96
  %v803 = vpop.permute.xlu0 %802
  %v805 = vmul.f32 %v800, %v803
  %v806 = vmul.f32 %v788, %v701
  %v807 = vadd.f32 %v805, %v806
  %809 = vrot.lane.b32.xlu0 %v807, 96
  %v810 = vpop.permute.xlu0 %809
  %s812 = scalar_lea.vmem [#allocation3], 32
  %813 = vst.msk [vmem:[%s812] sm:$0xff] %vm285, %v810
  %s814 = scalar_lea.vmem [#allocation2], 40
  %v815 = vld [vmem:[%s814] sm:$0xff]
  %v816 = vsel %vm285, %v810, 0
  %818 = vmatprep.subr.mxu0 0.0
  %819 = vmatpush1.msra.mxu0 %v273
  %820 = vmatprep.subr.mxu0 0.0
  %821 = vmatpush1.msra.mxu0 %v274
  %822 = vmatprep.subr.mxu0 0.0
  %823 = vmatpush1.msra.mxu0 %v275
  %824 = vmatprep.subr.mxu0 0.0
  %825 = vmatpush1.msra.mxu0 %v276
  %826 = vmatprep.subr.mxu0 0.0
  %827 = vmatpush1.msra.mxu0 0.0
  %828 = vmatprep.subr.mxu0 0.0
  %829 = vmatpush1.msra.mxu0 0.0
  %830 = vmatprep.subr.mxu0 0.0
  %831 = vmatpush1.msra.mxu0 0.0
  %832 = vmatprep.subr.mxu0 0.0
  %833 = vmatpush1.msra.mxu0 0.0
  %834 = vmatprep.subr.mxu0 0.0
  %835 = vmatpush1.msra.mxu0 0.0
  %836 = vmatprep.subr.mxu0 0.0
  %837 = vmatpush1.msra.mxu0 0.0
  %838 = vmatprep.subr.mxu0 0.0
  %839 = vmatpush1.msra.mxu0 0.0
  %840 = vmatprep.subr.mxu0 0.0
  %841 = vmatpush1.msra.mxu0 0.0
  %842 = vmatprep.subr.mxu0 0.0
  %843 = vmatpush1.msra.mxu0 0.0
  %844 = vmatprep.subr.mxu0 0.0
  %845 = vmatpush1.msra.mxu0 0.0
  %846 = vmatprep.subr.mxu0 0.0
  %847 = vmatpush1.msra.mxu0 0.0
  %848 = vmatprep.subr.mxu0 0.0
  %849 = vmatpush1.msra.mxu0 0.0
  %850 = vmatprep.subr.mxu0 0.0
  %851 = vmatpush1.msra.mxu0 0.0
  %852 = vmatprep.subr.mxu0 0.0
  %853 = vmatpush1.msra.mxu0 0.0
  %854 = vmatprep.subr.mxu0 0.0
  %855 = vmatpush1.msra.mxu0 0.0
  %856 = vmatprep.subr.mxu0 0.0
  %857 = vmatpush1.msra.mxu0 0.0
  %858 = vmatprep.subr.mxu0 0.0
  %859 = vmatpush1.msra.mxu0 0.0
  %860 = vmatprep.subr.mxu0 0.0
  %861 = vmatpush1.msra.mxu0 0.0
  %862 = vmatprep.subr.mxu0 0.0
  %863 = vmatpush1.msra.mxu0 0.0
  %864 = vmatprep.subr.mxu0 0.0
  %865 = vmatpush1.msra.mxu0 0.0
  %866 = vmatprep.subr.mxu0 0.0
  %867 = vmatpush1.msra.mxu0 0.0
  %868 = vmatprep.subr.mxu0 0.0
  %869 = vmatpush1.msra.mxu0 0.0
  %870 = vmatprep.subr.mxu0 0.0
  %871 = vmatpush1.msra.mxu0 0.0
  %872 = vmatprep.subr.mxu0 0.0
  %873 = vmatpush1.msra.mxu0 0.0
  %874 = vmatprep.subr.mxu0 0.0
  %875 = vmatpush1.msra.mxu0 0.0
  %876 = vmatprep.subr.mxu0 0.0
  %877 = vmatpush1.msra.mxu0 0.0
  %878 = vmatprep.subr.mxu0 0.0
  %879 = vmatpush1.msra.mxu0 0.0
  %880 = vmatprep.subr.mxu0 0.0
  %881 = vmatpush1.msra.mxu0 0.0
  %882 = vmatprep.mubr.f32.mxu0 0.0
  %883 = vmatmul.mubr.f32.gmra.mrb[0].mxu0 %v816
  %v884 = vpop.f32.mrb[0].mxu0
  %v885 = vadd.f32 %v283, %v884
  %v886 = vpop.f32.mrb[0].mxu0
  %887 = vdwg.mxu0
  %v888 = vadd.f32 %v815, %v885
  %v889 = vxor.u32 %v888, 2147483648
  %v890 = vmul.f32 %v889, 1.442695
  %v891 = vpow.pop %v890
  %v892 = vadd.f32 %v891, 1.0
  %v893 = vrcp.pop %v892
  %v894 = vmul.f32 1.0, %v893
  %896 = vrot.lane.b32.xlu0 %v885, 64
  %v897 = vpop.permute.xlu0 %896
  %v899 = vmul.f32 %v894, %v897
  %901 = vrot.lane.b32.xlu0 %v899, 64
  %v902 = vpop.permute.xlu0 %901
  %v904 = vadd.f32 %v815, %v902
  %v905 = vtanh.pop %v904
  %v906 = vsub.f32 1.0, %v894
  %908 = vrot.lane.b32.xlu0 %v905, 96
  %v909 = vpop.permute.xlu0 %908
  %v911 = vmul.f32 %v906, %v909
  %v912 = vmul.f32 %v894, %v807
  %v913 = vadd.f32 %v911, %v912
  %915 = vrot.lane.b32.xlu0 %v913, 96
  %v916 = vpop.permute.xlu0 %915
  %s918 = scalar_lea.vmem [#allocation3], 40
  %919 = vst.msk [vmem:[%s918] sm:$0xff] %vm285, %v916
  %s920 = scalar_lea.vmem [#allocation2], 48
  %v921 = vld [vmem:[%s920] sm:$0xff]
  %v922 = vsel %vm285, %v916, 0
  %924 = vmatprep.subr.mxu0 0.0
  %925 = vmatpush1.msra.mxu0 %v273
  %926 = vmatprep.subr.mxu0 0.0
  %927 = vmatpush1.msra.mxu0 %v274
  %928 = vmatprep.subr.mxu0 0.0
  %929 = vmatpush1.msra.mxu0 %v275
  %930 = vmatprep.subr.mxu0 0.0
  %931 = vmatpush1.msra.mxu0 %v276
  %932 = vmatprep.subr.mxu0 0.0
  %933 = vmatpush1.msra.mxu0 0.0
  %934 = vmatprep.subr.mxu0 0.0
  %935 = vmatpush1.msra.mxu0 0.0
  %936 = vmatprep.subr.mxu0 0.0
  %937 = vmatpush1.msra.mxu0 0.0
  %938 = vmatprep.subr.mxu0 0.0
  %939 = vmatpush1.msra.mxu0 0.0
  %940 = vmatprep.subr.mxu0 0.0
  %941 = vmatpush1.msra.mxu0 0.0
  %942 = vmatprep.subr.mxu0 0.0
  %943 = vmatpush1.msra.mxu0 0.0
  %944 = vmatprep.subr.mxu0 0.0
  %945 = vmatpush1.msra.mxu0 0.0
  %946 = vmatprep.subr.mxu0 0.0
  %947 = vmatpush1.msra.mxu0 0.0
  %948 = vmatprep.subr.mxu0 0.0
  %949 = vmatpush1.msra.mxu0 0.0
  %950 = vmatprep.subr.mxu0 0.0
  %951 = vmatpush1.msra.mxu0 0.0
  %952 = vmatprep.subr.mxu0 0.0
  %953 = vmatpush1.msra.mxu0 0.0
  %954 = vmatprep.subr.mxu0 0.0
  %955 = vmatpush1.msra.mxu0 0.0
  %956 = vmatprep.subr.mxu0 0.0
  %957 = vmatpush1.msra.mxu0 0.0
  %958 = vmatprep.subr.mxu0 0.0
  %959 = vmatpush1.msra.mxu0 0.0
  %960 = vmatprep.subr.mxu0 0.0
  %961 = vmatpush1.msra.mxu0 0.0
  %962 = vmatprep.subr.mxu0 0.0
  %963 = vmatpush1.msra.mxu0 0.0
  %964 = vmatprep.subr.mxu0 0.0
  %965 = vmatpush1.msra.mxu0 0.0
  %966 = vmatprep.subr.mxu0 0.0
  %967 = vmatpush1.msra.mxu0 0.0
  %968 = vmatprep.subr.mxu0 0.0
  %969 = vmatpush1.msra.mxu0 0.0
  %970 = vmatprep.subr.mxu0 0.0
  %971 = vmatpush1.msra.mxu0 0.0
  %972 = vmatprep.subr.mxu0 0.0
  %973 = vmatpush1.msra.mxu0 0.0
  %974 = vmatprep.subr.mxu0 0.0
  %975 = vmatpush1.msra.mxu0 0.0
  %976 = vmatprep.subr.mxu0 0.0
  %977 = vmatpush1.msra.mxu0 0.0
  %978 = vmatprep.subr.mxu0 0.0
  %979 = vmatpush1.msra.mxu0 0.0
  %980 = vmatprep.subr.mxu0 0.0
  %981 = vmatpush1.msra.mxu0 0.0
  %982 = vmatprep.subr.mxu0 0.0
  %983 = vmatpush1.msra.mxu0 0.0
  %984 = vmatprep.subr.mxu0 0.0
  %985 = vmatpush1.msra.mxu0 0.0
  %986 = vmatprep.subr.mxu0 0.0
  %987 = vmatpush1.msra.mxu0 0.0
  %988 = vmatprep.mubr.f32.mxu0 0.0
  %989 = vmatmul.mubr.f32.gmra.mrb[0].mxu0 %v922
  %v990 = vpop.f32.mrb[0].mxu0
  %v991 = vadd.f32 %v283, %v990
  %v992 = vpop.f32.mrb[0].mxu0
  %993 = vdwg.mxu0
  %v994 = vadd.f32 %v921, %v991
  %v995 = vxor.u32 %v994, 2147483648
  %v996 = vmul.f32 %v995, 1.442695
  %v997 = vpow.pop %v996
  %v998 = vadd.f32 %v997, 1.0
  %v999 = vrcp.pop %v998
  %v1000 = vmul.f32 1.0, %v999
  %1002 = vrot.lane.b32.xlu0 %v991, 64
  %v1003 = vpop.permute.xlu0 %1002
  %v1005 = vmul.f32 %v1000, %v1003
  %1007 = vrot.lane.b32.xlu0 %v1005, 64
  %v1008 = vpop.permute.xlu0 %1007
  %v1010 = vadd.f32 %v921, %v1008
  %v1011 = vtanh.pop %v1010
  %v1012 = vsub.f32 1.0, %v1000
  %1014 = vrot.lane.b32.xlu0 %v1011, 96
  %v1015 = vpop.permute.xlu0 %1014
  %v1017 = vmul.f32 %v1012, %v1015
  %v1018 = vmul.f32 %v1000, %v913
  %v1019 = vadd.f32 %v1017, %v1018
  %1021 = vrot.lane.b32.xlu0 %v1019, 96
  %v1022 = vpop.permute.xlu0 %1021
  %s1024 = scalar_lea.vmem [#allocation3], 48
  %1025 = vst.msk [vmem:[%s1024] sm:$0xff] %vm285, %v1022
  %s1026 = scalar_lea.vmem [#allocation2], 56
  %v1027 = vld [vmem:[%s1026] sm:$0xff]
  %v1028 = vsel %vm285, %v1022, 0
  %1030 = vmatprep.subr.mxu0 0.0
  %1031 = vmatpush1.msra.mxu0 %v273
  %1032 = vmatprep.subr.mxu0 0.0
  %1033 = vmatpush1.msra.mxu0 %v274
  %1034 = vmatprep.subr.mxu0 0.0
  %1035 = vmatpush1.msra.mxu0 %v275
  %1036 = vmatprep.subr.mxu0 0.0
  %1037 = vmatpush1.msra.mxu0 %v276
  %1038 = vmatprep.subr.mxu0 0.0
  %1039 = vmatpush1.msra.mxu0 0.0
  %1040 = vmatprep.subr.mxu0 0.0
  %1041 = vmatpush1.msra.mxu0 0.0
  %1042 = vmatprep.subr.mxu0 0.0
  %1043 = vmatpush1.msra.mxu0 0.0
  %1044 = vmatprep.subr.mxu0 0.0
  %1045 = vmatpush1.msra.mxu0 0.0
  %1046 = vmatprep.subr.mxu0 0.0
  %1047 = vmatpush1.msra.mxu0 0.0
  %1048 = vmatprep.subr.mxu0 0.0
  %1049 = vmatpush1.msra.mxu0 0.0
  %1050 = vmatprep.subr.mxu0 0.0
  %1051 = vmatpush1.msra.mxu0 0.0
  %1052 = vmatprep.subr.mxu0 0.0
  %1053 = vmatpush1.msra.mxu0 0.0
  %1054 = vmatprep.subr.mxu0 0.0
  %1055 = vmatpush1.msra.mxu0 0.0
  %1056 = vmatprep.subr.mxu0 0.0
  %1057 = vmatpush1.msra.mxu0 0.0
  %1058 = vmatprep.subr.mxu0 0.0
  %1059 = vmatpush1.msra.mxu0 0.0
  %1060 = vmatprep.subr.mxu0 0.0
  %1061 = vmatpush1.msra.mxu0 0.0
  %1062 = vmatprep.subr.mxu0 0.0
  %1063 = vmatpush1.msra.mxu0 0.0
  %1064 = vmatprep.subr.mxu0 0.0
  %1065 = vmatpush1.msra.mxu0 0.0
  %1066 = vmatprep.subr.mxu0 0.0
  %1067 = vmatpush1.msra.mxu0 0.0
  %1068 = vmatprep.subr.mxu0 0.0
  %1069 = vmatpush1.msra.mxu0 0.0
  %1070 = vmatprep.subr.mxu0 0.0
  %1071 = vmatpush1.msra.mxu0 0.0
  %1072 = vmatprep.subr.mxu0 0.0
  %1073 = vmatpush1.msra.mxu0 0.0
  %1074 = vmatprep.subr.mxu0 0.0
  %1075 = vmatpush1.msra.mxu0 0.0
  %1076 = vmatprep.subr.mxu0 0.0
  %1077 = vmatpush1.msra.mxu0 0.0
  %1078 = vmatprep.subr.mxu0 0.0
  %1079 = vmatpush1.msra.mxu0 0.0
  %1080 = vmatprep.subr.mxu0 0.0
  %1081 = vmatpush1.msra.mxu0 0.0
  %1082 = vmatprep.subr.mxu0 0.0
  %1083 = vmatpush1.msra.mxu0 0.0
  %1084 = vmatprep.subr.mxu0 0.0
  %1085 = vmatpush1.msra.mxu0 0.0
  %1086 = vmatprep.subr.mxu0 0.0
  %1087 = vmatpush1.msra.mxu0 0.0
  %1088 = vmatprep.subr.mxu0 0.0
  %1089 = vmatpush1.msra.mxu0 0.0
  %1090 = vmatprep.subr.mxu0 0.0
  %1091 = vmatpush1.msra.mxu0 0.0
  %1092 = vmatprep.subr.mxu0 0.0
  %1093 = vmatpush1.msra.mxu0 0.0
  %1094 = vmatprep.mubr.f32.mxu0 0.0
  %1095 = vmatmul.mubr.f32.gmra.mrb[0].mxu0 %v1028
  %v1096 = vpop.f32.mrb[0].mxu0
  %v1097 = vadd.f32 %v283, %v1096
  %v1098 = vpop.f32.mrb[0].mxu0
  %1099 = vdwg.mxu0
  %v1100 = vadd.f32 %v1027, %v1097
  %v1101 = vxor.u32 %v1100, 2147483648
  %v1102 = vmul.f32 %v1101, 1.442695
  %v1103 = vpow.pop %v1102
  %v1104 = vadd.f32 %v1103, 1.0
  %v1105 = vrcp.pop %v1104
  %v1106 = vmul.f32 1.0, %v1105
  %1108 = vrot.lane.b32.xlu0 %v1097, 64
  %v1109 = vpop.permute.xlu0 %1108
  %v1111 = vmul.f32 %v1106, %v1109
  %1113 = vrot.lane.b32.xlu0 %v1111, 64
  %v1114 = vpop.permute.xlu0 %1113
  %v1116 = vadd.f32 %v1027, %v1114
  %v1117 = vtanh.pop %v1116
  %v1118 = vsub.f32 1.0, %v1106
  %1120 = vrot.lane.b32.xlu0 %v1117, 96
  %v1121 = vpop.permute.xlu0 %1120
  %v1123 = vmul.f32 %v1118, %v1121
  %v1124 = vmul.f32 %v1106, %v1019
  %v1125 = vadd.f32 %v1123, %v1124
  %1127 = vrot.lane.b32.xlu0 %v1125, 96
  %v1128 = vpop.permute.xlu0 %1127
  %s1130 = scalar_lea.vmem [#allocation3], 56
  %1131 = vst.msk [vmem:[%s1130] sm:$0xff] %vm285, %v1128
  %s1132 = scalar_lea.vmem [#allocation2], 64
  %v1133 = vld [vmem:[%s1132] sm:$0xff]
  %v1134 = vsel %vm285, %v1128, 0
  %1136 = vmatprep.subr.mxu0 0.0
  %1137 = vmatpush1.msra.mxu0 %v273
  %1138 = vmatprep.subr.mxu0 0.0
  %1139 = vmatpush1.msra.mxu0 %v274
  %1140 = vmatprep.subr.mxu0 0.0
  %1141 = vmatpush1.msra.mxu0 %v275
  %1142 = vmatprep.subr.mxu0 0.0
  %1143 = vmatpush1.msra.mxu0 %v276
  %1144 = vmatprep.subr.mxu0 0.0
  %1145 = vmatpush1.msra.mxu0 0.0
  %1146 = vmatprep.subr.mxu0 0.0
  %1147 = vmatpush1.msra.mxu0 0.0
  %1148 = vmatprep.subr.mxu0 0.0
  %1149 = vmatpush1.msra.mxu0 0.0
  %1150 = vmatprep.subr.mxu0 0.0
  %1151 = vmatpush1.msra.mxu0 0.0
  %1152 = vmatprep.subr.mxu0 0.0
  %1153 = vmatpush1.msra.mxu0 0.0
  %1154 = vmatprep.subr.mxu0 0.0
  %1155 = vmatpush1.msra.mxu0 0.0
  %1156 = vmatprep.subr.mxu0 0.0
  %1157 = vmatpush1.msra.mxu0 0.0
  %1158 = vmatprep.subr.mxu0 0.0
  %1159 = vmatpush1.msra.mxu0 0.0
  %1160 = vmatprep.subr.mxu0 0.0
  %1161 = vmatpush1.msra.mxu0 0.0
  %1162 = vmatprep.subr.mxu0 0.0
  %1163 = vmatpush1.msra.mxu0 0.0
  %1164 = vmatprep.subr.mxu0 0.0
  %1165 = vmatpush1.msra.mxu0 0.0
  %1166 = vmatprep.subr.mxu0 0.0
  %1167 = vmatpush1.msra.mxu0 0.0
  %1168 = vmatprep.subr.mxu0 0.0
  %1169 = vmatpush1.msra.mxu0 0.0
  %1170 = vmatprep.subr.mxu0 0.0
  %1171 = vmatpush1.msra.mxu0 0.0
  %1172 = vmatprep.subr.mxu0 0.0
  %1173 = vmatpush1.msra.mxu0 0.0
  %1174 = vmatprep.subr.mxu0 0.0
  %1175 = vmatpush1.msra.mxu0 0.0
  %1176 = vmatprep.subr.mxu0 0.0
  %1177 = vmatpush1.msra.mxu0 0.0
  %1178 = vmatprep.subr.mxu0 0.0
  %1179 = vmatpush1.msra.mxu0 0.0
  %1180 = vmatprep.subr.mxu0 0.0
  %1181 = vmatpush1.msra.mxu0 0.0
  %1182 = vmatprep.subr.mxu0 0.0
  %1183 = vmatpush1.msra.mxu0 0.0
  %1184 = vmatprep.subr.mxu0 0.0
  %1185 = vmatpush1.msra.mxu0 0.0
  %1186 = vmatprep.subr.mxu0 0.0
  %1187 = vmatpush1.msra.mxu0 0.0
  %1188 = vmatprep.subr.mxu0 0.0
  %1189 = vmatpush1.msra.mxu0 0.0
  %1190 = vmatprep.subr.mxu0 0.0
  %1191 = vmatpush1.msra.mxu0 0.0
  %1192 = vmatprep.subr.mxu0 0.0
  %1193 = vmatpush1.msra.mxu0 0.0
  %1194 = vmatprep.subr.mxu0 0.0
  %1195 = vmatpush1.msra.mxu0 0.0
  %1196 = vmatprep.subr.mxu0 0.0
  %1197 = vmatpush1.msra.mxu0 0.0
  %1198 = vmatprep.subr.mxu0 0.0
  %1199 = vmatpush1.msra.mxu0 0.0
  %1200 = vmatprep.mubr.f32.mxu0 0.0
  %1201 = vmatmul.mubr.f32.gmra.mrb[0].mxu0 %v1134
  %v1202 = vpop.f32.mrb[0].mxu0
  %v1203 = vadd.f32 %v283, %v1202
  %v1204 = vpop.f32.mrb[0].mxu0
  %1205 = vdwg.mxu0
  %v1206 = vadd.f32 %v1133, %v1203
  %v1207 = vxor.u32 %v1206, 2147483648
  %v1208 = vmul.f32 %v1207, 1.442695
  %v1209 = vpow.pop %v1208
  %v1210 = vadd.f32 %v1209, 1.0
  %v1211 = vrcp.pop %v1210
  %v1212 = vmul.f32 1.0, %v1211
  %1214 = vrot.lane.b32.xlu0 %v1203, 64
  %v1215 = vpop.permute.xlu0 %1214
  %v1217 = vmul.f32 %v1212, %v1215
  %1219 = vrot.lane.b32.xlu0 %v1217, 64
  %v1220 = vpop.permute.xlu0 %1219
  %v1222 = vadd.f32 %v1133, %v1220
  %v1223 = vtanh.pop %v1222
  %v1224 = vsub.f32 1.0, %v1212
  %1226 = vrot.lane.b32.xlu0 %v1223, 96
  %v1227 = vpop.permute.xlu0 %1226
  %v1229 = vmul.f32 %v1224, %v1227
  %v1230 = vmul.f32 %v1212, %v1125
  %v1231 = vadd.f32 %v1229, %v1230
  %1233 = vrot.lane.b32.xlu0 %v1231, 96
  %v1234 = vpop.permute.xlu0 %1233
  %s1236 = scalar_lea.vmem [#allocation3], 64
  %1237 = vst.msk [vmem:[%s1236] sm:$0xff] %vm285, %v1234
  %s1238 = scalar_lea.vmem [#allocation2], 72
  %v1239 = vld [vmem:[%s1238] sm:$0xff]
  %v1240 = vsel %vm285, %v1234, 0
  %1242 = vmatprep.subr.mxu0 0.0
  %1243 = vmatpush1.msra.mxu0 %v273
  %1244 = vmatprep.subr.mxu0 0.0
  %1245 = vmatpush1.msra.mxu0 %v274
  %1246 = vmatprep.subr.mxu0 0.0
  %1247 = vmatpush1.msra.mxu0 %v275
  %1248 = vmatprep.subr.mxu0 0.0
  %1249 = vmatpush1.msra.mxu0 %v276
  %1250 = vmatprep.subr.mxu0 0.0
  %1251 = vmatpush1.msra.mxu0 0.0
  %1252 = vmatprep.subr.mxu0 0.0
  %1253 = vmatpush1.msra.mxu0 0.0
  %1254 = vmatprep.subr.mxu0 0.0
  %1255 = vmatpush1.msra.mxu0 0.0
  %1256 = vmatprep.subr.mxu0 0.0
  %1257 = vmatpush1.msra.mxu0 0.0
  %1258 = vmatprep.subr.mxu0 0.0
  %1259 = vmatpush1.msra.mxu0 0.0
  %1260 = vmatprep.subr.mxu0 0.0
  %1261 = vmatpush1.msra.mxu0 0.0
  %1262 = vmatprep.subr.mxu0 0.0
  %1263 = vmatpush1.msra.mxu0 0.0
  %1264 = vmatprep.subr.mxu0 0.0
  %1265 = vmatpush1.msra.mxu0 0.0
  %1266 = vmatprep.subr.mxu0 0.0
  %1267 = vmatpush1.msra.mxu0 0.0
  %1268 = vmatprep.subr.mxu0 0.0
  %1269 = vmatpush1.msra.mxu0 0.0
  %1270 = vmatprep.subr.mxu0 0.0
  %1271 = vmatpush1.msra.mxu0 0.0
  %1272 = vmatprep.subr.mxu0 0.0
  %1273 = vmatpush1.msra.mxu0 0.0
  %1274 = vmatprep.subr.mxu0 0.0
  %1275 = vmatpush1.msra.mxu0 0.0
  %1276 = vmatprep.subr.mxu0 0.0
  %1277 = vmatpush1.msra.mxu0 0.0
  %1278 = vmatprep.subr.mxu0 0.0
  %1279 = vmatpush1.msra.mxu0 0.0
  %1280 = vmatprep.subr.mxu0 0.0
  %1281 = vmatpush1.msra.mxu0 0.0
  %1282 = vmatprep.subr.mxu0 0.0
  %1283 = vmatpush1.msra.mxu0 0.0
  %1284 = vmatprep.subr.mxu0 0.0
  %1285 = vmatpush1.msra.mxu0 0.0
  %1286 = vmatprep.subr.mxu0 0.0
  %1287 = vmatpush1.msra.mxu0 0.0
  %1288 = vmatprep.subr.mxu0 0.0
  %1289 = vmatpush1.msra.mxu0 0.0
  %1290 = vmatprep.subr.mxu0 0.0
  %1291 = vmatpush1.msra.mxu0 0.0
  %1292 = vmatprep.subr.mxu0 0.0
  %1293 = vmatpush1.msra.mxu0 0.0
  %1294 = vmatprep.subr.mxu0 0.0
  %1295 = vmatpush1.msra.mxu0 0.0
  %1296 = vmatprep.subr.mxu0 0.0
  %1297 = vmatpush1.msra.mxu0 0.0
  %1298 = vmatprep.subr.mxu0 0.0
  %1299 = vmatpush1.msra.mxu0 0.0
  %1300 = vmatprep.subr.mxu0 0.0
  %1301 = vmatpush1.msra.mxu0 0.0
  %1302 = vmatprep.subr.mxu0 0.0
  %1303 = vmatpush1.msra.mxu0 0.0
  %1304 = vmatprep.subr.mxu0 0.0
  %1305 = vmatpush1.msra.mxu0 0.0
  %1306 = vmatprep.mubr.f32.mxu0 0.0
  %1307 = vmatmul.mubr.f32.gmra.mrb[0].mxu0 %v1240
  %v1308 = vpop.f32.mrb[0].mxu0
  %v1309 = vadd.f32 %v283, %v1308
  %v1310 = vpop.f32.mrb[0].mxu0
  %1311 = vdwg.mxu0
  %v1312 = vadd.f32 %v1239, %v1309
  %v1313 = vxor.u32 %v1312, 2147483648
  %v1314 = vmul.f32 %v1313, 1.442695
  %v1315 = vpow.pop %v1314
  %v1316 = vadd.f32 %v1315, 1.0
  %v1317 = vrcp.pop %v1316
  %v1318 = vmul.f32 1.0, %v1317
  %1320 = vrot.lane.b32.xlu0 %v1309, 64
  %v1321 = vpop.permute.xlu0 %1320
  %v1323 = vmul.f32 %v1318, %v1321
  %1325 = vrot.lane.b32.xlu0 %v1323, 64
  %v1326 = vpop.permute.xlu0 %1325
  %v1328 = vadd.f32 %v1239, %v1326
  %v1329 = vtanh.pop %v1328
  %v1330 = vsub.f32 1.0, %v1318
  %1332 = vrot.lane.b32.xlu0 %v1329, 96
  %v1333 = vpop.permute.xlu0 %1332
  %v1335 = vmul.f32 %v1330, %v1333
  %v1336 = vmul.f32 %v1318, %v1231
  %v1337 = vadd.f32 %v1335, %v1336
  %1339 = vrot.lane.b32.xlu0 %v1337, 96
  %v1340 = vpop.permute.xlu0 %1339
  %s1342 = scalar_lea.vmem [#allocation3], 72
  %1343 = vst.msk [vmem:[%s1342] sm:$0xff] %vm285, %v1340
  %s1344 = scalar_lea.vmem [#allocation2], 80
  %v1345 = vld [vmem:[%s1344] sm:$0xff]
  %v1346 = vsel %vm285, %v1340, 0
  %1348 = vmatprep.subr.mxu0 0.0
  %1349 = vmatpush1.msra.mxu0 %v273
  %1350 = vmatprep.subr.mxu0 0.0
  %1351 = vmatpush1.msra.mxu0 %v274
  %1352 = vmatprep.subr.mxu0 0.0
  %1353 = vmatpush1.msra.mxu0 %v275
  %1354 = vmatprep.subr.mxu0 0.0
  %1355 = vmatpush1.msra.mxu0 %v276
  %1356 = vmatprep.subr.mxu0 0.0
  %1357 = vmatpush1.msra.mxu0 0.0
  %1358 = vmatprep.subr.mxu0 0.0
  %1359 = vmatpush1.msra.mxu0 0.0
  %1360 = vmatprep.subr.mxu0 0.0
  %1361 = vmatpush1.msra.mxu0 0.0
  %1362 = vmatprep.subr.mxu0 0.0
  %1363 = vmatpush1.msra.mxu0 0.0
  %1364 = vmatprep.subr.mxu0 0.0
  %1365 = vmatpush1.msra.mxu0 0.0
  %1366 = vmatprep.subr.mxu0 0.0
  %1367 = vmatpush1.msra.mxu0 0.0
  %1368 = vmatprep.subr.mxu0 0.0
  %1369 = vmatpush1.msra.mxu0 0.0
  %1370 = vmatprep.subr.mxu0 0.0
  %1371 = vmatpush1.msra.mxu0 0.0
  %1372 = vmatprep.subr.mxu0 0.0
  %1373 = vmatpush1.msra.mxu0 0.0
  %1374 = vmatprep.subr.mxu0 0.0
  %1375 = vmatpush1.msra.mxu0 0.0
  %1376 = vmatprep.subr.mxu0 0.0
  %1377 = vmatpush1.msra.mxu0 0.0
  %1378 = vmatprep.subr.mxu0 0.0
  %1379 = vmatpush1.msra.mxu0 0.0
  %1380 = vmatprep.subr.mxu0 0.0
  %1381 = vmatpush1.msra.mxu0 0.0
  %1382 = vmatprep.subr.mxu0 0.0
  %1383 = vmatpush1.msra.mxu0 0.0
  %1384 = vmatprep.subr.mxu0 0.0
  %1385 = vmatpush1.msra.mxu0 0.0
  %1386 = vmatprep.subr.mxu0 0.0
  %1387 = vmatpush1.msra.mxu0 0.0
  %1388 = vmatprep.subr.mxu0 0.0
  %1389 = vmatpush1.msra.mxu0 0.0
  %1390 = vmatprep.subr.mxu0 0.0
  %1391 = vmatpush1.msra.mxu0 0.0
  %1392 = vmatprep.subr.mxu0 0.0
  %1393 = vmatpush1.msra.mxu0 0.0
  %1394 = vmatprep.subr.mxu0 0.0
  %1395 = vmatpush1.msra.mxu0 0.0
  %1396 = vmatprep.subr.mxu0 0.0
  %1397 = vmatpush1.msra.mxu0 0.0
  %1398 = vmatprep.subr.mxu0 0.0
  %1399 = vmatpush1.msra.mxu0 0.0
  %1400 = vmatprep.subr.mxu0 0.0
  %1401 = vmatpush1.msra.mxu0 0.0
  %1402 = vmatprep.subr.mxu0 0.0
  %1403 = vmatpush1.msra.mxu0 0.0
  %1404 = vmatprep.subr.mxu0 0.0
  %1405 = vmatpush1.msra.mxu0 0.0
  %1406 = vmatprep.subr.mxu0 0.0
  %1407 = vmatpush1.msra.mxu0 0.0
  %1408 = vmatprep.subr.mxu0 0.0
  %1409 = vmatpush1.msra.mxu0 0.0
  %1410 = vmatprep.subr.mxu0 0.0
  %1411 = vmatpush1.msra.mxu0 0.0
  %1412 = vmatprep.mubr.f32.mxu0 0.0
  %1413 = vmatmul.mubr.f32.gmra.mrb[0].mxu0 %v1346
  %v1414 = vpop.f32.mrb[0].mxu0
  %v1415 = vadd.f32 %v283, %v1414
  %v1416 = vpop.f32.mrb[0].mxu0
  %1417 = vdwg.mxu0
  %v1418 = vadd.f32 %v1345, %v1415
  %v1419 = vxor.u32 %v1418, 2147483648
  %v1420 = vmul.f32 %v1419, 1.442695
  %v1421 = vpow.pop %v1420
  %v1422 = vadd.f32 %v1421, 1.0
  %v1423 = vrcp.pop %v1422
  %v1424 = vmul.f32 1.0, %v1423
  %1426 = vrot.lane.b32.xlu0 %v1415, 64
  %v1427 = vpop.permute.xlu0 %1426
  %v1429 = vmul.f32 %v1424, %v1427
  %1431 = vrot.lane.b32.xlu0 %v1429, 64
  %v1432 = vpop.permute.xlu0 %1431
  %v1434 = vadd.f32 %v1345, %v1432
  %v1435 = vtanh.pop %v1434
  %v1436 = vsub.f32 1.0, %v1424
  %1438 = vrot.lane.b32.xlu0 %v1435, 96
  %v1439 = vpop.permute.xlu0 %1438
  %v1441 = vmul.f32 %v1436, %v1439
  %v1442 = vmul.f32 %v1424, %v1337
  %v1443 = vadd.f32 %v1441, %v1442
  %1445 = vrot.lane.b32.xlu0 %v1443, 96
  %v1446 = vpop.permute.xlu0 %1445
  %s1448 = scalar_lea.vmem [#allocation3], 80
  %1449 = vst.msk [vmem:[%s1448] sm:$0xff] %vm285, %v1446
  %s1450 = scalar_lea.vmem [#allocation2], 88
  %v1451 = vld [vmem:[%s1450] sm:$0xff]
  %v1452 = vsel %vm285, %v1446, 0
  %1454 = vmatprep.subr.mxu0 0.0
  %1455 = vmatpush1.msra.mxu0 %v273
  %1456 = vmatprep.subr.mxu0 0.0
  %1457 = vmatpush1.msra.mxu0 %v274
  %1458 = vmatprep.subr.mxu0 0.0
  %1459 = vmatpush1.msra.mxu0 %v275
  %1460 = vmatprep.subr.mxu0 0.0
  %1461 = vmatpush1.msra.mxu0 %v276
  %1462 = vmatprep.subr.mxu0 0.0
  %1463 = vmatpush1.msra.mxu0 0.0
  %1464 = vmatprep.subr.mxu0 0.0
  %1465 = vmatpush1.msra.mxu0 0.0
  %1466 = vmatprep.subr.mxu0 0.0
  %1467 = vmatpush1.msra.mxu0 0.0
  %1468 = vmatprep.subr.mxu0 0.0
  %1469 = vmatpush1.msra.mxu0 0.0
  %1470 = vmatprep.subr.mxu0 0.0
  %1471 = vmatpush1.msra.mxu0 0.0
  %1472 = vmatprep.subr.mxu0 0.0
  %1473 = vmatpush1.msra.mxu0 0.0
  %1474 = vmatprep.subr.mxu0 0.0
  %1475 = vmatpush1.msra.mxu0 0.0
  %1476 = vmatprep.subr.mxu0 0.0
  %1477 = vmatpush1.msra.mxu0 0.0
  %1478 = vmatprep.subr.mxu0 0.0
  %1479 = vmatpush1.msra.mxu0 0.0
  %1480 = vmatprep.subr.mxu0 0.0
  %1481 = vmatpush1.msra.mxu0 0.0
  %1482 = vmatprep.subr.mxu0 0.0
  %1483 = vmatpush1.msra.mxu0 0.0
  %1484 = vmatprep.subr.mxu0 0.0
  %1485 = vmatpush1.msra.mxu0 0.0
  %1486 = vmatprep.subr.mxu0 0.0
  %1487 = vmatpush1.msra.mxu0 0.0
  %1488 = vmatprep.subr.mxu0 0.0
  %1489 = vmatpush1.msra.mxu0 0.0
  %1490 = vmatprep.subr.mxu0 0.0
  %1491 = vmatpush1.msra.mxu0 0.0
  %1492 = vmatprep.subr.mxu0 0.0
  %1493 = vmatpush1.msra.mxu0 0.0
  %1494 = vmatprep.subr.mxu0 0.0
  %1495 = vmatpush1.msra.mxu0 0.0
  %1496 = vmatprep.subr.mxu0 0.0
  %1497 = vmatpush1.msra.mxu0 0.0
  %1498 = vmatprep.subr.mxu0 0.0
  %1499 = vmatpush1.msra.mxu0 0.0
  %1500 = vmatprep.subr.mxu0 0.0
  %1501 = vmatpush1.msra.mxu0 0.0
  %1502 = vmatprep.subr.mxu0 0.0
  %1503 = vmatpush1.msra.mxu0 0.0
  %1504 = vmatprep.subr.mxu0 0.0
  %1505 = vmatpush1.msra.mxu0 0.0
  %1506 = vmatprep.subr.mxu0 0.0
  %1507 = vmatpush1.msra.mxu0 0.0
  %1508 = vmatprep.subr.mxu0 0.0
  %1509 = vmatpush1.msra.mxu0 0.0
  %1510 = vmatprep.subr.mxu0 0.0
  %1511 = vmatpush1.msra.mxu0 0.0
  %1512 = vmatprep.subr.mxu0 0.0
  %1513 = vmatpush1.msra.mxu0 0.0
  %1514 = vmatprep.subr.mxu0 0.0
  %1515 = vmatpush1.msra.mxu0 0.0
  %1516 = vmatprep.subr.mxu0 0.0
  %1517 = vmatpush1.msra.mxu0 0.0
  %1518 = vmatprep.mubr.f32.mxu0 0.0
  %1519 = vmatmul.mubr.f32.gmra.mrb[0].mxu0 %v1452
  %v1520 = vpop.f32.mrb[0].mxu0
  %v1521 = vadd.f32 %v283, %v1520
  %v1522 = vpop.f32.mrb[0].mxu0
  %1523 = vdwg.mxu0
  %v1524 = vadd.f32 %v1451, %v1521
  %v1525 = vxor.u32 %v1524, 2147483648
  %v1526 = vmul.f32 %v1525, 1.442695
  %v1527 = vpow.pop %v1526
  %v1528 = vadd.f32 %v1527, 1.0
  %v1529 = vrcp.pop %v1528
  %v1530 = vmul.f32 1.0, %v1529
  %1532 = vrot.lane.b32.xlu0 %v1521, 64
  %v1533 = vpop.permute.xlu0 %1532
  %v1535 = vmul.f32 %v1530, %v1533
  %1537 = vrot.lane.b32.xlu0 %v1535, 64
  %v1538 = vpop.permute.xlu0 %1537
  %v1540 = vadd.f32 %v1451, %v1538
  %v1541 = vtanh.pop %v1540
  %v1542 = vsub.f32 1.0, %v1530
  %1544 = vrot.lane.b32.xlu0 %v1541, 96
  %v1545 = vpop.permute.xlu0 %1544
  %v1547 = vmul.f32 %v1542, %v1545
  %v1548 = vmul.f32 %v1530, %v1443
  %v1549 = vadd.f32 %v1547, %v1548
  %1551 = vrot.lane.b32.xlu0 %v1549, 96
  %v1552 = vpop.permute.xlu0 %1551
  %s1554 = scalar_lea.vmem [#allocation3], 88
  %1555 = vst.msk [vmem:[%s1554] sm:$0xff] %vm285, %v1552
  %s1556 = scalar_lea.vmem [#allocation2], 96
  %v1557 = vld [vmem:[%s1556] sm:$0xff]
  %v1558 = vsel %vm285, %v1552, 0
  %1560 = vmatprep.subr.mxu0 0.0
  %1561 = vmatpush1.msra.mxu0 %v273
  %1562 = vmatprep.subr.mxu0 0.0
  %1563 = vmatpush1.msra.mxu0 %v274
  %1564 = vmatprep.subr.mxu0 0.0
  %1565 = vmatpush1.msra.mxu0 %v275
  %1566 = vmatprep.subr.mxu0 0.0
  %1567 = vmatpush1.msra.mxu0 %v276
  %1568 = vmatprep.subr.mxu0 0.0
  %1569 = vmatpush1.msra.mxu0 0.0
  %1570 = vmatprep.subr.mxu0 0.0
  %1571 = vmatpush1.msra.mxu0 0.0
  %1572 = vmatprep.subr.mxu0 0.0
  %1573 = vmatpush1.msra.mxu0 0.0
  %1574 = vmatprep.subr.mxu0 0.0
  %1575 = vmatpush1.msra.mxu0 0.0
  %1576 = vmatprep.subr.mxu0 0.0
  %1577 = vmatpush1.msra.mxu0 0.0
  %1578 = vmatprep.subr.mxu0 0.0
  %1579 = vmatpush1.msra.mxu0 0.0
  %1580 = vmatprep.subr.mxu0 0.0
  %1581 = vmatpush1.msra.mxu0 0.0
  %1582 = vmatprep.subr.mxu0 0.0
  %1583 = vmatpush1.msra.mxu0 0.0
  %1584 = vmatprep.subr.mxu0 0.0
  %1585 = vmatpush1.msra.mxu0 0.0
  %1586 = vmatprep.subr.mxu0 0.0
  %1587 = vmatpush1.msra.mxu0 0.0
  %1588 = vmatprep.subr.mxu0 0.0
  %1589 = vmatpush1.msra.mxu0 0.0
  %1590 = vmatprep.subr.mxu0 0.0
  %1591 = vmatpush1.msra.mxu0 0.0
  %1592 = vmatprep.subr.mxu0 0.0
  %1593 = vmatpush1.msra.mxu0 0.0
  %1594 = vmatprep.subr.mxu0 0.0
  %1595 = vmatpush1.msra.mxu0 0.0
  %1596 = vmatprep.subr.mxu0 0.0
  %1597 = vmatpush1.msra.mxu0 0.0
  %1598 = vmatprep.subr.mxu0 0.0
  %1599 = vmatpush1.msra.mxu0 0.0
  %1600 = vmatprep.subr.mxu0 0.0
  %1601 = vmatpush1.msra.mxu0 0.0
  %1602 = vmatprep.subr.mxu0 0.0
  %1603 = vmatpush1.msra.mxu0 0.0
  %1604 = vmatprep.subr.mxu0 0.0
  %1605 = vmatpush1.msra.mxu0 0.0
  %1606 = vmatprep.subr.mxu0 0.0
  %1607 = vmatpush1.msra.mxu0 0.0
  %1608 = vmatprep.subr.mxu0 0.0
  %1609 = vmatpush1.msra.mxu0 0.0
  %1610 = vmatprep.subr.mxu0 0.0
  %1611 = vmatpush1.msra.mxu0 0.0
  %1612 = vmatprep.subr.mxu0 0.0
  %1613 = vmatpush1.msra.mxu0 0.0
  %1614 = vmatprep.subr.mxu0 0.0
  %1615 = vmatpush1.msra.mxu0 0.0
  %1616 = vmatprep.subr.mxu0 0.0
  %1617 = vmatpush1.msra.mxu0 0.0
  %1618 = vmatprep.subr.mxu0 0.0
  %1619 = vmatpush1.msra.mxu0 0.0
  %1620 = vmatprep.subr.mxu0 0.0
  %1621 = vmatpush1.msra.mxu0 0.0
  %1622 = vmatprep.subr.mxu0 0.0
  %1623 = vmatpush1.msra.mxu0 0.0
  %1624 = vmatprep.mubr.f32.mxu0 0.0
  %1625 = vmatmul.mubr.f32.gmra.mrb[0].mxu0 %v1558
  %v1626 = vpop.f32.mrb[0].mxu0
  %v1627 = vadd.f32 %v283, %v1626
  %v1628 = vpop.f32.mrb[0].mxu0
  %1629 = vdwg.mxu0
  %v1630 = vadd.f32 %v1557, %v1627
  %v1631 = vxor.u32 %v1630, 2147483648
  %v1632 = vmul.f32 %v1631, 1.442695
  %v1633 = vpow.pop %v1632
  %v1634 = vadd.f32 %v1633, 1.0
  %v1635 = vrcp.pop %v1634
  %v1636 = vmul.f32 1.0, %v1635
  %1638 = vrot.lane.b32.xlu0 %v1627, 64
  %v1639 = vpop.permute.xlu0 %1638
  %v1641 = vmul.f32 %v1636, %v1639
  %1643 = vrot.lane.b32.xlu0 %v1641, 64
  %v1644 = vpop.permute.xlu0 %1643
  %v1646 = vadd.f32 %v1557, %v1644
  %v1647 = vtanh.pop %v1646
  %v1648 = vsub.f32 1.0, %v1636
  %1650 = vrot.lane.b32.xlu0 %v1647, 96
  %v1651 = vpop.permute.xlu0 %1650
  %v1653 = vmul.f32 %v1648, %v1651
  %v1654 = vmul.f32 %v1636, %v1549
  %v1655 = vadd.f32 %v1653, %v1654
  %1657 = vrot.lane.b32.xlu0 %v1655, 96
  %v1658 = vpop.permute.xlu0 %1657
  %s1660 = scalar_lea.vmem [#allocation3], 96
  %1661 = vst.msk [vmem:[%s1660] sm:$0xff] %vm285, %v1658
  %s1662 = scalar_lea.vmem [#allocation2], 104
  %v1663 = vld [vmem:[%s1662] sm:$0xff]
  %v1664 = vsel %vm285, %v1658, 0
  %1666 = vmatprep.subr.mxu0 0.0
  %1667 = vmatpush1.msra.mxu0 %v273
  %1668 = vmatprep.subr.mxu0 0.0
  %1669 = vmatpush1.msra.mxu0 %v274
  %1670 = vmatprep.subr.mxu0 0.0
  %1671 = vmatpush1.msra.mxu0 %v275
  %1672 = vmatprep.subr.mxu0 0.0
  %1673 = vmatpush1.msra.mxu0 %v276
  %1674 = vmatprep.subr.mxu0 0.0
  %1675 = vmatpush1.msra.mxu0 0.0
  %1676 = vmatprep.subr.mxu0 0.0
  %1677 = vmatpush1.msra.mxu0 0.0
  %1678 = vmatprep.subr.mxu0 0.0
  %1679 = vmatpush1.msra.mxu0 0.0
  %1680 = vmatprep.subr.mxu0 0.0
  %1681 = vmatpush1.msra.mxu0 0.0
  %1682 = vmatprep.subr.mxu0 0.0
  %1683 = vmatpush1.msra.mxu0 0.0
  %1684 = vmatprep.subr.mxu0 0.0
  %1685 = vmatpush1.msra.mxu0 0.0
  %1686 = vmatprep.subr.mxu0 0.0
  %1687 = vmatpush1.msra.mxu0 0.0
  %1688 = vmatprep.subr.mxu0 0.0
  %1689 = vmatpush1.msra.mxu0 0.0
  %1690 = vmatprep.subr.mxu0 0.0
  %1691 = vmatpush1.msra.mxu0 0.0
  %1692 = vmatprep.subr.mxu0 0.0
  %1693 = vmatpush1.msra.mxu0 0.0
  %1694 = vmatprep.subr.mxu0 0.0
  %1695 = vmatpush1.msra.mxu0 0.0
  %1696 = vmatprep.subr.mxu0 0.0
  %1697 = vmatpush1.msra.mxu0 0.0
  %1698 = vmatprep.subr.mxu0 0.0
  %1699 = vmatpush1.msra.mxu0 0.0
  %1700 = vmatprep.subr.mxu0 0.0
  %1701 = vmatpush1.msra.mxu0 0.0
  %1702 = vmatprep.subr.mxu0 0.0
  %1703 = vmatpush1.msra.mxu0 0.0
  %1704 = vmatprep.subr.mxu0 0.0
  %1705 = vmatpush1.msra.mxu0 0.0
  %1706 = vmatprep.subr.mxu0 0.0
  %1707 = vmatpush1.msra.mxu0 0.0
  %1708 = vmatprep.subr.mxu0 0.0
  %1709 = vmatpush1.msra.mxu0 0.0
  %1710 = vmatprep.subr.mxu0 0.0
  %1711 = vmatpush1.msra.mxu0 0.0
  %1712 = vmatprep.subr.mxu0 0.0
  %1713 = vmatpush1.msra.mxu0 0.0
  %1714 = vmatprep.subr.mxu0 0.0
  %1715 = vmatpush1.msra.mxu0 0.0
  %1716 = vmatprep.subr.mxu0 0.0
  %1717 = vmatpush1.msra.mxu0 0.0
  %1718 = vmatprep.subr.mxu0 0.0
  %1719 = vmatpush1.msra.mxu0 0.0
  %1720 = vmatprep.subr.mxu0 0.0
  %1721 = vmatpush1.msra.mxu0 0.0
  %1722 = vmatprep.subr.mxu0 0.0
  %1723 = vmatpush1.msra.mxu0 0.0
  %1724 = vmatprep.subr.mxu0 0.0
  %1725 = vmatpush1.msra.mxu0 0.0
  %1726 = vmatprep.subr.mxu0 0.0
  %1727 = vmatpush1.msra.mxu0 0.0
  %1728 = vmatprep.subr.mxu0 0.0
  %1729 = vmatpush1.msra.mxu0 0.0
  %1730 = vmatprep.mubr.f32.mxu0 0.0
  %1731 = vmatmul.mubr.f32.gmra.mrb[0].mxu0 %v1664
  %v1732 = vpop.f32.mrb[0].mxu0
  %v1733 = vadd.f32 %v283, %v1732
  %v1734 = vpop.f32.mrb[0].mxu0
  %1735 = vdwg.mxu0
  %v1736 = vadd.f32 %v1663, %v1733
  %v1737 = vxor.u32 %v1736, 2147483648
  %v1738 = vmul.f32 %v1737, 1.442695
  %v1739 = vpow.pop %v1738
  %v1740 = vadd.f32 %v1739, 1.0
  %v1741 = vrcp.pop %v1740
  %v1742 = vmul.f32 1.0, %v1741
  %1744 = vrot.lane.b32.xlu0 %v1733, 64
  %v1745 = vpop.permute.xlu0 %1744
  %v1747 = vmul.f32 %v1742, %v1745
  %1749 = vrot.lane.b32.xlu0 %v1747, 64
  %v1750 = vpop.permute.xlu0 %1749
  %v1752 = vadd.f32 %v1663, %v1750
  %v1753 = vtanh.pop %v1752
  %v1754 = vsub.f32 1.0, %v1742
  %1756 = vrot.lane.b32.xlu0 %v1753, 96
  %v1757 = vpop.permute.xlu0 %1756
  %v1759 = vmul.f32 %v1754, %v1757
  %v1760 = vmul.f32 %v1742, %v1655
  %v1761 = vadd.f32 %v1759, %v1760
  %1763 = vrot.lane.b32.xlu0 %v1761, 96
  %v1764 = vpop.permute.xlu0 %1763
  %s1766 = scalar_lea.vmem [#allocation3], 104
  %1767 = vst.msk [vmem:[%s1766] sm:$0xff] %vm285, %v1764
  %s1768 = scalar_lea.vmem [#allocation2], 112
  %v1769 = vld [vmem:[%s1768] sm:$0xff]
  %v1770 = vsel %vm285, %v1764, 0
  %1772 = vmatprep.subr.mxu0 0.0
  %1773 = vmatpush1.msra.mxu0 %v273
  %1774 = vmatprep.subr.mxu0 0.0
  %1775 = vmatpush1.msra.mxu0 %v274
  %1776 = vmatprep.subr.mxu0 0.0
  %1777 = vmatpush1.msra.mxu0 %v275
  %1778 = vmatprep.subr.mxu0 0.0
  %1779 = vmatpush1.msra.mxu0 %v276
  %1780 = vmatprep.subr.mxu0 0.0
  %1781 = vmatpush1.msra.mxu0 0.0
  %1782 = vmatprep.subr.mxu0 0.0
  %1783 = vmatpush1.msra.mxu0 0.0
  %1784 = vmatprep.subr.mxu0 0.0
  %1785 = vmatpush1.msra.mxu0 0.0
  %1786 = vmatprep.subr.mxu0 0.0
  %1787 = vmatpush1.msra.mxu0 0.0
  %1788 = vmatprep.subr.mxu0 0.0
  %1789 = vmatpush1.msra.mxu0 0.0
  %1790 = vmatprep.subr.mxu0 0.0
  %1791 = vmatpush1.msra.mxu0 0.0
  %1792 = vmatprep.subr.mxu0 0.0
  %1793 = vmatpush1.msra.mxu0 0.0
  %1794 = vmatprep.subr.mxu0 0.0
  %1795 = vmatpush1.msra.mxu0 0.0
  %1796 = vmatprep.subr.mxu0 0.0
  %1797 = vmatpush1.msra.mxu0 0.0
  %1798 = vmatprep.subr.mxu0 0.0
  %1799 = vmatpush1.msra.mxu0 0.0
  %1800 = vmatprep.subr.mxu0 0.0
  %1801 = vmatpush1.msra.mxu0 0.0
  %1802 = vmatprep.subr.mxu0 0.0
  %1803 = vmatpush1.msra.mxu0 0.0
  %1804 = vmatprep.subr.mxu0 0.0
  %1805 = vmatpush1.msra.mxu0 0.0
  %1806 = vmatprep.subr.mxu0 0.0
  %1807 = vmatpush1.msra.mxu0 0.0
  %1808 = vmatprep.subr.mxu0 0.0
  %1809 = vmatpush1.msra.mxu0 0.0
  %1810 = vmatprep.subr.mxu0 0.0
  %1811 = vmatpush1.msra.mxu0 0.0
  %1812 = vmatprep.subr.mxu0 0.0
  %1813 = vmatpush1.msra.mxu0 0.0
  %1814 = vmatprep.subr.mxu0 0.0
  %1815 = vmatpush1.msra.mxu0 0.0
  %1816 = vmatprep.subr.mxu0 0.0
  %1817 = vmatpush1.msra.mxu0 0.0
  %1818 = vmatprep.subr.mxu0 0.0
  %1819 = vmatpush1.msra.mxu0 0.0
  %1820 = vmatprep.subr.mxu0 0.0
  %1821 = vmatpush1.msra.mxu0 0.0
  %1822 = vmatprep.subr.mxu0 0.0
  %1823 = vmatpush1.msra.mxu0 0.0
  %1824 = vmatprep.subr.mxu0 0.0
  %1825 = vmatpush1.msra.mxu0 0.0
  %1826 = vmatprep.subr.mxu0 0.0
  %1827 = vmatpush1.msra.mxu0 0.0
  %1828 = vmatprep.subr.mxu0 0.0
  %1829 = vmatpush1.msra.mxu0 0.0
  %1830 = vmatprep.subr.mxu0 0.0
  %1831 = vmatpush1.msra.mxu0 0.0
  %1832 = vmatprep.subr.mxu0 0.0
  %1833 = vmatpush1.msra.mxu0 0.0
  %1834 = vmatprep.subr.mxu0 0.0
  %1835 = vmatpush1.msra.mxu0 0.0
  %1836 = vmatprep.mubr.f32.mxu0 0.0
  %1837 = vmatmul.mubr.f32.gmra.mrb[0].mxu0 %v1770
  %v1838 = vpop.f32.mrb[0].mxu0
  %v1839 = vadd.f32 %v283, %v1838
  %v1840 = vpop.f32.mrb[0].mxu0
  %1841 = vdwg.mxu0
  %v1842 = vadd.f32 %v1769, %v1839
  %v1843 = vxor.u32 %v1842, 2147483648
  %v1844 = vmul.f32 %v1843, 1.442695
  %v1845 = vpow.pop %v1844
  %v1846 = vadd.f32 %v1845, 1.0
  %v1847 = vrcp.pop %v1846
  %v1848 = vmul.f32 1.0, %v1847
  %1850 = vrot.lane.b32.xlu0 %v1839, 64
  %v1851 = vpop.permute.xlu0 %1850
  %v1853 = vmul.f32 %v1848, %v1851
  %1855 = vrot.lane.b32.xlu0 %v1853, 64
  %v1856 = vpop.permute.xlu0 %1855
  %v1858 = vadd.f32 %v1769, %v1856
  %v1859 = vtanh.pop %v1858
  %v1860 = vsub.f32 1.0, %v1848
  %1862 = vrot.lane.b32.xlu0 %v1859, 96
  %v1863 = vpop.permute.xlu0 %1862
  %v1865 = vmul.f32 %v1860, %v1863
  %v1866 = vmul.f32 %v1848, %v1761
  %v1867 = vadd.f32 %v1865, %v1866
  %1869 = vrot.lane.b32.xlu0 %v1867, 96
  %v1870 = vpop.permute.xlu0 %1869
  %s1872 = scalar_lea.vmem [#allocation3], 112
  %1873 = vst.msk [vmem:[%s1872] sm:$0xff] %vm285, %v1870
  %s1874 = scalar_lea.vmem [#allocation2], 120
  %v1875 = vld [vmem:[%s1874] sm:$0xff]
  %v1876 = vsel %vm285, %v1870, 0
  %1878 = vmatprep.subr.mxu0 0.0
  %1879 = vmatpush1.msra.mxu0 %v273
  %1880 = vmatprep.subr.mxu0 0.0
  %1881 = vmatpush1.msra.mxu0 %v274
  %1882 = vmatprep.subr.mxu0 0.0
  %1883 = vmatpush1.msra.mxu0 %v275
  %1884 = vmatprep.subr.mxu0 0.0
  %1885 = vmatpush1.msra.mxu0 %v276
  %1886 = vmatprep.subr.mxu0 0.0
  %1887 = vmatpush1.msra.mxu0 0.0
  %1888 = vmatprep.subr.mxu0 0.0
  %1889 = vmatpush1.msra.mxu0 0.0
  %1890 = vmatprep.subr.mxu0 0.0
  %1891 = vmatpush1.msra.mxu0 0.0
  %1892 = vmatprep.subr.mxu0 0.0
  %1893 = vmatpush1.msra.mxu0 0.0
  %1894 = vmatprep.subr.mxu0 0.0
  %1895 = vmatpush1.msra.mxu0 0.0
  %1896 = vmatprep.subr.mxu0 0.0
  %1897 = vmatpush1.msra.mxu0 0.0
  %1898 = vmatprep.subr.mxu0 0.0
  %1899 = vmatpush1.msra.mxu0 0.0
  %1900 = vmatprep.subr.mxu0 0.0
  %1901 = vmatpush1.msra.mxu0 0.0
  %1902 = vmatprep.subr.mxu0 0.0
  %1903 = vmatpush1.msra.mxu0 0.0
  %1904 = vmatprep.subr.mxu0 0.0
  %1905 = vmatpush1.msra.mxu0 0.0
  %1906 = vmatprep.subr.mxu0 0.0
  %1907 = vmatpush1.msra.mxu0 0.0
  %1908 = vmatprep.subr.mxu0 0.0
  %1909 = vmatpush1.msra.mxu0 0.0
  %1910 = vmatprep.subr.mxu0 0.0
  %1911 = vmatpush1.msra.mxu0 0.0
  %1912 = vmatprep.subr.mxu0 0.0
  %1913 = vmatpush1.msra.mxu0 0.0
  %1914 = vmatprep.subr.mxu0 0.0
  %1915 = vmatpush1.msra.mxu0 0.0
  %1916 = vmatprep.subr.mxu0 0.0
  %1917 = vmatpush1.msra.mxu0 0.0
  %1918 = vmatprep.subr.mxu0 0.0
  %1919 = vmatpush1.msra.mxu0 0.0
  %1920 = vmatprep.subr.mxu0 0.0
  %1921 = vmatpush1.msra.mxu0 0.0
  %1922 = vmatprep.subr.mxu0 0.0
  %1923 = vmatpush1.msra.mxu0 0.0
  %1924 = vmatprep.subr.mxu0 0.0
  %1925 = vmatpush1.msra.mxu0 0.0
  %1926 = vmatprep.subr.mxu0 0.0
  %1927 = vmatpush1.msra.mxu0 0.0
  %1928 = vmatprep.subr.mxu0 0.0
  %1929 = vmatpush1.msra.mxu0 0.0
  %1930 = vmatprep.subr.mxu0 0.0
  %1931 = vmatpush1.msra.mxu0 0.0
  %1932 = vmatprep.subr.mxu0 0.0
  %1933 = vmatpush1.msra.mxu0 0.0
  %1934 = vmatprep.subr.mxu0 0.0
  %1935 = vmatpush1.msra.mxu0 0.0
  %1936 = vmatprep.subr.mxu0 0.0
  %1937 = vmatpush1.msra.mxu0 0.0
  %1938 = vmatprep.subr.mxu0 0.0
  %1939 = vmatpush1.msra.mxu0 0.0
  %1940 = vmatprep.subr.mxu0 0.0
  %1941 = vmatpush1.msra.mxu0 0.0
  %1942 = vmatprep.mubr.f32.mxu0 0.0
  %1943 = vmatmul.mubr.f32.gmra.mrb[0].mxu0 %v1876
  %v1944 = vpop.f32.mrb[0].mxu0
  %v1945 = vadd.f32 %v283, %v1944
  %v1946 = vpop.f32.mrb[0].mxu0
  %1947 = vdwg.mxu0
  %v1948 = vadd.f32 %v1875, %v1945
  %v1949 = vxor.u32 %v1948, 2147483648
  %v1950 = vmul.f32 %v1949, 1.442695
  %v1951 = vpow.pop %v1950
  %v1952 = vadd.f32 %v1951, 1.0
  %v1953 = vrcp.pop %v1952
  %v1954 = vmul.f32 1.0, %v1953
  %1956 = vrot.lane.b32.xlu0 %v1945, 64
  %v1957 = vpop.permute.xlu0 %1956
  %v1959 = vmul.f32 %v1954, %v1957
  %1961 = vrot.lane.b32.xlu0 %v1959, 64
  %v1962 = vpop.permute.xlu0 %1961
  %v1964 = vadd.f32 %v1875, %v1962
  %v1965 = vtanh.pop %v1964
  %v1966 = vsub.f32 1.0, %v1954
  %1968 = vrot.lane.b32.xlu0 %v1965, 96
  %v1969 = vpop.permute.xlu0 %1968
  %v1971 = vmul.f32 %v1966, %v1969
  %v1972 = vmul.f32 %v1954, %v1867
  %v1973 = vadd.f32 %v1971, %v1972
  %1975 = vrot.lane.b32.xlu0 %v1973, 96
  %v1976 = vpop.permute.xlu0 %1975
  %s1978 = scalar_lea.vmem [#allocation3], 120
  %1979 = vst.msk [vmem:[%s1978] sm:$0xff] %vm285, %v1976
  %v1980 = vld [vmem:[#allocation3] sm:$0xff]
  %v1981 = vld [vmem:[#allocation3 + $0x8] sm:$0xff]
  %v1982 = vld [vmem:[#allocation3 + $0x10] sm:$0xff]
  %v1983 = vld [vmem:[#allocation3 + $0x18] sm:$0xff]
  %v1984 = vld [vmem:[#allocation3 + $0x20] sm:$0xff]
  %v1985 = vld [vmem:[#allocation3 + $0x28] sm:$0xff]
  %v1986 = vld [vmem:[#allocation3 + $0x30] sm:$0xff]
  %v1987 = vld [vmem:[#allocation3 + $0x38] sm:$0xff]
  %v1988 = vld [vmem:[#allocation3 + $0x40] sm:$0xff]
  %v1989 = vld [vmem:[#allocation3 + $0x48] sm:$0xff]
  %v1990 = vld [vmem:[#allocation3 + $0x50] sm:$0xff]
  %v1991 = vld [vmem:[#allocation3 + $0x58] sm:$0xff]
  %v1992 = vld [vmem:[#allocation3 + $0x60] sm:$0xff]
  %v1993 = vld [vmem:[#allocation3 + $0x68] sm:$0xff]
  %v1994 = vld [vmem:[#allocation3 + $0x70] sm:$0xff]
  %v1995 = vld [vmem:[#allocation3 + $0x78] sm:$0xff]
  %v1996 = vld [vmem:[%s5] sm:$0xff]
  %v1997 = vld [vmem:[%s5 + $0x8] sm:$0xff]
  %v1998 = vld [vmem:[%s5 + $0x10] sm:$0xff]
  %v1999 = vld [vmem:[%s5 + $0x18] sm:$0xff]
  %v2000 = vld [vmem:[%s7] sm:$0x1]
  %v2002 = vlaneseq
  %v2003 = vshrl.u32 %v2002, 7
  %v2004 = vsub.s32 0, %v2003
  %v2005 = vrot.slane %v2000, %v2004
  %v2008 = vsel %vm285, %v1980, 0
  %v2011 = vsel %vm285, %v1981, 0
  %v2014 = vsel %vm285, %v1982, 0
  %v2017 = vsel %vm285, %v1983, 0
  %v2020 = vsel %vm285, %v1984, 0
  %v2023 = vsel %vm285, %v1985, 0
  %v2026 = vsel %vm285, %v1986, 0
  %v2029 = vsel %vm285, %v1987, 0
  %v2032 = vsel %vm285, %v1988, 0
  %v2035 = vsel %vm285, %v1989, 0
  %v2038 = vsel %vm285, %v1990, 0
  %v2041 = vsel %vm285, %v1991, 0
  %v2044 = vsel %vm285, %v1992, 0
  %v2047 = vsel %vm285, %v1993, 0
  %v2050 = vsel %vm285, %v1994, 0
  %v2053 = vsel %vm285, %v1995, 0
  %2055 = vmatprep.subr.mxu0 0.0
  %2056 = vmatpush1.msra.mxu0 %v1996
  %2057 = vmatprep.subr.mxu0 0.0
  %2058 = vmatpush1.msra.mxu0 %v1997
  %2059 = vmatprep.subr.mxu0 0.0
  %2060 = vmatpush1.msra.mxu0 %v1998
  %2061 = vmatprep.subr.mxu0 0.0
  %2062 = vmatpush1.msra.mxu0 %v1999
  %2063 = vmatprep.subr.mxu0 0.0
  %2064 = vmatpush1.msra.mxu0 0.0
  %2065 = vmatprep.subr.mxu0 0.0
  %2066 = vmatpush1.msra.mxu0 0.0
  %2067 = vmatprep.subr.mxu0 0.0
  %2068 = vmatpush1.msra.mxu0 0.0
  %2069 = vmatprep.subr.mxu0 0.0
  %2070 = vmatpush1.msra.mxu0 0.0
  %2071 = vmatprep.subr.mxu0 0.0
  %2072 = vmatpush1.msra.mxu0 0.0
  %2073 = vmatprep.subr.mxu0 0.0
  %2074 = vmatpush1.msra.mxu0 0.0
  %2075 = vmatprep.subr.mxu0 0.0
  %2076 = vmatpush1.msra.mxu0 0.0
  %2077 = vmatprep.subr.mxu0 0.0
  %2078 = vmatpush1.msra.mxu0 0.0
  %2079 = vmatprep.subr.mxu0 0.0
  %2080 = vmatpush1.msra.mxu0 0.0
  %2081 = vmatprep.subr.mxu0 0.0
  %2082 = vmatpush1.msra.mxu0 0.0
  %2083 = vmatprep.subr.mxu0 0.0
  %2084 = vmatpush1.msra.mxu0 0.0
  %2085 = vmatprep.subr.mxu0 0.0
  %2086 = vmatpush1.msra.mxu0 0.0
  %2087 = vmatprep.subr.mxu0 0.0
  %2088 = vmatpush1.msra.mxu0 0.0
  %2089 = vmatprep.subr.mxu0 0.0
  %2090 = vmatpush1.msra.mxu0 0.0
  %2091 = vmatprep.subr.mxu0 0.0
  %2092 = vmatpush1.msra.mxu0 0.0
  %2093 = vmatprep.subr.mxu0 0.0
  %2094 = vmatpush1.msra.mxu0 0.0
  %2095 = vmatprep.subr.mxu0 0.0
  %2096 = vmatpush1.msra.mxu0 0.0
  %2097 = vmatprep.subr.mxu0 0.0
  %2098 = vmatpush1.msra.mxu0 0.0
  %2099 = vmatprep.subr.mxu0 0.0
  %2100 = vmatpush1.msra.mxu0 0.0
  %2101 = vmatprep.subr.mxu0 0.0
  %2102 = vmatpush1.msra.mxu0 0.0
  %2103 = vmatprep.subr.mxu0 0.0
  %2104 = vmatpush1.msra.mxu0 0.0
  %2105 = vmatprep.subr.mxu0 0.0
  %2106 = vmatpush1.msra.mxu0 0.0
  %2107 = vmatprep.subr.mxu0 0.0
  %2108 = vmatpush1.msra.mxu0 0.0
  %2109 = vmatprep.subr.mxu0 0.0
  %2110 = vmatpush1.msra.mxu0 0.0
  %2111 = vmatprep.subr.mxu0 0.0
  %2112 = vmatpush1.msra.mxu0 0.0
  %2113 = vmatprep.subr.mxu0 0.0
  %2114 = vmatpush1.msra.mxu0 0.0
  %2115 = vmatprep.subr.mxu0 0.0
  %2116 = vmatpush1.msra.mxu0 0.0
  %2117 = vmatprep.subr.mxu0 0.0
  %2118 = vmatpush1.msra.mxu0 0.0
  %2119 = vmatprep.mubr.f32.mxu0 0.0
  %2120 = vmatmul.mubr.f32.gmra.mrb[0].mxu0 %v2008
  %v2121 = vpop.f32.mrb[0].mxu0
  %v2122 = vadd.f32 %v2005, %v2121
  %v2123 = vpop.f32.mrb[0].mxu0
  %2124 = vmatprep.mubr.f32.mxu0 0.0
  %2125 = vmatmul.mubr.f32.gmra.mrb[0].mxu0 %v2011
  %v2126 = vpop.f32.mrb[0].mxu0
  %v2127 = vadd.f32 %v2005, %v2126
  %v2128 = vpop.f32.mrb[0].mxu0
  %2129 = vmatprep.mubr.f32.mxu0 0.0
  %2130 = vmatmul.mubr.f32.gmra.mrb[0].mxu0 %v2014
  %v2131 = vpop.f32.mrb[0].mxu0
  %v2132 = vadd.f32 %v2005, %v2131
  %v2133 = vpop.f32.mrb[0].mxu0
  %2134 = vmatprep.mubr.f32.mxu0 0.0
  %2135 = vmatmul.mubr.f32.gmra.mrb[0].mxu0 %v2017
  %v2136 = vpop.f32.mrb[0].mxu0
  %v2137 = vadd.f32 %v2005, %v2136
  %v2138 = vpop.f32.mrb[0].mxu0
  %2139 = vmatprep.mubr.f32.mxu0 0.0
  %2140 = vmatmul.mubr.f32.gmra.mrb[0].mxu0 %v2020
  %v2141 = vpop.f32.mrb[0].mxu0
  %v2142 = vadd.f32 %v2005, %v2141
  %v2143 = vpop.f32.mrb[0].mxu0
  %2144 = vmatprep.mubr.f32.mxu0 0.0
  %2145 = vmatmul.mubr.f32.gmra.mrb[0].mxu0 %v2023
  %v2146 = vpop.f32.mrb[0].mxu0
  %v2147 = vadd.f32 %v2005, %v2146
  %v2148 = vpop.f32.mrb[0].mxu0
  %2149 = vmatprep.mubr.f32.mxu0 0.0
  %2150 = vmatmul.mubr.f32.gmra.mrb[0].mxu0 %v2026
  %v2151 = vpop.f32.mrb[0].mxu0
  %v2152 = vadd.f32 %v2005, %v2151
  %v2153 = vpop.f32.mrb[0].mxu0
  %2154 = vmatprep.mubr.f32.mxu0 0.0
  %2155 = vmatmul.mubr.f32.gmra.mrb[0].mxu0 %v2029
  %v2156 = vpop.f32.mrb[0].mxu0
  %v2157 = vadd.f32 %v2005, %v2156
  %v2158 = vpop.f32.mrb[0].mxu0
  %2159 = vmatprep.mubr.f32.mxu0 0.0
  %2160 = vmatmul.mubr.f32.gmra.mrb[0].mxu0 %v2032
  %v2161 = vpop.f32.mrb[0].mxu0
  %v2162 = vadd.f32 %v2005, %v2161
  %v2163 = vpop.f32.mrb[0].mxu0
  %2164 = vmatprep.mubr.f32.mxu0 0.0
  %2165 = vmatmul.mubr.f32.gmra.mrb[0].mxu0 %v2035
  %v2166 = vpop.f32.mrb[0].mxu0
  %v2167 = vadd.f32 %v2005, %v2166
  %v2168 = vpop.f32.mrb[0].mxu0
  %2169 = vmatprep.mubr.f32.mxu0 0.0
  %2170 = vmatmul.mubr.f32.gmra.mrb[0].mxu0 %v2038
  %v2171 = vpop.f32.mrb[0].mxu0
  %v2172 = vadd.f32 %v2005, %v2171
  %v2173 = vpop.f32.mrb[0].mxu0
  %2174 = vmatprep.mubr.f32.mxu0 0.0
  %2175 = vmatmul.mubr.f32.gmra.mrb[0].mxu0 %v2041
  %v2176 = vpop.f32.mrb[0].mxu0
  %v2177 = vadd.f32 %v2005, %v2176
  %v2178 = vpop.f32.mrb[0].mxu0
  %2179 = vmatprep.mubr.f32.mxu0 0.0
  %2180 = vmatmul.mubr.f32.gmra.mrb[0].mxu0 %v2044
  %v2181 = vpop.f32.mrb[0].mxu0
  %v2182 = vadd.f32 %v2005, %v2181
  %v2183 = vpop.f32.mrb[0].mxu0
  %2184 = vmatprep.mubr.f32.mxu0 0.0
  %2185 = vmatmul.mubr.f32.gmra.mrb[0].mxu0 %v2047
  %v2186 = vpop.f32.mrb[0].mxu0
  %v2187 = vadd.f32 %v2005, %v2186
  %v2188 = vpop.f32.mrb[0].mxu0
  %2189 = vmatprep.mubr.f32.mxu0 0.0
  %2190 = vmatmul.mubr.f32.gmra.mrb[0].mxu0 %v2050
  %v2191 = vpop.f32.mrb[0].mxu0
  %v2192 = vadd.f32 %v2005, %v2191
  %v2193 = vpop.f32.mrb[0].mxu0
  %2194 = vmatprep.mubr.f32.mxu0 0.0
  %2195 = vmatmul.mubr.f32.gmra.mrb[0].mxu0 %v2053
  %v2196 = vpop.f32.mrb[0].mxu0
  %v2197 = vadd.f32 %v2005, %v2196
  %v2198 = vpop.f32.mrb[0].mxu0
  %2199 = vdwg.mxu0
  %2200 = vst.msk [vmem:[#allocation2] sm:$0xff] %vm256, %v2122
  %2201 = vst.msk [vmem:[#allocation2 + $0x8] sm:$0xff] %vm256, %v2127
  %2202 = vst.msk [vmem:[#allocation2 + $0x10] sm:$0xff] %vm256, %v2132
  %2203 = vst.msk [vmem:[#allocation2 + $0x18] sm:$0xff] %vm256, %v2137
  %2204 = vst.msk [vmem:[#allocation2 + $0x20] sm:$0xff] %vm256, %v2142
  %2205 = vst.msk [vmem:[#allocation2 + $0x28] sm:$0xff] %vm256, %v2147
  %2206 = vst.msk [vmem:[#allocation2 + $0x30] sm:$0xff] %vm256, %v2152
  %2207 = vst.msk [vmem:[#allocation2 + $0x38] sm:$0xff] %vm256, %v2157
  %2208 = vst.msk [vmem:[#allocation2 + $0x40] sm:$0xff] %vm256, %v2162
  %2209 = vst.msk [vmem:[#allocation2 + $0x48] sm:$0xff] %vm256, %v2167
  %2210 = vst.msk [vmem:[#allocation2 + $0x50] sm:$0xff] %vm256, %v2172
  %2211 = vst.msk [vmem:[#allocation2 + $0x58] sm:$0xff] %vm256, %v2177
  %2212 = vst.msk [vmem:[#allocation2 + $0x60] sm:$0xff] %vm256, %v2182
  %2213 = vst.msk [vmem:[#allocation2 + $0x68] sm:$0xff] %vm256, %v2187
  %2214 = vst.msk [vmem:[#allocation2 + $0x70] sm:$0xff] %vm256, %v2192
  %2215 = vst.msk [vmem:[#allocation2 + $0x78] sm:$0xff] %vm256, %v2197
  %v2216 = vld [vmem:[%s6] sm:$0xff]
  %v2217 = vld [vmem:[%s6 + $0x8] sm:$0xff]
  %v2218 = vld [vmem:[%s6 + $0x10] sm:$0xff]
  %v2219 = vld [vmem:[%s6 + $0x18] sm:$0xff]
  %v2220 = vld [vmem:[%s8] sm:$0x1]
  %v2221 = vld [vmem:[#allocation2] sm:$0xff]
  %v2223 = vlaneseq
  %v2224 = vshrl.u32 %v2223, 7
  %v2225 = vsub.s32 0, %v2224
  %v2226 = vrot.slane %v2220, %v2225
  %2228 = vmatprep.subr.mxu0 0.0
  %2229 = vmatpush1.msra.mxu0 %v2216
  %2230 = vmatprep.subr.mxu0 0.0
  %2231 = vmatpush1.msra.mxu0 %v2217
  %2232 = vmatprep.subr.mxu0 0.0
  %2233 = vmatpush1.msra.mxu0 %v2218
  %2234 = vmatprep.subr.mxu0 0.0
  %2235 = vmatpush1.msra.mxu0 %v2219
  %2236 = vmatprep.subr.mxu0 0.0
  %2237 = vmatpush1.msra.mxu0 0.0
  %2238 = vmatprep.subr.mxu0 0.0
  %2239 = vmatpush1.msra.mxu0 0.0
  %2240 = vmatprep.subr.mxu0 0.0
  %2241 = vmatpush1.msra.mxu0 0.0
  %2242 = vmatprep.subr.mxu0 0.0
  %2243 = vmatpush1.msra.mxu0 0.0
  %2244 = vmatprep.subr.mxu0 0.0
  %2245 = vmatpush1.msra.mxu0 0.0
  %2246 = vmatprep.subr.mxu0 0.0
  %2247 = vmatpush1.msra.mxu0 0.0
  %2248 = vmatprep.subr.mxu0 0.0
  %2249 = vmatpush1.msra.mxu0 0.0
  %2250 = vmatprep.subr.mxu0 0.0
  %2251 = vmatpush1.msra.mxu0 0.0
  %2252 = vmatprep.subr.mxu0 0.0
  %2253 = vmatpush1.msra.mxu0 0.0
  %2254 = vmatprep.subr.mxu0 0.0
  %2255 = vmatpush1.msra.mxu0 0.0
  %2256 = vmatprep.subr.mxu0 0.0
  %2257 = vmatpush1.msra.mxu0 0.0
  %2258 = vmatprep.subr.mxu0 0.0
  %2259 = vmatpush1.msra.mxu0 0.0
  %2260 = vmatprep.subr.mxu0 0.0
  %2261 = vmatpush1.msra.mxu0 0.0
  %2262 = vmatprep.subr.mxu0 0.0
  %2263 = vmatpush1.msra.mxu0 0.0
  %2264 = vmatprep.subr.mxu0 0.0
  %2265 = vmatpush1.msra.mxu0 0.0
  %2266 = vmatprep.subr.mxu0 0.0
  %2267 = vmatpush1.msra.mxu0 0.0
  %2268 = vmatprep.subr.mxu0 0.0
  %2269 = vmatpush1.msra.mxu0 0.0
  %2270 = vmatprep.subr.mxu0 0.0
  %2271 = vmatpush1.msra.mxu0 0.0
  %2272 = vmatprep.subr.mxu0 0.0
  %2273 = vmatpush1.msra.mxu0 0.0
  %2274 = vmatprep.subr.mxu0 0.0
  %2275 = vmatpush1.msra.mxu0 0.0
  %2276 = vmatprep.subr.mxu0 0.0
  %2277 = vmatpush1.msra.mxu0 0.0
  %2278 = vmatprep.subr.mxu0 0.0
  %2279 = vmatpush1.msra.mxu0 0.0
  %2280 = vmatprep.subr.mxu0 0.0
  %2281 = vmatpush1.msra.mxu0 0.0
  %2282 = vmatprep.subr.mxu0 0.0
  %2283 = vmatpush1.msra.mxu0 0.0
  %2284 = vmatprep.subr.mxu0 0.0
  %2285 = vmatpush1.msra.mxu0 0.0
  %2286 = vmatprep.subr.mxu0 0.0
  %2287 = vmatpush1.msra.mxu0 0.0
  %2288 = vmatprep.subr.mxu0 0.0
  %2289 = vmatpush1.msra.mxu0 0.0
  %2290 = vmatprep.subr.mxu0 0.0
  %2291 = vmatpush1.msra.mxu0 0.0
  %2292 = vmatprep.mubr.f32.mxu0 0.0
  %2293 = vmatmul.mubr.f32.gmra.mrb[0].mxu0 %v287
  %v2294 = vpop.f32.mrb[0].mxu0
  %v2295 = vadd.f32 %v2226, %v2294
  %v2296 = vpop.f32.mrb[0].mxu0
  %2297 = vdwg.mxu0
  %v2298 = vadd.f32 %v2221, %v2295
  %v2299 = vxor.u32 %v2298, 2147483648
  %v2300 = vmul.f32 %v2299, 1.442695
  %v2301 = vpow.pop %v2300
  %v2302 = vadd.f32 %v2301, 1.0
  %v2303 = vrcp.pop %v2302
  %v2304 = vmul.f32 1.0, %v2303
  %2306 = vrot.lane.b32.xlu0 %v2295, 64
  %v2307 = vpop.permute.xlu0 %2306
  %v2309 = vmul.f32 %v2304, %v2307
  %2311 = vrot.lane.b32.xlu0 %v2309, 64
  %v2312 = vpop.permute.xlu0 %2311
  %v2314 = vadd.f32 %v2221, %v2312
  %v2315 = vtanh.pop %v2314
  %v2316 = vsub.f32 1.0, %v2304
  %2318 = vrot.lane.b32.xlu0 %v2315, 96
  %v2319 = vpop.permute.xlu0 %2318
  %v2321 = vmul.f32 %v2316, %v2319
  %v2322 = vmul.f32 %v2304, 0.0
  %v2323 = vadd.f32 %v2321, %v2322
  %v2324 = vld [vmem:[%s390] sm:$0xff]
  %2326 = vrot.lane.b32.xlu0 %v2323, 96
  %v2327 = vpop.permute.xlu0 %2326
  %v2328 = vsel %vm285, %v2327, 0
  %2330 = vmatprep.subr.mxu0 0.0
  %2331 = vmatpush1.msra.mxu0 %v2216
  %2332 = vmatprep.subr.mxu0 0.0
  %2333 = vmatpush1.msra.mxu0 %v2217
  %2334 = vmatprep.subr.mxu0 0.0
  %2335 = vmatpush1.msra.mxu0 %v2218
  %2336 = vmatprep.subr.mxu0 0.0
  %2337 = vmatpush1.msra.mxu0 %v2219
  %2338 = vmatprep.subr.mxu0 0.0
  %2339 = vmatpush1.msra.mxu0 0.0
  %2340 = vmatprep.subr.mxu0 0.0
  %2341 = vmatpush1.msra.mxu0 0.0
  %2342 = vmatprep.subr.mxu0 0.0
  %2343 = vmatpush1.msra.mxu0 0.0
  %2344 = vmatprep.subr.mxu0 0.0
  %2345 = vmatpush1.msra.mxu0 0.0
  %2346 = vmatprep.subr.mxu0 0.0
  %2347 = vmatpush1.msra.mxu0 0.0
  %2348 = vmatprep.subr.mxu0 0.0
  %2349 = vmatpush1.msra.mxu0 0.0
  %2350 = vmatprep.subr.mxu0 0.0
  %2351 = vmatpush1.msra.mxu0 0.0
  %2352 = vmatprep.subr.mxu0 0.0
  %2353 = vmatpush1.msra.mxu0 0.0
  %2354 = vmatprep.subr.mxu0 0.0
  %2355 = vmatpush1.msra.mxu0 0.0
  %2356 = vmatprep.subr.mxu0 0.0
  %2357 = vmatpush1.msra.mxu0 0.0
  %2358 = vmatprep.subr.mxu0 0.0
  %2359 = vmatpush1.msra.mxu0 0.0
  %2360 = vmatprep.subr.mxu0 0.0
  %2361 = vmatpush1.msra.mxu0 0.0
  %2362 = vmatprep.subr.mxu0 0.0
  %2363 = vmatpush1.msra.mxu0 0.0
  %2364 = vmatprep.subr.mxu0 0.0
  %2365 = vmatpush1.msra.mxu0 0.0
  %2366 = vmatprep.subr.mxu0 0.0
  %2367 = vmatpush1.msra.mxu0 0.0
  %2368 = vmatprep.subr.mxu0 0.0
  %2369 = vmatpush1.msra.mxu0 0.0
  %2370 = vmatprep.subr.mxu0 0.0
  %2371 = vmatpush1.msra.mxu0 0.0
  %2372 = vmatprep.subr.mxu0 0.0
  %2373 = vmatpush1.msra.mxu0 0.0
  %2374 = vmatprep.subr.mxu0 0.0
  %2375 = vmatpush1.msra.mxu0 0.0
  %2376 = vmatprep.subr.mxu0 0.0
  %2377 = vmatpush1.msra.mxu0 0.0
  %2378 = vmatprep.subr.mxu0 0.0
  %2379 = vmatpush1.msra.mxu0 0.0
  %2380 = vmatprep.subr.mxu0 0.0
  %2381 = vmatpush1.msra.mxu0 0.0
  %2382 = vmatprep.subr.mxu0 0.0
  %2383 = vmatpush1.msra.mxu0 0.0
  %2384 = vmatprep.subr.mxu0 0.0
  %2385 = vmatpush1.msra.mxu0 0.0
  %2386 = vmatprep.subr.mxu0 0.0
  %2387 = vmatpush1.msra.mxu0 0.0
  %2388 = vmatprep.subr.mxu0 0.0
  %2389 = vmatpush1.msra.mxu0 0.0
  %2390 = vmatprep.subr.mxu0 0.0
  %2391 = vmatpush1.msra.mxu0 0.0
  %2392 = vmatprep.subr.mxu0 0.0
  %2393 = vmatpush1.msra.mxu0 0.0
  %2394 = vmatprep.mubr.f32.mxu0 0.0
  %2395 = vmatmul.mubr.f32.gmra.mrb[0].mxu0 %v2328
  %v2396 = vpop.f32.mrb[0].mxu0
  %v2397 = vadd.f32 %v2226, %v2396
  %v2398 = vpop.f32.mrb[0].mxu0
  %2399 = vdwg.mxu0
  %v2400 = vadd.f32 %v2324, %v2397
  %v2401 = vxor.u32 %v2400, 2147483648
  %v2402 = vmul.f32 %v2401, 1.442695
  %v2403 = vpow.pop %v2402
  %v2404 = vadd.f32 %v2403, 1.0
  %v2405 = vrcp.pop %v2404
  %v2406 = vmul.f32 1.0, %v2405
  %2408 = vrot.lane.b32.xlu0 %v2397, 64
  %v2409 = vpop.permute.xlu0 %2408
  %v2411 = vmul.f32 %v2406, %v2409
  %2413 = vrot.lane.b32.xlu0 %v2411, 64
  %v2414 = vpop.permute.xlu0 %2413
  %v2416 = vadd.f32 %v2324, %v2414
  %v2417 = vtanh.pop %v2416
  %v2418 = vsub.f32 1.0, %v2406
  %2420 = vrot.lane.b32.xlu0 %v2417, 96
  %v2421 = vpop.permute.xlu0 %2420
  %v2423 = vmul.f32 %v2418, %v2421
  %v2424 = vmul.f32 %v2406, %v2323
  %v2425 = vadd.f32 %v2423, %v2424
  %v2426 = vld [vmem:[%s496] sm:$0xff]
  %2428 = vrot.lane.b32.xlu0 %v2425, 96
  %v2429 = vpop.permute.xlu0 %2428
  %v2430 = vsel %vm285, %v2429, 0
  %2432 = vmatprep.subr.mxu0 0.0
  %2433 = vmatpush1.msra.mxu0 %v2216
  %2434 = vmatprep.subr.mxu0 0.0
  %2435 = vmatpush1.msra.mxu0 %v2217
  %2436 = vmatprep.subr.mxu0 0.0
  %2437 = vmatpush1.msra.mxu0 %v2218
  %2438 = vmatprep.subr.mxu0 0.0
  %2439 = vmatpush1.msra.mxu0 %v2219
  %2440 = vmatprep.subr.mxu0 0.0
  %2441 = vmatpush1.msra.mxu0 0.0
  %2442 = vmatprep.subr.mxu0 0.0
  %2443 = vmatpush1.msra.mxu0 0.0
  %2444 = vmatprep.subr.mxu0 0.0
  %2445 = vmatpush1.msra.mxu0 0.0
  %2446 = vmatprep.subr.mxu0 0.0
  %2447 = vmatpush1.msra.mxu0 0.0
  %2448 = vmatprep.subr.mxu0 0.0
  %2449 = vmatpush1.msra.mxu0 0.0
  %2450 = vmatprep.subr.mxu0 0.0
  %2451 = vmatpush1.msra.mxu0 0.0
  %2452 = vmatprep.subr.mxu0 0.0
  %2453 = vmatpush1.msra.mxu0 0.0
  %2454 = vmatprep.subr.mxu0 0.0
  %2455 = vmatpush1.msra.mxu0 0.0
  %2456 = vmatprep.subr.mxu0 0.0
  %2457 = vmatpush1.msra.mxu0 0.0
  %2458 = vmatprep.subr.mxu0 0.0
  %2459 = vmatpush1.msra.mxu0 0.0
  %2460 = vmatprep.subr.mxu0 0.0
  %2461 = vmatpush1.msra.mxu0 0.0
  %2462 = vmatprep.subr.mxu0 0.0
  %2463 = vmatpush1.msra.mxu0 0.0
  %2464 = vmatprep.subr.mxu0 0.0
  %2465 = vmatpush1.msra.mxu0 0.0
  %2466 = vmatprep.subr.mxu0 0.0
  %2467 = vmatpush1.msra.mxu0 0.0
  %2468 = vmatprep.subr.mxu0 0.0
  %2469 = vmatpush1.msra.mxu0 0.0
  %2470 = vmatprep.subr.mxu0 0.0
  %2471 = vmatpush1.msra.mxu0 0.0
  %2472 = vmatprep.subr.mxu0 0.0
  %2473 = vmatpush1.msra.mxu0 0.0
  %2474 = vmatprep.subr.mxu0 0.0
  %2475 = vmatpush1.msra.mxu0 0.0
  %2476 = vmatprep.subr.mxu0 0.0
  %2477 = vmatpush1.msra.mxu0 0.0
  %2478 = vmatprep.subr.mxu0 0.0
  %2479 = vmatpush1.msra.mxu0 0.0
  %2480 = vmatprep.subr.mxu0 0.0
  %2481 = vmatpush1.msra.mxu0 0.0
  %2482 = vmatprep.subr.mxu0 0.0
  %2483 = vmatpush1.msra.mxu0 0.0
  %2484 = vmatprep.subr.mxu0 0.0
  %2485 = vmatpush1.msra.mxu0 0.0
  %2486 = vmatprep.subr.mxu0 0.0
  %2487 = vmatpush1.msra.mxu0 0.0
  %2488 = vmatprep.subr.mxu0 0.0
  %2489 = vmatpush1.msra.mxu0 0.0
  %2490 = vmatprep.subr.mxu0 0.0
  %2491 = vmatpush1.msra.mxu0 0.0
  %2492 = vmatprep.subr.mxu0 0.0
  %2493 = vmatpush1.msra.mxu0 0.0
  %2494 = vmatprep.subr.mxu0 0.0
  %2495 = vmatpush1.msra.mxu0 0.0
  %2496 = vmatprep.mubr.f32.mxu0 0.0
  %2497 = vmatmul.mubr.f32.gmra.mrb[0].mxu0 %v2430
  %v2498 = vpop.f32.mrb[0].mxu0
  %v2499 = vadd.f32 %v2226, %v2498
  %v2500 = vpop.f32.mrb[0].mxu0
  %2501 = vdwg.mxu0
  %v2502 = vadd.f32 %v2426, %v2499
  %v2503 = vxor.u32 %v2502, 2147483648
  %v2504 = vmul.f32 %v2503, 1.442695
  %v2505 = vpow.pop %v2504
  %v2506 = vadd.f32 %v2505, 1.0
  %v2507 = vrcp.pop %v2506
  %v2508 = vmul.f32 1.0, %v2507
  %2510 = vrot.lane.b32.xlu0 %v2499, 64
  %v2511 = vpop.permute.xlu0 %2510
  %v2513 = vmul.f32 %v2508, %v2511
  %2515 = vrot.lane.b32.xlu0 %v2513, 64
  %v2516 = vpop.permute.xlu0 %2515
  %v2518 = vadd.f32 %v2426, %v2516
  %v2519 = vtanh.pop %v2518
  %v2520 = vsub.f32 1.0, %v2508
  %2522 = vrot.lane.b32.xlu0 %v2519, 96
  %v2523 = vpop.permute.xlu0 %2522
  %v2525 = vmul.f32 %v2520, %v2523
  %v2526 = vmul.f32 %v2508, %v2425
  %v2527 = vadd.f32 %v2525, %v2526
  %v2528 = vld [vmem:[%s602] sm:$0xff]
  %2530 = vrot.lane.b32.xlu0 %v2527, 96
  %v2531 = vpop.permute.xlu0 %2530
  %v2532 = vsel %vm285, %v2531, 0
  %2534 = vmatprep.subr.mxu0 0.0
  %2535 = vmatpush1.msra.mxu0 %v2216
  %2536 = vmatprep.subr.mxu0 0.0
  %2537 = vmatpush1.msra.mxu0 %v2217
  %2538 = vmatprep.subr.mxu0 0.0
  %2539 = vmatpush1.msra.mxu0 %v2218
  %2540 = vmatprep.subr.mxu0 0.0
  %2541 = vmatpush1.msra.mxu0 %v2219
  %2542 = vmatprep.subr.mxu0 0.0
  %2543 = vmatpush1.msra.mxu0 0.0
  %2544 = vmatprep.subr.mxu0 0.0
  %2545 = vmatpush1.msra.mxu0 0.0
  %2546 = vmatprep.subr.mxu0 0.0
  %2547 = vmatpush1.msra.mxu0 0.0
  %2548 = vmatprep.subr.mxu0 0.0
  %2549 = vmatpush1.msra.mxu0 0.0
  %2550 = vmatprep.subr.mxu0 0.0
  %2551 = vmatpush1.msra.mxu0 0.0
  %2552 = vmatprep.subr.mxu0 0.0
  %2553 = vmatpush1.msra.mxu0 0.0
  %2554 = vmatprep.subr.mxu0 0.0
  %2555 = vmatpush1.msra.mxu0 0.0
  %2556 = vmatprep.subr.mxu0 0.0
  %2557 = vmatpush1.msra.mxu0 0.0
  %2558 = vmatprep.subr.mxu0 0.0
  %2559 = vmatpush1.msra.mxu0 0.0
  %2560 = vmatprep.subr.mxu0 0.0
  %2561 = vmatpush1.msra.mxu0 0.0
  %2562 = vmatprep.subr.mxu0 0.0
  %2563 = vmatpush1.msra.mxu0 0.0
  %2564 = vmatprep.subr.mxu0 0.0
  %2565 = vmatpush1.msra.mxu0 0.0
  %2566 = vmatprep.subr.mxu0 0.0
  %2567 = vmatpush1.msra.mxu0 0.0
  %2568 = vmatprep.subr.mxu0 0.0
  %2569 = vmatpush1.msra.mxu0 0.0
  %2570 = vmatprep.subr.mxu0 0.0
  %2571 = vmatpush1.msra.mxu0 0.0
  %2572 = vmatprep.subr.mxu0 0.0
  %2573 = vmatpush1.msra.mxu0 0.0
  %2574 = vmatprep.subr.mxu0 0.0
  %2575 = vmatpush1.msra.mxu0 0.0
  %2576 = vmatprep.subr.mxu0 0.0
  %2577 = vmatpush1.msra.mxu0 0.0
  %2578 = vmatprep.subr.mxu0 0.0
  %2579 = vmatpush1.msra.mxu0 0.0
  %2580 = vmatprep.subr.mxu0 0.0
  %2581 = vmatpush1.msra.mxu0 0.0
  %2582 = vmatprep.subr.mxu0 0.0
  %2583 = vmatpush1.msra.mxu0 0.0
  %2584 = vmatprep.subr.mxu0 0.0
  %2585 = vmatpush1.msra.mxu0 0.0
  %2586 = vmatprep.subr.mxu0 0.0
  %2587 = vmatpush1.msra.mxu0 0.0
  %2588 = vmatprep.subr.mxu0 0.0
  %2589 = vmatpush1.msra.mxu0 0.0
  %2590 = vmatprep.subr.mxu0 0.0
  %2591 = vmatpush1.msra.mxu0 0.0
  %2592 = vmatprep.subr.mxu0 0.0
  %2593 = vmatpush1.msra.mxu0 0.0
  %2594 = vmatprep.subr.mxu0 0.0
  %2595 = vmatpush1.msra.mxu0 0.0
  %2596 = vmatprep.subr.mxu0 0.0
  %2597 = vmatpush1.msra.mxu0 0.0
  %2598 = vmatprep.mubr.f32.mxu0 0.0
  %2599 = vmatmul.mubr.f32.gmra.mrb[0].mxu0 %v2532
  %v2600 = vpop.f32.mrb[0].mxu0
  %v2601 = vadd.f32 %v2226, %v2600
  %v2602 = vpop.f32.mrb[0].mxu0
  %2603 = vdwg.mxu0
  %v2604 = vadd.f32 %v2528, %v2601
  %v2605 = vxor.u32 %v2604, 2147483648
  %v2606 = vmul.f32 %v2605, 1.442695
  %v2607 = vpow.pop %v2606
  %v2608 = vadd.f32 %v2607, 1.0
  %v2609 = vrcp.pop %v2608
  %v2610 = vmul.f32 1.0, %v2609
  %2612 = vrot.lane.b32.xlu0 %v2601, 64
  %v2613 = vpop.permute.xlu0 %2612
  %v2615 = vmul.f32 %v2610, %v2613
  %2617 = vrot.lane.b32.xlu0 %v2615, 64
  %v2618 = vpop.permute.xlu0 %2617
  %v2620 = vadd.f32 %v2528, %v2618
  %v2621 = vtanh.pop %v2620
  %v2622 = vsub.f32 1.0, %v2610
  %2624 = vrot.lane.b32.xlu0 %v2621, 96
  %v2625 = vpop.permute.xlu0 %2624
  %v2627 = vmul.f32 %v2622, %v2625
  %v2628 = vmul.f32 %v2610, %v2527
  %v2629 = vadd.f32 %v2627, %v2628
  %v2630 = vld [vmem:[%s708] sm:$0xff]
  %2632 = vrot.lane.b32.xlu0 %v2629, 96
  %v2633 = vpop.permute.xlu0 %2632
  %v2634 = vsel %vm285, %v2633, 0
  %2636 = vmatprep.subr.mxu0 0.0
  %2637 = vmatpush1.msra.mxu0 %v2216
  %2638 = vmatprep.subr.mxu0 0.0
  %2639 = vmatpush1.msra.mxu0 %v2217
  %2640 = vmatprep.subr.mxu0 0.0
  %2641 = vmatpush1.msra.mxu0 %v2218
  %2642 = vmatprep.subr.mxu0 0.0
  %2643 = vmatpush1.msra.mxu0 %v2219
  %2644 = vmatprep.subr.mxu0 0.0
  %2645 = vmatpush1.msra.mxu0 0.0
  %2646 = vmatprep.subr.mxu0 0.0
  %2647 = vmatpush1.msra.mxu0 0.0
  %2648 = vmatprep.subr.mxu0 0.0
  %2649 = vmatpush1.msra.mxu0 0.0
  %2650 = vmatprep.subr.mxu0 0.0
  %2651 = vmatpush1.msra.mxu0 0.0
  %2652 = vmatprep.subr.mxu0 0.0
  %2653 = vmatpush1.msra.mxu0 0.0
  %2654 = vmatprep.subr.mxu0 0.0
  %2655 = vmatpush1.msra.mxu0 0.0
  %2656 = vmatprep.subr.mxu0 0.0
  %2657 = vmatpush1.msra.mxu0 0.0
  %2658 = vmatprep.subr.mxu0 0.0
  %2659 = vmatpush1.msra.mxu0 0.0
  %2660 = vmatprep.subr.mxu0 0.0
  %2661 = vmatpush1.msra.mxu0 0.0
  %2662 = vmatprep.subr.mxu0 0.0
  %2663 = vmatpush1.msra.mxu0 0.0
  %2664 = vmatprep.subr.mxu0 0.0
  %2665 = vmatpush1.msra.mxu0 0.0
  %2666 = vmatprep.subr.mxu0 0.0
  %2667 = vmatpush1.msra.mxu0 0.0
  %2668 = vmatprep.subr.mxu0 0.0
  %2669 = vmatpush1.msra.mxu0 0.0
  %2670 = vmatprep.subr.mxu0 0.0
  %2671 = vmatpush1.msra.mxu0 0.0
  %2672 = vmatprep.subr.mxu0 0.0
  %2673 = vmatpush1.msra.mxu0 0.0
  %2674 = vmatprep.subr.mxu0 0.0
  %2675 = vmatpush1.msra.mxu0 0.0
  %2676 = vmatprep.subr.mxu0 0.0
  %2677 = vmatpush1.msra.mxu0 0.0
  %2678 = vmatprep.subr.mxu0 0.0
  %2679 = vmatpush1.msra.mxu0 0.0
  %2680 = vmatprep.subr.mxu0 0.0
  %2681 = vmatpush1.msra.mxu0 0.0
  %2682 = vmatprep.subr.mxu0 0.0
  %2683 = vmatpush1.msra.mxu0 0.0
  %2684 = vmatprep.subr.mxu0 0.0
  %2685 = vmatpush1.msra.mxu0 0.0
  %2686 = vmatprep.subr.mxu0 0.0
  %2687 = vmatpush1.msra.mxu0 0.0
  %2688 = vmatprep.subr.mxu0 0.0
  %2689 = vmatpush1.msra.mxu0 0.0
  %2690 = vmatprep.subr.mxu0 0.0
  %2691 = vmatpush1.msra.mxu0 0.0
  %2692 = vmatprep.subr.mxu0 0.0
  %2693 = vmatpush1.msra.mxu0 0.0
  %2694 = vmatprep.subr.mxu0 0.0
  %2695 = vmatpush1.msra.mxu0 0.0
  %2696 = vmatprep.subr.mxu0 0.0
  %2697 = vmatpush1.msra.mxu0 0.0
  %2698 = vmatprep.subr.mxu0 0.0
  %2699 = vmatpush1.msra.mxu0 0.0
  %2700 = vmatprep.mubr.f32.mxu0 0.0
  %2701 = vmatmul.mubr.f32.gmra.mrb[0].mxu0 %v2634
  %v2702 = vpop.f32.mrb[0].mxu0
  %v2703 = vadd.f32 %v2226, %v2702
  %v2704 = vpop.f32.mrb[0].mxu0
  %2705 = vdwg.mxu0
  %v2706 = vadd.f32 %v2630, %v2703
  %v2707 = vxor.u32 %v2706, 2147483648
  %v2708 = vmul.f32 %v2707, 1.442695
  %v2709 = vpow.pop %v2708
  %v2710 = vadd.f32 %v2709, 1.0
  %v2711 = vrcp.pop %v2710
  %v2712 = vmul.f32 1.0, %v2711
  %2714 = vrot.lane.b32.xlu0 %v2703, 64
  %v2715 = vpop.permute.xlu0 %2714
  %v2717 = vmul.f32 %v2712, %v2715
  %2719 = vrot.lane.b32.xlu0 %v2717, 64
  %v2720 = vpop.permute.xlu0 %2719
  %v2722 = vadd.f32 %v2630, %v2720
  %v2723 = vtanh.pop %v2722
  %v2724 = vsub.f32 1.0, %v2712
  %2726 = vrot.lane.b32.xlu0 %v2723, 96
  %v2727 = vpop.permute.xlu0 %2726
  %v2729 = vmul.f32 %v2724, %v2727
  %v2730 = vmul.f32 %v2712, %v2629
  %v2731 = vadd.f32 %v2729, %v2730
  %v2732 = vld [vmem:[%s814] sm:$0xff]
  %2734 = vrot.lane.b32.xlu0 %v2731, 96
  %v2735 = vpop.permute.xlu0 %2734
  %v2736 = vsel %vm285, %v2735, 0
  %2738 = vmatprep.subr.mxu0 0.0
  %2739 = vmatpush1.msra.mxu0 %v2216
  %2740 = vmatprep.subr.mxu0 0.0
  %2741 = vmatpush1.msra.mxu0 %v2217
  %2742 = vmatprep.subr.mxu0 0.0
  %2743 = vmatpush1.msra.mxu0 %v2218
  %2744 = vmatprep.subr.mxu0 0.0
  %2745 = vmatpush1.msra.mxu0 %v2219
  %2746 = vmatprep.subr.mxu0 0.0
  %2747 = vmatpush1.msra.mxu0 0.0
  %2748 = vmatprep.subr.mxu0 0.0
  %2749 = vmatpush1.msra.mxu0 0.0
  %2750 = vmatprep.subr.mxu0 0.0
  %2751 = vmatpush1.msra.mxu0 0.0
  %2752 = vmatprep.subr.mxu0 0.0
  %2753 = vmatpush1.msra.mxu0 0.0
  %2754 = vmatprep.subr.mxu0 0.0
  %2755 = vmatpush1.msra.mxu0 0.0
  %2756 = vmatprep.subr.mxu0 0.0
  %2757 = vmatpush1.msra.mxu0 0.0
  %2758 = vmatprep.subr.mxu0 0.0
  %2759 = vmatpush1.msra.mxu0 0.0
  %2760 = vmatprep.subr.mxu0 0.0
  %2761 = vmatpush1.msra.mxu0 0.0
  %2762 = vmatprep.subr.mxu0 0.0
  %2763 = vmatpush1.msra.mxu0 0.0
  %2764 = vmatprep.subr.mxu0 0.0
  %2765 = vmatpush1.msra.mxu0 0.0
  %2766 = vmatprep.subr.mxu0 0.0
  %2767 = vmatpush1.msra.mxu0 0.0
  %2768 = vmatprep.subr.mxu0 0.0
  %2769 = vmatpush1.msra.mxu0 0.0
  %2770 = vmatprep.subr.mxu0 0.0
  %2771 = vmatpush1.msra.mxu0 0.0
  %2772 = vmatprep.subr.mxu0 0.0
  %2773 = vmatpush1.msra.mxu0 0.0
  %2774 = vmatprep.subr.mxu0 0.0
  %2775 = vmatpush1.msra.mxu0 0.0
  %2776 = vmatprep.subr.mxu0 0.0
  %2777 = vmatpush1.msra.mxu0 0.0
  %2778 = vmatprep.subr.mxu0 0.0
  %2779 = vmatpush1.msra.mxu0 0.0
  %2780 = vmatprep.subr.mxu0 0.0
  %2781 = vmatpush1.msra.mxu0 0.0
  %2782 = vmatprep.subr.mxu0 0.0
  %2783 = vmatpush1.msra.mxu0 0.0
  %2784 = vmatprep.subr.mxu0 0.0
  %2785 = vmatpush1.msra.mxu0 0.0
  %2786 = vmatprep.subr.mxu0 0.0
  %2787 = vmatpush1.msra.mxu0 0.0
  %2788 = vmatprep.subr.mxu0 0.0
  %2789 = vmatpush1.msra.mxu0 0.0
  %2790 = vmatprep.subr.mxu0 0.0
  %2791 = vmatpush1.msra.mxu0 0.0
  %2792 = vmatprep.subr.mxu0 0.0
  %2793 = vmatpush1.msra.mxu0 0.0
  %2794 = vmatprep.subr.mxu0 0.0
  %2795 = vmatpush1.msra.mxu0 0.0
  %2796 = vmatprep.subr.mxu0 0.0
  %2797 = vmatpush1.msra.mxu0 0.0
  %2798 = vmatprep.subr.mxu0 0.0
  %2799 = vmatpush1.msra.mxu0 0.0
  %2800 = vmatprep.subr.mxu0 0.0
  %2801 = vmatpush1.msra.mxu0 0.0
  %2802 = vmatprep.mubr.f32.mxu0 0.0
  %2803 = vmatmul.mubr.f32.gmra.mrb[0].mxu0 %v2736
  %v2804 = vpop.f32.mrb[0].mxu0
  %v2805 = vadd.f32 %v2226, %v2804
  %v2806 = vpop.f32.mrb[0].mxu0
  %2807 = vdwg.mxu0
  %v2808 = vadd.f32 %v2732, %v2805
  %v2809 = vxor.u32 %v2808, 2147483648
  %v2810 = vmul.f32 %v2809, 1.442695
  %v2811 = vpow.pop %v2810
  %v2812 = vadd.f32 %v2811, 1.0
  %v2813 = vrcp.pop %v2812
  %v2814 = vmul.f32 1.0, %v2813
  %2816 = vrot.lane.b32.xlu0 %v2805, 64
  %v2817 = vpop.permute.xlu0 %2816
  %v2819 = vmul.f32 %v2814, %v2817
  %2821 = vrot.lane.b32.xlu0 %v2819, 64
  %v2822 = vpop.permute.xlu0 %2821
  %v2824 = vadd.f32 %v2732, %v2822
  %v2825 = vtanh.pop %v2824
  %v2826 = vsub.f32 1.0, %v2814
  %2828 = vrot.lane.b32.xlu0 %v2825, 96
  %v2829 = vpop.permute.xlu0 %2828
  %v2831 = vmul.f32 %v2826, %v2829
  %v2832 = vmul.f32 %v2814, %v2731
  %v2833 = vadd.f32 %v2831, %v2832
  %v2834 = vld [vmem:[%s920] sm:$0xff]
  %2836 = vrot.lane.b32.xlu0 %v2833, 96
  %v2837 = vpop.permute.xlu0 %2836
  %v2838 = vsel %vm285, %v2837, 0
  %2840 = vmatprep.subr.mxu0 0.0
  %2841 = vmatpush1.msra.mxu0 %v2216
  %2842 = vmatprep.subr.mxu0 0.0
  %2843 = vmatpush1.msra.mxu0 %v2217
  %2844 = vmatprep.subr.mxu0 0.0
  %2845 = vmatpush1.msra.mxu0 %v2218
  %2846 = vmatprep.subr.mxu0 0.0
  %2847 = vmatpush1.msra.mxu0 %v2219
  %2848 = vmatprep.subr.mxu0 0.0
  %2849 = vmatpush1.msra.mxu0 0.0
  %2850 = vmatprep.subr.mxu0 0.0
  %2851 = vmatpush1.msra.mxu0 0.0
  %2852 = vmatprep.subr.mxu0 0.0
  %2853 = vmatpush1.msra.mxu0 0.0
  %2854 = vmatprep.subr.mxu0 0.0
  %2855 = vmatpush1.msra.mxu0 0.0
  %2856 = vmatprep.subr.mxu0 0.0
  %2857 = vmatpush1.msra.mxu0 0.0
  %2858 = vmatprep.subr.mxu0 0.0
  %2859 = vmatpush1.msra.mxu0 0.0
  %2860 = vmatprep.subr.mxu0 0.0
  %2861 = vmatpush1.msra.mxu0 0.0
  %2862 = vmatprep.subr.mxu0 0.0
  %2863 = vmatpush1.msra.mxu0 0.0
  %2864 = vmatprep.subr.mxu0 0.0
  %2865 = vmatpush1.msra.mxu0 0.0
  %2866 = vmatprep.subr.mxu0 0.0
  %2867 = vmatpush1.msra.mxu0 0.0
  %2868 = vmatprep.subr.mxu0 0.0
  %2869 = vmatpush1.msra.mxu0 0.0
  %2870 = vmatprep.subr.mxu0 0.0
  %2871 = vmatpush1.msra.mxu0 0.0
  %2872 = vmatprep.subr.mxu0 0.0
  %2873 = vmatpush1.msra.mxu0 0.0
  %2874 = vmatprep.subr.mxu0 0.0
  %2875 = vmatpush1.msra.mxu0 0.0
  %2876 = vmatprep.subr.mxu0 0.0
  %2877 = vmatpush1.msra.mxu0 0.0
  %2878 = vmatprep.subr.mxu0 0.0
  %2879 = vmatpush1.msra.mxu0 0.0
  %2880 = vmatprep.subr.mxu0 0.0
  %2881 = vmatpush1.msra.mxu0 0.0
  %2882 = vmatprep.subr.mxu0 0.0
  %2883 = vmatpush1.msra.mxu0 0.0
  %2884 = vmatprep.subr.mxu0 0.0
  %2885 = vmatpush1.msra.mxu0 0.0
  %2886 = vmatprep.subr.mxu0 0.0
  %2887 = vmatpush1.msra.mxu0 0.0
  %2888 = vmatprep.subr.mxu0 0.0
  %2889 = vmatpush1.msra.mxu0 0.0
  %2890 = vmatprep.subr.mxu0 0.0
  %2891 = vmatpush1.msra.mxu0 0.0
  %2892 = vmatprep.subr.mxu0 0.0
  %2893 = vmatpush1.msra.mxu0 0.0
  %2894 = vmatprep.subr.mxu0 0.0
  %2895 = vmatpush1.msra.mxu0 0.0
  %2896 = vmatprep.subr.mxu0 0.0
  %2897 = vmatpush1.msra.mxu0 0.0
  %2898 = vmatprep.subr.mxu0 0.0
  %2899 = vmatpush1.msra.mxu0 0.0
  %2900 = vmatprep.subr.mxu0 0.0
  %2901 = vmatpush1.msra.mxu0 0.0
  %2902 = vmatprep.subr.mxu0 0.0
  %2903 = vmatpush1.msra.mxu0 0.0
  %2904 = vmatprep.mubr.f32.mxu0 0.0
  %2905 = vmatmul.mubr.f32.gmra.mrb[0].mxu0 %v2838
  %v2906 = vpop.f32.mrb[0].mxu0
  %v2907 = vadd.f32 %v2226, %v2906
  %v2908 = vpop.f32.mrb[0].mxu0
  %2909 = vdwg.mxu0
  %v2910 = vadd.f32 %v2834, %v2907
  %v2911 = vxor.u32 %v2910, 2147483648
  %v2912 = vmul.f32 %v2911, 1.442695
  %v2913 = vpow.pop %v2912
  %v2914 = vadd.f32 %v2913, 1.0
  %v2915 = vrcp.pop %v2914
  %v2916 = vmul.f32 1.0, %v2915
  %2918 = vrot.lane.b32.xlu0 %v2907, 64
  %v2919 = vpop.permute.xlu0 %2918
  %v2921 = vmul.f32 %v2916, %v2919
  %2923 = vrot.lane.b32.xlu0 %v2921, 64
  %v2924 = vpop.permute.xlu0 %2923
  %v2926 = vadd.f32 %v2834, %v2924
  %v2927 = vtanh.pop %v2926
  %v2928 = vsub.f32 1.0, %v2916
  %2930 = vrot.lane.b32.xlu0 %v2927, 96
  %v2931 = vpop.permute.xlu0 %2930
  %v2933 = vmul.f32 %v2928, %v2931
  %v2934 = vmul.f32 %v2916, %v2833
  %v2935 = vadd.f32 %v2933, %v2934
  %v2936 = vld [vmem:[%s1026] sm:$0xff]
  %2938 = vrot.lane.b32.xlu0 %v2935, 96
  %v2939 = vpop.permute.xlu0 %2938
  %v2940 = vsel %vm285, %v2939, 0
  %2942 = vmatprep.subr.mxu0 0.0
  %2943 = vmatpush1.msra.mxu0 %v2216
  %2944 = vmatprep.subr.mxu0 0.0
  %2945 = vmatpush1.msra.mxu0 %v2217
  %2946 = vmatprep.subr.mxu0 0.0
  %2947 = vmatpush1.msra.mxu0 %v2218
  %2948 = vmatprep.subr.mxu0 0.0
  %2949 = vmatpush1.msra.mxu0 %v2219
  %2950 = vmatprep.subr.mxu0 0.0
  %2951 = vmatpush1.msra.mxu0 0.0
  %2952 = vmatprep.subr.mxu0 0.0
  %2953 = vmatpush1.msra.mxu0 0.0
  %2954 = vmatprep.subr.mxu0 0.0
  %2955 = vmatpush1.msra.mxu0 0.0
  %2956 = vmatprep.subr.mxu0 0.0
  %2957 = vmatpush1.msra.mxu0 0.0
  %2958 = vmatprep.subr.mxu0 0.0
  %2959 = vmatpush1.msra.mxu0 0.0
  %2960 = vmatprep.subr.mxu0 0.0
  %2961 = vmatpush1.msra.mxu0 0.0
  %2962 = vmatprep.subr.mxu0 0.0
  %2963 = vmatpush1.msra.mxu0 0.0
  %2964 = vmatprep.subr.mxu0 0.0
  %2965 = vmatpush1.msra.mxu0 0.0
  %2966 = vmatprep.subr.mxu0 0.0
  %2967 = vmatpush1.msra.mxu0 0.0
  %2968 = vmatprep.subr.mxu0 0.0
  %2969 = vmatpush1.msra.mxu0 0.0
  %2970 = vmatprep.subr.mxu0 0.0
  %2971 = vmatpush1.msra.mxu0 0.0
  %2972 = vmatprep.subr.mxu0 0.0
  %2973 = vmatpush1.msra.mxu0 0.0
  %2974 = vmatprep.subr.mxu0 0.0
  %2975 = vmatpush1.msra.mxu0 0.0
  %2976 = vmatprep.subr.mxu0 0.0
  %2977 = vmatpush1.msra.mxu0 0.0
  %2978 = vmatprep.subr.mxu0 0.0
  %2979 = vmatpush1.msra.mxu0 0.0
  %2980 = vmatprep.subr.mxu0 0.0
  %2981 = vmatpush1.msra.mxu0 0.0
  %2982 = vmatprep.subr.mxu0 0.0
  %2983 = vmatpush1.msra.mxu0 0.0
  %2984 = vmatprep.subr.mxu0 0.0
  %2985 = vmatpush1.msra.mxu0 0.0
  %2986 = vmatprep.subr.mxu0 0.0
  %2987 = vmatpush1.msra.mxu0 0.0
  %2988 = vmatprep.subr.mxu0 0.0
  %2989 = vmatpush1.msra.mxu0 0.0
  %2990 = vmatprep.subr.mxu0 0.0
  %2991 = vmatpush1.msra.mxu0 0.0
  %2992 = vmatprep.subr.mxu0 0.0
  %2993 = vmatpush1.msra.mxu0 0.0
  %2994 = vmatprep.subr.mxu0 0.0
  %2995 = vmatpush1.msra.mxu0 0.0
  %2996 = vmatprep.subr.mxu0 0.0
  %2997 = vmatpush1.msra.mxu0 0.0
  %2998 = vmatprep.subr.mxu0 0.0
  %2999 = vmatpush1.msra.mxu0 0.0
  %3000 = vmatprep.subr.mxu0 0.0
  %3001 = vmatpush1.msra.mxu0 0.0
  %3002 = vmatprep.subr.mxu0 0.0
  %3003 = vmatpush1.msra.mxu0 0.0
  %3004 = vmatprep.subr.mxu0 0.0
  %3005 = vmatpush1.msra.mxu0 0.0
  %3006 = vmatprep.mubr.f32.mxu0 0.0
  %3007 = vmatmul.mubr.f32.gmra.mrb[0].mxu0 %v2940
  %v3008 = vpop.f32.mrb[0].mxu0
  %v3009 = vadd.f32 %v2226, %v3008
  %v3010 = vpop.f32.mrb[0].mxu0
  %3011 = vdwg.mxu0
  %v3012 = vadd.f32 %v2936, %v3009
  %v3013 = vxor.u32 %v3012, 2147483648
  %v3014 = vmul.f32 %v3013, 1.442695
  %v3015 = vpow.pop %v3014
  %v3016 = vadd.f32 %v3015, 1.0
  %v3017 = vrcp.pop %v3016
  %v3018 = vmul.f32 1.0, %v3017
  %3020 = vrot.lane.b32.xlu0 %v3009, 64
  %v3021 = vpop.permute.xlu0 %3020
  %v3023 = vmul.f32 %v3018, %v3021
  %3025 = vrot.lane.b32.xlu0 %v3023, 64
  %v3026 = vpop.permute.xlu0 %3025
  %v3028 = vadd.f32 %v2936, %v3026
  %v3029 = vtanh.pop %v3028
  %v3030 = vsub.f32 1.0, %v3018
  %3032 = vrot.lane.b32.xlu0 %v3029, 96
  %v3033 = vpop.permute.xlu0 %3032
  %v3035 = vmul.f32 %v3030, %v3033
  %v3036 = vmul.f32 %v3018, %v2935
  %v3037 = vadd.f32 %v3035, %v3036
  %v3038 = vld [vmem:[%s1132] sm:$0xff]
  %3040 = vrot.lane.b32.xlu0 %v3037, 96
  %v3041 = vpop.permute.xlu0 %3040
  %v3042 = vsel %vm285, %v3041, 0
  %3044 = vmatprep.subr.mxu0 0.0
  %3045 = vmatpush1.msra.mxu0 %v2216
  %3046 = vmatprep.subr.mxu0 0.0
  %3047 = vmatpush1.msra.mxu0 %v2217
  %3048 = vmatprep.subr.mxu0 0.0
  %3049 = vmatpush1.msra.mxu0 %v2218
  %3050 = vmatprep.subr.mxu0 0.0
  %3051 = vmatpush1.msra.mxu0 %v2219
  %3052 = vmatprep.subr.mxu0 0.0
  %3053 = vmatpush1.msra.mxu0 0.0
  %3054 = vmatprep.subr.mxu0 0.0
  %3055 = vmatpush1.msra.mxu0 0.0
  %3056 = vmatprep.subr.mxu0 0.0
  %3057 = vmatpush1.msra.mxu0 0.0
  %3058 = vmatprep.subr.mxu0 0.0
  %3059 = vmatpush1.msra.mxu0 0.0
  %3060 = vmatprep.subr.mxu0 0.0
  %3061 = vmatpush1.msra.mxu0 0.0
  %3062 = vmatprep.subr.mxu0 0.0
  %3063 = vmatpush1.msra.mxu0 0.0
  %3064 = vmatprep.subr.mxu0 0.0
  %3065 = vmatpush1.msra.mxu0 0.0
  %3066 = vmatprep.subr.mxu0 0.0
  %3067 = vmatpush1.msra.mxu0 0.0
  %3068 = vmatprep.subr.mxu0 0.0
  %3069 = vmatpush1.msra.mxu0 0.0
  %3070 = vmatprep.subr.mxu0 0.0
  %3071 = vmatpush1.msra.mxu0 0.0
  %3072 = vmatprep.subr.mxu0 0.0
  %3073 = vmatpush1.msra.mxu0 0.0
  %3074 = vmatprep.subr.mxu0 0.0
  %3075 = vmatpush1.msra.mxu0 0.0
  %3076 = vmatprep.subr.mxu0 0.0
  %3077 = vmatpush1.msra.mxu0 0.0
  %3078 = vmatprep.subr.mxu0 0.0
  %3079 = vmatpush1.msra.mxu0 0.0
  %3080 = vmatprep.subr.mxu0 0.0
  %3081 = vmatpush1.msra.mxu0 0.0
  %3082 = vmatprep.subr.mxu0 0.0
  %3083 = vmatpush1.msra.mxu0 0.0
  %3084 = vmatprep.subr.mxu0 0.0
  %3085 = vmatpush1.msra.mxu0 0.0
  %3086 = vmatprep.subr.mxu0 0.0
  %3087 = vmatpush1.msra.mxu0 0.0
  %3088 = vmatprep.subr.mxu0 0.0
  %3089 = vmatpush1.msra.mxu0 0.0
  %3090 = vmatprep.subr.mxu0 0.0
  %3091 = vmatpush1.msra.mxu0 0.0
  %3092 = vmatprep.subr.mxu0 0.0
  %3093 = vmatpush1.msra.mxu0 0.0
  %3094 = vmatprep.subr.mxu0 0.0
  %3095 = vmatpush1.msra.mxu0 0.0
  %3096 = vmatprep.subr.mxu0 0.0
  %3097 = vmatpush1.msra.mxu0 0.0
  %3098 = vmatprep.subr.mxu0 0.0
  %3099 = vmatpush1.msra.mxu0 0.0
  %3100 = vmatprep.subr.mxu0 0.0
  %3101 = vmatpush1.msra.mxu0 0.0
  %3102 = vmatprep.subr.mxu0 0.0
  %3103 = vmatpush1.msra.mxu0 0.0
  %3104 = vmatprep.subr.mxu0 0.0
  %3105 = vmatpush1.msra.mxu0 0.0
  %3106 = vmatprep.subr.mxu0 0.0
  %3107 = vmatpush1.msra.mxu0 0.0
  %3108 = vmatprep.mubr.f32.mxu0 0.0
  %3109 = vmatmul.mubr.f32.gmra.mrb[0].mxu0 %v3042
  %v3110 = vpop.f32.mrb[0].mxu0
  %v3111 = vadd.f32 %v2226, %v3110
  %v3112 = vpop.f32.mrb[0].mxu0
  %3113 = vdwg.mxu0
  %v3114 = vadd.f32 %v3038, %v3111
  %v3115 = vxor.u32 %v3114, 2147483648
  %v3116 = vmul.f32 %v3115, 1.442695
  %v3117 = vpow.pop %v3116
  %v3118 = vadd.f32 %v3117, 1.0
  %v3119 = vrcp.pop %v3118
  %v3120 = vmul.f32 1.0, %v3119
  %3122 = vrot.lane.b32.xlu0 %v3111, 64
  %v3123 = vpop.permute.xlu0 %3122
  %v3125 = vmul.f32 %v3120, %v3123
  %3127 = vrot.lane.b32.xlu0 %v3125, 64
  %v3128 = vpop.permute.xlu0 %3127
  %v3130 = vadd.f32 %v3038, %v3128
  %v3131 = vtanh.pop %v3130
  %v3132 = vsub.f32 1.0, %v3120
  %3134 = vrot.lane.b32.xlu0 %v3131, 96
  %v3135 = vpop.permute.xlu0 %3134
  %v3137 = vmul.f32 %v3132, %v3135
  %v3138 = vmul.f32 %v3120, %v3037
  %v3139 = vadd.f32 %v3137, %v3138
  %v3140 = vld [vmem:[%s1238] sm:$0xff]
  %3142 = vrot.lane.b32.xlu0 %v3139, 96
  %v3143 = vpop.permute.xlu0 %3142
  %v3144 = vsel %vm285, %v3143, 0
  %3146 = vmatprep.subr.mxu0 0.0
  %3147 = vmatpush1.msra.mxu0 %v2216
  %3148 = vmatprep.subr.mxu0 0.0
  %3149 = vmatpush1.msra.mxu0 %v2217
  %3150 = vmatprep.subr.mxu0 0.0
  %3151 = vmatpush1.msra.mxu0 %v2218
  %3152 = vmatprep.subr.mxu0 0.0
  %3153 = vmatpush1.msra.mxu0 %v2219
  %3154 = vmatprep.subr.mxu0 0.0
  %3155 = vmatpush1.msra.mxu0 0.0
  %3156 = vmatprep.subr.mxu0 0.0
  %3157 = vmatpush1.msra.mxu0 0.0
  %3158 = vmatprep.subr.mxu0 0.0
  %3159 = vmatpush1.msra.mxu0 0.0
  %3160 = vmatprep.subr.mxu0 0.0
  %3161 = vmatpush1.msra.mxu0 0.0
  %3162 = vmatprep.subr.mxu0 0.0
  %3163 = vmatpush1.msra.mxu0 0.0
  %3164 = vmatprep.subr.mxu0 0.0
  %3165 = vmatpush1.msra.mxu0 0.0
  %3166 = vmatprep.subr.mxu0 0.0
  %3167 = vmatpush1.msra.mxu0 0.0
  %3168 = vmatprep.subr.mxu0 0.0
  %3169 = vmatpush1.msra.mxu0 0.0
  %3170 = vmatprep.subr.mxu0 0.0
  %3171 = vmatpush1.msra.mxu0 0.0
  %3172 = vmatprep.subr.mxu0 0.0
  %3173 = vmatpush1.msra.mxu0 0.0
  %3174 = vmatprep.subr.mxu0 0.0
  %3175 = vmatpush1.msra.mxu0 0.0
  %3176 = vmatprep.subr.mxu0 0.0
  %3177 = vmatpush1.msra.mxu0 0.0
  %3178 = vmatprep.subr.mxu0 0.0
  %3179 = vmatpush1.msra.mxu0 0.0
  %3180 = vmatprep.subr.mxu0 0.0
  %3181 = vmatpush1.msra.mxu0 0.0
  %3182 = vmatprep.subr.mxu0 0.0
  %3183 = vmatpush1.msra.mxu0 0.0
  %3184 = vmatprep.subr.mxu0 0.0
  %3185 = vmatpush1.msra.mxu0 0.0
  %3186 = vmatprep.subr.mxu0 0.0
  %3187 = vmatpush1.msra.mxu0 0.0
  %3188 = vmatprep.subr.mxu0 0.0
  %3189 = vmatpush1.msra.mxu0 0.0
  %3190 = vmatprep.subr.mxu0 0.0
  %3191 = vmatpush1.msra.mxu0 0.0
  %3192 = vmatprep.subr.mxu0 0.0
  %3193 = vmatpush1.msra.mxu0 0.0
  %3194 = vmatprep.subr.mxu0 0.0
  %3195 = vmatpush1.msra.mxu0 0.0
  %3196 = vmatprep.subr.mxu0 0.0
  %3197 = vmatpush1.msra.mxu0 0.0
  %3198 = vmatprep.subr.mxu0 0.0
  %3199 = vmatpush1.msra.mxu0 0.0
  %3200 = vmatprep.subr.mxu0 0.0
  %3201 = vmatpush1.msra.mxu0 0.0
  %3202 = vmatprep.subr.mxu0 0.0
  %3203 = vmatpush1.msra.mxu0 0.0
  %3204 = vmatprep.subr.mxu0 0.0
  %3205 = vmatpush1.msra.mxu0 0.0
  %3206 = vmatprep.subr.mxu0 0.0
  %3207 = vmatpush1.msra.mxu0 0.0
  %3208 = vmatprep.subr.mxu0 0.0
  %3209 = vmatpush1.msra.mxu0 0.0
  %3210 = vmatprep.mubr.f32.mxu0 0.0
  %3211 = vmatmul.mubr.f32.gmra.mrb[0].mxu0 %v3144
  %v3212 = vpop.f32.mrb[0].mxu0
  %v3213 = vadd.f32 %v2226, %v3212
  %v3214 = vpop.f32.mrb[0].mxu0
  %3215 = vdwg.mxu0
  %v3216 = vadd.f32 %v3140, %v3213
  %v3217 = vxor.u32 %v3216, 2147483648
  %v3218 = vmul.f32 %v3217, 1.442695
  %v3219 = vpow.pop %v3218
  %v3220 = vadd.f32 %v3219, 1.0
  %v3221 = vrcp.pop %v3220
  %v3222 = vmul.f32 1.0, %v3221
  %3224 = vrot.lane.b32.xlu0 %v3213, 64
  %v3225 = vpop.permute.xlu0 %3224
  %v3227 = vmul.f32 %v3222, %v3225
  %3229 = vrot.lane.b32.xlu0 %v3227, 64
  %v3230 = vpop.permute.xlu0 %3229
  %v3232 = vadd.f32 %v3140, %v3230
  %v3233 = vtanh.pop %v3232
  %v3234 = vsub.f32 1.0, %v3222
  %3236 = vrot.lane.b32.xlu0 %v3233, 96
  %v3237 = vpop.permute.xlu0 %3236
  %v3239 = vmul.f32 %v3234, %v3237
  %v3240 = vmul.f32 %v3222, %v3139
  %v3241 = vadd.f32 %v3239, %v3240
  %v3242 = vld [vmem:[%s1344] sm:$0xff]
  %3244 = vrot.lane.b32.xlu0 %v3241, 96
  %v3245 = vpop.permute.xlu0 %3244
  %v3246 = vsel %vm285, %v3245, 0
  %3248 = vmatprep.subr.mxu0 0.0
  %3249 = vmatpush1.msra.mxu0 %v2216
  %3250 = vmatprep.subr.mxu0 0.0
  %3251 = vmatpush1.msra.mxu0 %v2217
  %3252 = vmatprep.subr.mxu0 0.0
  %3253 = vmatpush1.msra.mxu0 %v2218
  %3254 = vmatprep.subr.mxu0 0.0
  %3255 = vmatpush1.msra.mxu0 %v2219
  %3256 = vmatprep.subr.mxu0 0.0
  %3257 = vmatpush1.msra.mxu0 0.0
  %3258 = vmatprep.subr.mxu0 0.0
  %3259 = vmatpush1.msra.mxu0 0.0
  %3260 = vmatprep.subr.mxu0 0.0
  %3261 = vmatpush1.msra.mxu0 0.0
  %3262 = vmatprep.subr.mxu0 0.0
  %3263 = vmatpush1.msra.mxu0 0.0
  %3264 = vmatprep.subr.mxu0 0.0
  %3265 = vmatpush1.msra.mxu0 0.0
  %3266 = vmatprep.subr.mxu0 0.0
  %3267 = vmatpush1.msra.mxu0 0.0
  %3268 = vmatprep.subr.mxu0 0.0
  %3269 = vmatpush1.msra.mxu0 0.0
  %3270 = vmatprep.subr.mxu0 0.0
  %3271 = vmatpush1.msra.mxu0 0.0
  %3272 = vmatprep.subr.mxu0 0.0
  %3273 = vmatpush1.msra.mxu0 0.0
  %3274 = vmatprep.subr.mxu0 0.0
  %3275 = vmatpush1.msra.mxu0 0.0
  %3276 = vmatprep.subr.mxu0 0.0
  %3277 = vmatpush1.msra.mxu0 0.0
  %3278 = vmatprep.subr.mxu0 0.0
  %3279 = vmatpush1.msra.mxu0 0.0
  %3280 = vmatprep.subr.mxu0 0.0
  %3281 = vmatpush1.msra.mxu0 0.0
  %3282 = vmatprep.subr.mxu0 0.0
  %3283 = vmatpush1.msra.mxu0 0.0
  %3284 = vmatprep.subr.mxu0 0.0
  %3285 = vmatpush1.msra.mxu0 0.0
  %3286 = vmatprep.subr.mxu0 0.0
  %3287 = vmatpush1.msra.mxu0 0.0
  %3288 = vmatprep.subr.mxu0 0.0
  %3289 = vmatpush1.msra.mxu0 0.0
  %3290 = vmatprep.subr.mxu0 0.0
  %3291 = vmatpush1.msra.mxu0 0.0
  %3292 = vmatprep.subr.mxu0 0.0
  %3293 = vmatpush1.msra.mxu0 0.0
  %3294 = vmatprep.subr.mxu0 0.0
  %3295 = vmatpush1.msra.mxu0 0.0
  %3296 = vmatprep.subr.mxu0 0.0
  %3297 = vmatpush1.msra.mxu0 0.0
  %3298 = vmatprep.subr.mxu0 0.0
  %3299 = vmatpush1.msra.mxu0 0.0
  %3300 = vmatprep.subr.mxu0 0.0
  %3301 = vmatpush1.msra.mxu0 0.0
  %3302 = vmatprep.subr.mxu0 0.0
  %3303 = vmatpush1.msra.mxu0 0.0
  %3304 = vmatprep.subr.mxu0 0.0
  %3305 = vmatpush1.msra.mxu0 0.0
  %3306 = vmatprep.subr.mxu0 0.0
  %3307 = vmatpush1.msra.mxu0 0.0
  %3308 = vmatprep.subr.mxu0 0.0
  %3309 = vmatpush1.msra.mxu0 0.0
  %3310 = vmatprep.subr.mxu0 0.0
  %3311 = vmatpush1.msra.mxu0 0.0
  %3312 = vmatprep.mubr.f32.mxu0 0.0
  %3313 = vmatmul.mubr.f32.gmra.mrb[0].mxu0 %v3246
  %v3314 = vpop.f32.mrb[0].mxu0
  %v3315 = vadd.f32 %v2226, %v3314
  %v3316 = vpop.f32.mrb[0].mxu0
  %3317 = vdwg.mxu0
  %v3318 = vadd.f32 %v3242, %v3315
  %v3319 = vxor.u32 %v3318, 2147483648
  %v3320 = vmul.f32 %v3319, 1.442695
  %v3321 = vpow.pop %v3320
  %v3322 = vadd.f32 %v3321, 1.0
  %v3323 = vrcp.pop %v3322
  %v3324 = vmul.f32 1.0, %v3323
  %3326 = vrot.lane.b32.xlu0 %v3315, 64
  %v3327 = vpop.permute.xlu0 %3326
  %v3329 = vmul.f32 %v3324, %v3327
  %3331 = vrot.lane.b32.xlu0 %v3329, 64
  %v3332 = vpop.permute.xlu0 %3331
  %v3334 = vadd.f32 %v3242, %v3332
  %v3335 = vtanh.pop %v3334
  %v3336 = vsub.f32 1.0, %v3324
  %3338 = vrot.lane.b32.xlu0 %v3335, 96
  %v3339 = vpop.permute.xlu0 %3338
  %v3341 = vmul.f32 %v3336, %v3339
  %v3342 = vmul.f32 %v3324, %v3241
  %v3343 = vadd.f32 %v3341, %v3342
  %v3344 = vld [vmem:[%s1450] sm:$0xff]
  %3346 = vrot.lane.b32.xlu0 %v3343, 96
  %v3347 = vpop.permute.xlu0 %3346
  %v3348 = vsel %vm285, %v3347, 0
  %3350 = vmatprep.subr.mxu0 0.0
  %3351 = vmatpush1.msra.mxu0 %v2216
  %3352 = vmatprep.subr.mxu0 0.0
  %3353 = vmatpush1.msra.mxu0 %v2217
  %3354 = vmatprep.subr.mxu0 0.0
  %3355 = vmatpush1.msra.mxu0 %v2218
  %3356 = vmatprep.subr.mxu0 0.0
  %3357 = vmatpush1.msra.mxu0 %v2219
  %3358 = vmatprep.subr.mxu0 0.0
  %3359 = vmatpush1.msra.mxu0 0.0
  %3360 = vmatprep.subr.mxu0 0.0
  %3361 = vmatpush1.msra.mxu0 0.0
  %3362 = vmatprep.subr.mxu0 0.0
  %3363 = vmatpush1.msra.mxu0 0.0
  %3364 = vmatprep.subr.mxu0 0.0
  %3365 = vmatpush1.msra.mxu0 0.0
  %3366 = vmatprep.subr.mxu0 0.0
  %3367 = vmatpush1.msra.mxu0 0.0
  %3368 = vmatprep.subr.mxu0 0.0
  %3369 = vmatpush1.msra.mxu0 0.0
  %3370 = vmatprep.subr.mxu0 0.0
  %3371 = vmatpush1.msra.mxu0 0.0
  %3372 = vmatprep.subr.mxu0 0.0
  %3373 = vmatpush1.msra.mxu0 0.0
  %3374 = vmatprep.subr.mxu0 0.0
  %3375 = vmatpush1.msra.mxu0 0.0
  %3376 = vmatprep.subr.mxu0 0.0
  %3377 = vmatpush1.msra.mxu0 0.0
  %3378 = vmatprep.subr.mxu0 0.0
  %3379 = vmatpush1.msra.mxu0 0.0
  %3380 = vmatprep.subr.mxu0 0.0
  %3381 = vmatpush1.msra.mxu0 0.0
  %3382 = vmatprep.subr.mxu0 0.0
  %3383 = vmatpush1.msra.mxu0 0.0
  %3384 = vmatprep.subr.mxu0 0.0
  %3385 = vmatpush1.msra.mxu0 0.0
  %3386 = vmatprep.subr.mxu0 0.0
  %3387 = vmatpush1.msra.mxu0 0.0
  %3388 = vmatprep.subr.mxu0 0.0
  %3389 = vmatpush1.msra.mxu0 0.0
  %3390 = vmatprep.subr.mxu0 0.0
  %3391 = vmatpush1.msra.mxu0 0.0
  %3392 = vmatprep.subr.mxu0 0.0
  %3393 = vmatpush1.msra.mxu0 0.0
  %3394 = vmatprep.subr.mxu0 0.0
  %3395 = vmatpush1.msra.mxu0 0.0
  %3396 = vmatprep.subr.mxu0 0.0
  %3397 = vmatpush1.msra.mxu0 0.0
  %3398 = vmatprep.subr.mxu0 0.0
  %3399 = vmatpush1.msra.mxu0 0.0
  %3400 = vmatprep.subr.mxu0 0.0
  %3401 = vmatpush1.msra.mxu0 0.0
  %3402 = vmatprep.subr.mxu0 0.0
  %3403 = vmatpush1.msra.mxu0 0.0
  %3404 = vmatprep.subr.mxu0 0.0
  %3405 = vmatpush1.msra.mxu0 0.0
  %3406 = vmatprep.subr.mxu0 0.0
  %3407 = vmatpush1.msra.mxu0 0.0
  %3408 = vmatprep.subr.mxu0 0.0
  %3409 = vmatpush1.msra.mxu0 0.0
  %3410 = vmatprep.subr.mxu0 0.0
  %3411 = vmatpush1.msra.mxu0 0.0
  %3412 = vmatprep.subr.mxu0 0.0
  %3413 = vmatpush1.msra.mxu0 0.0
  %3414 = vmatprep.mubr.f32.mxu0 0.0
  %3415 = vmatmul.mubr.f32.gmra.mrb[0].mxu0 %v3348
  %v3416 = vpop.f32.mrb[0].mxu0
  %v3417 = vadd.f32 %v2226, %v3416
  %v3418 = vpop.f32.mrb[0].mxu0
  %3419 = vdwg.mxu0
  %v3420 = vadd.f32 %v3344, %v3417
  %v3421 = vxor.u32 %v3420, 2147483648
  %v3422 = vmul.f32 %v3421, 1.442695
  %v3423 = vpow.pop %v3422
  %v3424 = vadd.f32 %v3423, 1.0
  %v3425 = vrcp.pop %v3424
  %v3426 = vmul.f32 1.0, %v3425
  %3428 = vrot.lane.b32.xlu0 %v3417, 64
  %v3429 = vpop.permute.xlu0 %3428
  %v3431 = vmul.f32 %v3426, %v3429
  %3433 = vrot.lane.b32.xlu0 %v3431, 64
  %v3434 = vpop.permute.xlu0 %3433
  %v3436 = vadd.f32 %v3344, %v3434
  %v3437 = vtanh.pop %v3436
  %v3438 = vsub.f32 1.0, %v3426
  %3440 = vrot.lane.b32.xlu0 %v3437, 96
  %v3441 = vpop.permute.xlu0 %3440
  %v3443 = vmul.f32 %v3438, %v3441
  %v3444 = vmul.f32 %v3426, %v3343
  %v3445 = vadd.f32 %v3443, %v3444
  %v3446 = vld [vmem:[%s1556] sm:$0xff]
  %3448 = vrot.lane.b32.xlu0 %v3445, 96
  %v3449 = vpop.permute.xlu0 %3448
  %v3450 = vsel %vm285, %v3449, 0
  %3452 = vmatprep.subr.mxu0 0.0
  %3453 = vmatpush1.msra.mxu0 %v2216
  %3454 = vmatprep.subr.mxu0 0.0
  %3455 = vmatpush1.msra.mxu0 %v2217
  %3456 = vmatprep.subr.mxu0 0.0
  %3457 = vmatpush1.msra.mxu0 %v2218
  %3458 = vmatprep.subr.mxu0 0.0
  %3459 = vmatpush1.msra.mxu0 %v2219
  %3460 = vmatprep.subr.mxu0 0.0
  %3461 = vmatpush1.msra.mxu0 0.0
  %3462 = vmatprep.subr.mxu0 0.0
  %3463 = vmatpush1.msra.mxu0 0.0
  %3464 = vmatprep.subr.mxu0 0.0
  %3465 = vmatpush1.msra.mxu0 0.0
  %3466 = vmatprep.subr.mxu0 0.0
  %3467 = vmatpush1.msra.mxu0 0.0
  %3468 = vmatprep.subr.mxu0 0.0
  %3469 = vmatpush1.msra.mxu0 0.0
  %3470 = vmatprep.subr.mxu0 0.0
  %3471 = vmatpush1.msra.mxu0 0.0
  %3472 = vmatprep.subr.mxu0 0.0
  %3473 = vmatpush1.msra.mxu0 0.0
  %3474 = vmatprep.subr.mxu0 0.0
  %3475 = vmatpush1.msra.mxu0 0.0
  %3476 = vmatprep.subr.mxu0 0.0
  %3477 = vmatpush1.msra.mxu0 0.0
  %3478 = vmatprep.subr.mxu0 0.0
  %3479 = vmatpush1.msra.mxu0 0.0
  %3480 = vmatprep.subr.mxu0 0.0
  %3481 = vmatpush1.msra.mxu0 0.0
  %3482 = vmatprep.subr.mxu0 0.0
  %3483 = vmatpush1.msra.mxu0 0.0
  %3484 = vmatprep.subr.mxu0 0.0
  %3485 = vmatpush1.msra.mxu0 0.0
  %3486 = vmatprep.subr.mxu0 0.0
  %3487 = vmatpush1.msra.mxu0 0.0
  %3488 = vmatprep.subr.mxu0 0.0
  %3489 = vmatpush1.msra.mxu0 0.0
  %3490 = vmatprep.subr.mxu0 0.0
  %3491 = vmatpush1.msra.mxu0 0.0
  %3492 = vmatprep.subr.mxu0 0.0
  %3493 = vmatpush1.msra.mxu0 0.0
  %3494 = vmatprep.subr.mxu0 0.0
  %3495 = vmatpush1.msra.mxu0 0.0
  %3496 = vmatprep.subr.mxu0 0.0
  %3497 = vmatpush1.msra.mxu0 0.0
  %3498 = vmatprep.subr.mxu0 0.0
  %3499 = vmatpush1.msra.mxu0 0.0
  %3500 = vmatprep.subr.mxu0 0.0
  %3501 = vmatpush1.msra.mxu0 0.0
  %3502 = vmatprep.subr.mxu0 0.0
  %3503 = vmatpush1.msra.mxu0 0.0
  %3504 = vmatprep.subr.mxu0 0.0
  %3505 = vmatpush1.msra.mxu0 0.0
  %3506 = vmatprep.subr.mxu0 0.0
  %3507 = vmatpush1.msra.mxu0 0.0
  %3508 = vmatprep.subr.mxu0 0.0
  %3509 = vmatpush1.msra.mxu0 0.0
  %3510 = vmatprep.subr.mxu0 0.0
  %3511 = vmatpush1.msra.mxu0 0.0
  %3512 = vmatprep.subr.mxu0 0.0
  %3513 = vmatpush1.msra.mxu0 0.0
  %3514 = vmatprep.subr.mxu0 0.0
  %3515 = vmatpush1.msra.mxu0 0.0
  %3516 = vmatprep.mubr.f32.mxu0 0.0
  %3517 = vmatmul.mubr.f32.gmra.mrb[0].mxu0 %v3450
  %v3518 = vpop.f32.mrb[0].mxu0
  %v3519 = vadd.f32 %v2226, %v3518
  %v3520 = vpop.f32.mrb[0].mxu0
  %3521 = vdwg.mxu0
  %v3522 = vadd.f32 %v3446, %v3519
  %v3523 = vxor.u32 %v3522, 2147483648
  %v3524 = vmul.f32 %v3523, 1.442695
  %v3525 = vpow.pop %v3524
  %v3526 = vadd.f32 %v3525, 1.0
  %v3527 = vrcp.pop %v3526
  %v3528 = vmul.f32 1.0, %v3527
  %3530 = vrot.lane.b32.xlu0 %v3519, 64
  %v3531 = vpop.permute.xlu0 %3530
  %v3533 = vmul.f32 %v3528, %v3531
  %3535 = vrot.lane.b32.xlu0 %v3533, 64
  %v3536 = vpop.permute.xlu0 %3535
  %v3538 = vadd.f32 %v3446, %v3536
  %v3539 = vtanh.pop %v3538
  %v3540 = vsub.f32 1.0, %v3528
  %3542 = vrot.lane.b32.xlu0 %v3539, 96
  %v3543 = vpop.permute.xlu0 %3542
  %v3545 = vmul.f32 %v3540, %v3543
  %v3546 = vmul.f32 %v3528, %v3445
  %v3547 = vadd.f32 %v3545, %v3546
  %v3548 = vld [vmem:[%s1662] sm:$0xff]
  %3550 = vrot.lane.b32.xlu0 %v3547, 96
  %v3551 = vpop.permute.xlu0 %3550
  %v3552 = vsel %vm285, %v3551, 0
  %3554 = vmatprep.subr.mxu0 0.0
  %3555 = vmatpush1.msra.mxu0 %v2216
  %3556 = vmatprep.subr.mxu0 0.0
  %3557 = vmatpush1.msra.mxu0 %v2217
  %3558 = vmatprep.subr.mxu0 0.0
  %3559 = vmatpush1.msra.mxu0 %v2218
  %3560 = vmatprep.subr.mxu0 0.0
  %3561 = vmatpush1.msra.mxu0 %v2219
  %3562 = vmatprep.subr.mxu0 0.0
  %3563 = vmatpush1.msra.mxu0 0.0
  %3564 = vmatprep.subr.mxu0 0.0
  %3565 = vmatpush1.msra.mxu0 0.0
  %3566 = vmatprep.subr.mxu0 0.0
  %3567 = vmatpush1.msra.mxu0 0.0
  %3568 = vmatprep.subr.mxu0 0.0
  %3569 = vmatpush1.msra.mxu0 0.0
  %3570 = vmatprep.subr.mxu0 0.0
  %3571 = vmatpush1.msra.mxu0 0.0
  %3572 = vmatprep.subr.mxu0 0.0
  %3573 = vmatpush1.msra.mxu0 0.0
  %3574 = vmatprep.subr.mxu0 0.0
  %3575 = vmatpush1.msra.mxu0 0.0
  %3576 = vmatprep.subr.mxu0 0.0
  %3577 = vmatpush1.msra.mxu0 0.0
  %3578 = vmatprep.subr.mxu0 0.0
  %3579 = vmatpush1.msra.mxu0 0.0
  %3580 = vmatprep.subr.mxu0 0.0
  %3581 = vmatpush1.msra.mxu0 0.0
  %3582 = vmatprep.subr.mxu0 0.0
  %3583 = vmatpush1.msra.mxu0 0.0
  %3584 = vmatprep.subr.mxu0 0.0
  %3585 = vmatpush1.msra.mxu0 0.0
  %3586 = vmatprep.subr.mxu0 0.0
  %3587 = vmatpush1.msra.mxu0 0.0
  %3588 = vmatprep.subr.mxu0 0.0
  %3589 = vmatpush1.msra.mxu0 0.0
  %3590 = vmatprep.subr.mxu0 0.0
  %3591 = vmatpush1.msra.mxu0 0.0
  %3592 = vmatprep.subr.mxu0 0.0
  %3593 = vmatpush1.msra.mxu0 0.0
  %3594 = vmatprep.subr.mxu0 0.0
  %3595 = vmatpush1.msra.mxu0 0.0
  %3596 = vmatprep.subr.mxu0 0.0
  %3597 = vmatpush1.msra.mxu0 0.0
  %3598 = vmatprep.subr.mxu0 0.0
  %3599 = vmatpush1.msra.mxu0 0.0
  %3600 = vmatprep.subr.mxu0 0.0
  %3601 = vmatpush1.msra.mxu0 0.0
  %3602 = vmatprep.subr.mxu0 0.0
  %3603 = vmatpush1.msra.mxu0 0.0
  %3604 = vmatprep.subr.mxu0 0.0
  %3605 = vmatpush1.msra.mxu0 0.0
  %3606 = vmatprep.subr.mxu0 0.0
  %3607 = vmatpush1.msra.mxu0 0.0
  %3608 = vmatprep.subr.mxu0 0.0
  %3609 = vmatpush1.msra.mxu0 0.0
  %3610 = vmatprep.subr.mxu0 0.0
  %3611 = vmatpush1.msra.mxu0 0.0
  %3612 = vmatprep.subr.mxu0 0.0
  %3613 = vmatpush1.msra.mxu0 0.0
  %3614 = vmatprep.subr.mxu0 0.0
  %3615 = vmatpush1.msra.mxu0 0.0
  %3616 = vmatprep.subr.mxu0 0.0
  %3617 = vmatpush1.msra.mxu0 0.0
  %3618 = vmatprep.mubr.f32.mxu0 0.0
  %3619 = vmatmul.mubr.f32.gmra.mrb[0].mxu0 %v3552
  %v3620 = vpop.f32.mrb[0].mxu0
  %v3621 = vadd.f32 %v2226, %v3620
  %v3622 = vpop.f32.mrb[0].mxu0
  %3623 = vdwg.mxu0
  %v3624 = vadd.f32 %v3548, %v3621
  %v3625 = vxor.u32 %v3624, 2147483648
  %v3626 = vmul.f32 %v3625, 1.442695
  %v3627 = vpow.pop %v3626
  %v3628 = vadd.f32 %v3627, 1.0
  %v3629 = vrcp.pop %v3628
  %v3630 = vmul.f32 1.0, %v3629
  %3632 = vrot.lane.b32.xlu0 %v3621, 64
  %v3633 = vpop.permute.xlu0 %3632
  %v3635 = vmul.f32 %v3630, %v3633
  %3637 = vrot.lane.b32.xlu0 %v3635, 64
  %v3638 = vpop.permute.xlu0 %3637
  %v3640 = vadd.f32 %v3548, %v3638
  %v3641 = vtanh.pop %v3640
  %v3642 = vsub.f32 1.0, %v3630
  %3644 = vrot.lane.b32.xlu0 %v3641, 96
  %v3645 = vpop.permute.xlu0 %3644
  %v3647 = vmul.f32 %v3642, %v3645
  %v3648 = vmul.f32 %v3630, %v3547
  %v3649 = vadd.f32 %v3647, %v3648
  %v3650 = vld [vmem:[%s1768] sm:$0xff]
  %3652 = vrot.lane.b32.xlu0 %v3649, 96
  %v3653 = vpop.permute.xlu0 %3652
  %v3654 = vsel %vm285, %v3653, 0
  %3656 = vmatprep.subr.mxu0 0.0
  %3657 = vmatpush1.msra.mxu0 %v2216
  %3658 = vmatprep.subr.mxu0 0.0
  %3659 = vmatpush1.msra.mxu0 %v2217
  %3660 = vmatprep.subr.mxu0 0.0
  %3661 = vmatpush1.msra.mxu0 %v2218
  %3662 = vmatprep.subr.mxu0 0.0
  %3663 = vmatpush1.msra.mxu0 %v2219
  %3664 = vmatprep.subr.mxu0 0.0
  %3665 = vmatpush1.msra.mxu0 0.0
  %3666 = vmatprep.subr.mxu0 0.0
  %3667 = vmatpush1.msra.mxu0 0.0
  %3668 = vmatprep.subr.mxu0 0.0
  %3669 = vmatpush1.msra.mxu0 0.0
  %3670 = vmatprep.subr.mxu0 0.0
  %3671 = vmatpush1.msra.mxu0 0.0
  %3672 = vmatprep.subr.mxu0 0.0
  %3673 = vmatpush1.msra.mxu0 0.0
  %3674 = vmatprep.subr.mxu0 0.0
  %3675 = vmatpush1.msra.mxu0 0.0
  %3676 = vmatprep.subr.mxu0 0.0
  %3677 = vmatpush1.msra.mxu0 0.0
  %3678 = vmatprep.subr.mxu0 0.0
  %3679 = vmatpush1.msra.mxu0 0.0
  %3680 = vmatprep.subr.mxu0 0.0
  %3681 = vmatpush1.msra.mxu0 0.0
  %3682 = vmatprep.subr.mxu0 0.0
  %3683 = vmatpush1.msra.mxu0 0.0
  %3684 = vmatprep.subr.mxu0 0.0
  %3685 = vmatpush1.msra.mxu0 0.0
  %3686 = vmatprep.subr.mxu0 0.0
  %3687 = vmatpush1.msra.mxu0 0.0
  %3688 = vmatprep.subr.mxu0 0.0
  %3689 = vmatpush1.msra.mxu0 0.0
  %3690 = vmatprep.subr.mxu0 0.0
  %3691 = vmatpush1.msra.mxu0 0.0
  %3692 = vmatprep.subr.mxu0 0.0
  %3693 = vmatpush1.msra.mxu0 0.0
  %3694 = vmatprep.subr.mxu0 0.0
  %3695 = vmatpush1.msra.mxu0 0.0
  %3696 = vmatprep.subr.mxu0 0.0
  %3697 = vmatpush1.msra.mxu0 0.0
  %3698 = vmatprep.subr.mxu0 0.0
  %3699 = vmatpush1.msra.mxu0 0.0
  %3700 = vmatprep.subr.mxu0 0.0
  %3701 = vmatpush1.msra.mxu0 0.0
  %3702 = vmatprep.subr.mxu0 0.0
  %3703 = vmatpush1.msra.mxu0 0.0
  %3704 = vmatprep.subr.mxu0 0.0
  %3705 = vmatpush1.msra.mxu0 0.0
  %3706 = vmatprep.subr.mxu0 0.0
  %3707 = vmatpush1.msra.mxu0 0.0
  %3708 = vmatprep.subr.mxu0 0.0
  %3709 = vmatpush1.msra.mxu0 0.0
  %3710 = vmatprep.subr.mxu0 0.0
  %3711 = vmatpush1.msra.mxu0 0.0
  %3712 = vmatprep.subr.mxu0 0.0
  %3713 = vmatpush1.msra.mxu0 0.0
  %3714 = vmatprep.subr.mxu0 0.0
  %3715 = vmatpush1.msra.mxu0 0.0
  %3716 = vmatprep.subr.mxu0 0.0
  %3717 = vmatpush1.msra.mxu0 0.0
  %3718 = vmatprep.subr.mxu0 0.0
  %3719 = vmatpush1.msra.mxu0 0.0
  %3720 = vmatprep.mubr.f32.mxu0 0.0
  %3721 = vmatmul.mubr.f32.gmra.mrb[0].mxu0 %v3654
  %v3722 = vpop.f32.mrb[0].mxu0
  %v3723 = vadd.f32 %v2226, %v3722
  %v3724 = vpop.f32.mrb[0].mxu0
  %3725 = vdwg.mxu0
  %v3726 = vadd.f32 %v3650, %v3723
  %v3727 = vxor.u32 %v3726, 2147483648
  %v3728 = vmul.f32 %v3727, 1.442695
  %v3729 = vpow.pop %v3728
  %v3730 = vadd.f32 %v3729, 1.0
  %v3731 = vrcp.pop %v3730
  %v3732 = vmul.f32 1.0, %v3731
  %3734 = vrot.lane.b32.xlu0 %v3723, 64
  %v3735 = vpop.permute.xlu0 %3734
  %v3737 = vmul.f32 %v3732, %v3735
  %3739 = vrot.lane.b32.xlu0 %v3737, 64
  %v3740 = vpop.permute.xlu0 %3739
  %v3742 = vadd.f32 %v3650, %v3740
  %v3743 = vtanh.pop %v3742
  %v3744 = vsub.f32 1.0, %v3732
  %3746 = vrot.lane.b32.xlu0 %v3743, 96
  %v3747 = vpop.permute.xlu0 %3746
  %v3749 = vmul.f32 %v3744, %v3747
  %v3750 = vmul.f32 %v3732, %v3649
  %v3751 = vadd.f32 %v3749, %v3750
  %v3752 = vld [vmem:[%s1874] sm:$0xff]
  %3754 = vrot.lane.b32.xlu0 %v3751, 96
  %v3755 = vpop.permute.xlu0 %3754
  %v3756 = vsel %vm285, %v3755, 0
  %3758 = vmatprep.subr.mxu0 0.0
  %3759 = vmatpush1.msra.mxu0 %v2216
  %3760 = vmatprep.subr.mxu0 0.0
  %3761 = vmatpush1.msra.mxu0 %v2217
  %3762 = vmatprep.subr.mxu0 0.0
  %3763 = vmatpush1.msra.mxu0 %v2218
  %3764 = vmatprep.subr.mxu0 0.0
  %3765 = vmatpush1.msra.mxu0 %v2219
  %3766 = vmatprep.subr.mxu0 0.0
  %3767 = vmatpush1.msra.mxu0 0.0
  %3768 = vmatprep.subr.mxu0 0.0
  %3769 = vmatpush1.msra.mxu0 0.0
  %3770 = vmatprep.subr.mxu0 0.0
  %3771 = vmatpush1.msra.mxu0 0.0
  %3772 = vmatprep.subr.mxu0 0.0
  %3773 = vmatpush1.msra.mxu0 0.0
  %3774 = vmatprep.subr.mxu0 0.0
  %3775 = vmatpush1.msra.mxu0 0.0
  %3776 = vmatprep.subr.mxu0 0.0
  %3777 = vmatpush1.msra.mxu0 0.0
  %3778 = vmatprep.subr.mxu0 0.0
  %3779 = vmatpush1.msra.mxu0 0.0
  %3780 = vmatprep.subr.mxu0 0.0
  %3781 = vmatpush1.msra.mxu0 0.0
  %3782 = vmatprep.subr.mxu0 0.0
  %3783 = vmatpush1.msra.mxu0 0.0
  %3784 = vmatprep.subr.mxu0 0.0
  %3785 = vmatpush1.msra.mxu0 0.0
  %3786 = vmatprep.subr.mxu0 0.0
  %3787 = vmatpush1.msra.mxu0 0.0
  %3788 = vmatprep.subr.mxu0 0.0
  %3789 = vmatpush1.msra.mxu0 0.0
  %3790 = vmatprep.subr.mxu0 0.0
  %3791 = vmatpush1.msra.mxu0 0.0
  %3792 = vmatprep.subr.mxu0 0.0
  %3793 = vmatpush1.msra.mxu0 0.0
  %3794 = vmatprep.subr.mxu0 0.0
  %3795 = vmatpush1.msra.mxu0 0.0
  %3796 = vmatprep.subr.mxu0 0.0
  %3797 = vmatpush1.msra.mxu0 0.0
  %3798 = vmatprep.subr.mxu0 0.0
  %3799 = vmatpush1.msra.mxu0 0.0
  %3800 = vmatprep.subr.mxu0 0.0
  %3801 = vmatpush1.msra.mxu0 0.0
  %3802 = vmatprep.subr.mxu0 0.0
  %3803 = vmatpush1.msra.mxu0 0.0
  %3804 = vmatprep.subr.mxu0 0.0
  %3805 = vmatpush1.msra.mxu0 0.0
  %3806 = vmatprep.subr.mxu0 0.0
  %3807 = vmatpush1.msra.mxu0 0.0
  %3808 = vmatprep.subr.mxu0 0.0
  %3809 = vmatpush1.msra.mxu0 0.0
  %3810 = vmatprep.subr.mxu0 0.0
  %3811 = vmatpush1.msra.mxu0 0.0
  %3812 = vmatprep.subr.mxu0 0.0
  %3813 = vmatpush1.msra.mxu0 0.0
  %3814 = vmatprep.subr.mxu0 0.0
  %3815 = vmatpush1.msra.mxu0 0.0
  %3816 = vmatprep.subr.mxu0 0.0
  %3817 = vmatpush1.msra.mxu0 0.0
  %3818 = vmatprep.subr.mxu0 0.0
  %3819 = vmatpush1.msra.mxu0 0.0
  %3820 = vmatprep.subr.mxu0 0.0
  %3821 = vmatpush1.msra.mxu0 0.0
  %3822 = vmatprep.mubr.f32.mxu0 0.0
  %3823 = vmatmul.mubr.f32.gmra.mrb[0].mxu0 %v3756
  %v3824 = vpop.f32.mrb[0].mxu0
  %v3825 = vadd.f32 %v2226, %v3824
  %v3826 = vpop.f32.mrb[0].mxu0
  %3827 = vdwg.mxu0
  %v3828 = vadd.f32 %v3752, %v3825
  %v3829 = vxor.u32 %v3828, 2147483648
  %v3830 = vmul.f32 %v3829, 1.442695
  %v3831 = vpow.pop %v3830
  %v3832 = vadd.f32 %v3831, 1.0
  %v3833 = vrcp.pop %v3832
  %v3834 = vmul.f32 1.0, %v3833
  %3836 = vrot.lane.b32.xlu0 %v3825, 64
  %v3837 = vpop.permute.xlu0 %3836
  %v3839 = vmul.f32 %v3834, %v3837
  %3841 = vrot.lane.b32.xlu0 %v3839, 64
  %v3842 = vpop.permute.xlu0 %3841
  %v3844 = vadd.f32 %v3752, %v3842
  %v3845 = vtanh.pop %v3844
  %v3846 = vsub.f32 1.0, %v3834
  %3848 = vrot.lane.b32.xlu0 %v3845, 96
  %v3849 = vpop.permute.xlu0 %3848
  %v3851 = vmul.f32 %v3846, %v3849
  %v3852 = vmul.f32 %v3834, %v3751
  %v3853 = vadd.f32 %v3851, %v3852
  %v3854 = vld [vmem:[%s9] sm:$0xff]
  %v3855 = vld [vmem:[%s9 + $0x8] sm:$0xff]
  %v3856 = vld [vmem:[%s9 + $0x10] sm:$0xff]
  %v3857 = vld [vmem:[%s9 + $0x18] sm:$0xff]
  %v3858 = vld [vmem:[%s10] sm:$0x1]
  %v3860 = vlaneseq
  %v3861 = vshrl.u32 %v3860, 7
  %v3862 = vsub.s32 0, %v3861
  %v3863 = vrot.slane %v3858, %v3862
  %3866 = vrot.lane.b32.xlu0 %v3853, 96
  %v3867 = vpop.permute.xlu0 %3866
  %v3868 = vsel %vm285, %v3867, 0
  %3870 = vmatprep.subr.mxu0 0.0
  %3871 = vmatpush1.msra.mxu0 %v3854
  %3872 = vmatprep.subr.mxu0 0.0
  %3873 = vmatpush1.msra.mxu0 %v3855
  %3874 = vmatprep.subr.mxu0 0.0
  %3875 = vmatpush1.msra.mxu0 %v3856
  %3876 = vmatprep.subr.mxu0 0.0
  %3877 = vmatpush1.msra.mxu0 %v3857
  %3878 = vmatprep.subr.mxu0 0.0
  %3879 = vmatpush1.msra.mxu0 0.0
  %3880 = vmatprep.subr.mxu0 0.0
  %3881 = vmatpush1.msra.mxu0 0.0
  %3882 = vmatprep.subr.mxu0 0.0
  %3883 = vmatpush1.msra.mxu0 0.0
  %3884 = vmatprep.subr.mxu0 0.0
  %3885 = vmatpush1.msra.mxu0 0.0
  %3886 = vmatprep.subr.mxu0 0.0
  %3887 = vmatpush1.msra.mxu0 0.0
  %3888 = vmatprep.subr.mxu0 0.0
  %3889 = vmatpush1.msra.mxu0 0.0
  %3890 = vmatprep.subr.mxu0 0.0
  %3891 = vmatpush1.msra.mxu0 0.0
  %3892 = vmatprep.subr.mxu0 0.0
  %3893 = vmatpush1.msra.mxu0 0.0
  %3894 = vmatprep.subr.mxu0 0.0
  %3895 = vmatpush1.msra.mxu0 0.0
  %3896 = vmatprep.subr.mxu0 0.0
  %3897 = vmatpush1.msra.mxu0 0.0
  %3898 = vmatprep.subr.mxu0 0.0
  %3899 = vmatpush1.msra.mxu0 0.0
  %3900 = vmatprep.subr.mxu0 0.0
  %3901 = vmatpush1.msra.mxu0 0.0
  %3902 = vmatprep.subr.mxu0 0.0
  %3903 = vmatpush1.msra.mxu0 0.0
  %3904 = vmatprep.subr.mxu0 0.0
  %3905 = vmatpush1.msra.mxu0 0.0
  %3906 = vmatprep.subr.mxu0 0.0
  %3907 = vmatpush1.msra.mxu0 0.0
  %3908 = vmatprep.subr.mxu0 0.0
  %3909 = vmatpush1.msra.mxu0 0.0
  %3910 = vmatprep.subr.mxu0 0.0
  %3911 = vmatpush1.msra.mxu0 0.0
  %3912 = vmatprep.subr.mxu0 0.0
  %3913 = vmatpush1.msra.mxu0 0.0
  %3914 = vmatprep.subr.mxu0 0.0
  %3915 = vmatpush1.msra.mxu0 0.0
  %3916 = vmatprep.subr.mxu0 0.0
  %3917 = vmatpush1.msra.mxu0 0.0
  %3918 = vmatprep.subr.mxu0 0.0
  %3919 = vmatpush1.msra.mxu0 0.0
  %3920 = vmatprep.subr.mxu0 0.0
  %3921 = vmatpush1.msra.mxu0 0.0
  %3922 = vmatprep.subr.mxu0 0.0
  %3923 = vmatpush1.msra.mxu0 0.0
  %3924 = vmatprep.subr.mxu0 0.0
  %3925 = vmatpush1.msra.mxu0 0.0
  %3926 = vmatprep.subr.mxu0 0.0
  %3927 = vmatpush1.msra.mxu0 0.0
  %3928 = vmatprep.subr.mxu0 0.0
  %3929 = vmatpush1.msra.mxu0 0.0
  %3930 = vmatprep.subr.mxu0 0.0
  %3931 = vmatpush1.msra.mxu0 0.0
  %3932 = vmatprep.subr.mxu0 0.0
  %3933 = vmatpush1.msra.mxu0 0.0
  %3934 = vmatprep.mubr.f32.mxu0 0.0
  %3935 = vmatmul.mubr.f32.gmra.mrb[0].mxu0 %v3868
  %v3936 = vpop.f32.mrb[0].mxu0
  %v3937 = vadd.f32 %v3863, %v3936
  %v3938 = vpop.f32.mrb[0].mxu0
  %3939 = vdwg.mxu0
  %vm3940 = vcmask 31744
  %3941 = vst.msk [vmem:[%s11] sm:$0xff] %vm3940, %v3937
  // Predicated region
  $region46: #{gru_forward.1} parent=0 // pred_check
    _
  $region47: #{gru_forward.1} parent=0 // pred_check_branch
    %3943 = sbr.rel (0) target = $region49
  $region48: #{gru_forward.1} parent=0 // pred_region
    _
  $region49: #{gru_forward.1} parent=0 // pred_fallthru
    _
  // Predicated region
  $region50: #{gru_forward.1} parent=0 // pred_check
    _
  $region51: #{gru_forward.1} parent=0 // pred_check_branch
    %3945 = sbr.rel (0) target = $region53
  $region52: #{gru_forward.1} parent=0 // pred_region
    _
  $region53: #{gru_forward.1} parent=0 // pred_fallthru
    _

</llo_original>
